<compile_context>
chip_gen: v6e
topology: v6e:2x2x1
jax: 0.10.0
libtpu: 0.0.40
codegen_flags: <defaults>
</compile_context>

<pallas_src>
import functools

import jax
import jax.numpy as jnp
from jax.experimental import pallas as pl
from jax.experimental.pallas import tpu as pltpu


# Spikes are exactly {0, 1} -> bf16 storage is lossless and halves HBM traffic.
SPIKE_DTYPE = jnp.bfloat16
# bf16 MXU path (all three MXU generations are bf16-native; accumulation stays
# f32).  NOTE: bf16-rounded weights can flip spikes whose potential lies within
# ~0.5% of the threshold; set to jnp.float32 for a bit-exact f32 reference.
MATMUL_DTYPE = jnp.bfloat16

CONV1_T = 10.0
CONV2_T = 1.0


def _round_up(x, m):
    return (x + m - 1) // m * m


# ---------------------------------------------------------------------------
# Pallas kernel 1: MXU matmul (im2col conv) with fused "fire" threshold.
# ---------------------------------------------------------------------------
def _matmul_fire_kernel(p_ref, w_ref, o_ref, *, threshold):
    # Full-K tile: a single dot per block; fire fused into the (lane-dense,
    # C-last) store.  No accumulator scratch, no init/finalize pl.when.
    acc = jnp.dot(p_ref[...], w_ref[...], preferred_element_type=jnp.float32)
    o_ref[...] = jnp.where(acc > threshold, 1.0, 0.0).astype(o_ref.dtype)


def _matmul_fire_acc_kernel(p_ref, w_ref, o_ref, acc_ref, *, threshold):
    # Fallback when K does not fit one VMEM tile: K is the last ("arbitrary")
    # grid axis; accumulate in f32 scratch, fire in the epilogue.
    @pl.when(pl.program_id(2) == 0)
    def _():
        acc_ref[...] = jnp.zeros_like(acc_ref)

    acc_ref[...] += jnp.dot(p_ref[...], w_ref[...],
                            preferred_element_type=jnp.float32)

    @pl.when(pl.program_id(2) == pl.num_programs(2) - 1)
    def _():
        o_ref[...] = jnp.where(acc_ref[...] > threshold,
                               1.0, 0.0).astype(o_ref.dtype)


def conv_fire(x, w, threshold, *, tm=256, tn=256, tk_max=2048):
    """Valid 2D conv (stride 1, no padding) + spike threshold, channels-last.

    x: (B, H, W, Cin)  activations (already spatially padded by the caller)
    w: (Cout, Cin, k, k)
    returns spikes (B, Ho, Wo, Cout) in {0, 1}, SPIKE_DTYPE, channels-last.
    """
    B, H, W, Cin = x.shape
    Cout, _, k, _ = w.shape
    Ho, Wo = H - k + 1, W - k + 1

    # im2col in (ky, kx, cin) order.  Channels stay last, so no big transposes;
    # after the conv2 zero-halo skip this patch matrix is < 1 MB.
    x = x.astype(MATMUL_DTYPE)
    cols = [x[:, ky:ky + Ho, kx:kx + Wo, :]
            for ky in range(k) for kx in range(k)]
    patches = jnp.concatenate(cols, axis=-1).reshape(B * Ho * Wo, k * k * Cin)
    wmat = jnp.transpose(w, (2, 3, 1, 0)).reshape(k * k * Cin, Cout)
    wmat = wmat.astype(MATMUL_DTYPE)

    M, K = patches.shape
    N = Cout
    tn = min(tn, _round_up(N, 128))
    Mp = _round_up(M, tm)
    Np = _round_up(N, tn)
    Kp = _round_up(K, 128)
    split_k = Kp > tk_max
    if split_k:
        tk = tk_max                       # multiple of 128
        Kp = _round_up(K, tk)

    # K/N zero padding contributes 0 to the accumulator; padded M rows give
    # potential 0 < threshold -> spike 0, and are sliced off below.
    patches = jnp.pad(patches, ((0, Mp - M), (0, Kp - K)))
    wmat = jnp.pad(wmat, ((0, Kp - K), (0, Np - N)))
    threshold = float(threshold)

    if not split_k:
        out = pl.pallas_call(
            functools.partial(_matmul_fire_kernel, threshold=threshold),
            out_shape=jax.ShapeDtypeStruct((Mp, Np), SPIKE_DTYPE),
            grid_spec=pltpu.PrefetchScalarGridSpec(
                num_scalar_prefetch=0,
                grid=(Mp // tm, Np // tn),
                in_specs=[pl.BlockSpec((tm, Kp), lambda i, j: (i, 0)),
                          pl.BlockSpec((Kp, tn), lambda i, j: (0, j))],
                out_specs=pl.BlockSpec((tm, tn), lambda i, j: (i, j)),
            ),
            compiler_params=pltpu.CompilerParams(
                dimension_semantics=("parallel", "parallel")),
        )(patches, wmat)
    else:
        out = pl.pallas_call(
            functools.partial(_matmul_fire_acc_kernel, threshold=threshold),
            out_shape=jax.ShapeDtypeStruct((Mp, Np), SPIKE_DTYPE),
            grid_spec=pltpu.PrefetchScalarGridSpec(
                num_scalar_prefetch=0,
                grid=(Mp // tm, Np // tn, Kp // tk),
                in_specs=[pl.BlockSpec((tm, tk), lambda i, j, kk: (i, kk)),
                          pl.BlockSpec((tk, tn), lambda i, j, kk: (kk, j))],
                out_specs=pl.BlockSpec((tm, tn), lambda i, j, kk: (i, j)),
                scratch_shapes=[pltpu.VMEM((tm, tn), jnp.float32)],
            ),
            compiler_params=pltpu.CompilerParams(
                dimension_semantics=("parallel", "parallel", "arbitrary")),
        )(patches, wmat)

    return out[:M, :N].reshape(B, Ho, Wo, Cout)


# ---------------------------------------------------------------------------
# Pallas kernel 2: max-pool (stride == kernel) as a single max-reduction over a
# gathered window axis, channels-last (lane-dense stores).
# ---------------------------------------------------------------------------
def _maxpool_kernel(x_ref, o_ref):
    # x_ref: (1, k*k, Ho, Wo, ct) ; o_ref: (1, Ho, Wo, ct) — C on lanes.
    o_ref[...] = jnp.max(x_ref[...], axis=1)


def max_pool(x, kernel, stride, padding):
    """F.max_pool2d for channels-last spikes with stride == kernel.
    Zero padding == -inf padding because inputs are non-negative spikes."""
    assert stride == kernel, "module only uses stride == kernel pooling"
    B, H, W, C = x.shape
    Ho = (H + 2 * padding - kernel) // stride + 1
    Wo = (W + 2 * padding - kernel) // stride + 1

    xp = jnp.pad(x, ((0, 0), (padding, padding), (padding, padding), (0, 0)))
    xp = xp[:, :Ho * kernel, :Wo * kernel, :]
    # Gather the k*k window positions onto one leading axis.  C stays last, so
    # this is a cheap small-array shuffle and both kernel blocks end in C
    # (multiple of 128) -> unmasked, lane-dense loads/stores.
    xr = xp.reshape(B, Ho, kernel, Wo, kernel, C)
    xr = xr.transpose(0, 2, 4, 1, 3, 5).reshape(B, kernel * kernel, Ho, Wo, C)

    ct = 256 if C % 256 == 0 else C

    out = pl.pallas_call(
        _maxpool_kernel,
        out_shape=jax.ShapeDtypeStruct((B, Ho, Wo, C), x.dtype),
        grid_spec=pltpu.PrefetchScalarGridSpec(
            num_scalar_prefetch=0,
            grid=(B, C // ct),
            in_specs=[pl.BlockSpec((1, kernel * kernel, Ho, Wo, ct),
                                   lambda b, c: (b, 0, 0, 0, c))],
            out_specs=pl.BlockSpec((1, Ho, Wo, ct), lambda b, c: (b, 0, 0, c)),
        ),
        compiler_params=pltpu.CompilerParams(
            dimension_semantics=("parallel", "parallel")),
    )(xr)
    return out


def pool_sparse(core, off_h, off_w, full_h, full_w, kernel, padding):
    """max_pool2d(virtual, kernel, kernel, padding) where `virtual` is a
    (B, full_h, full_w, C) spike map that is zero everywhere except `core`
    placed at (off_h, off_w).  Only the pooling windows that overlap the core
    are computed; the all-zero remainder is implied (caller pads with zeros).

    Returns (pooled_core, (i0, i1), (j0, j1), (Ho, Wo)): pooled_core covers
    rows i0..i1 / cols j0..j1 of the virtual (Ho, Wo) pooled output.
    """
    B, hc, wc, C = core.shape
    Ho = (full_h + 2 * padding - kernel) // kernel + 1
    Wo = (full_w + 2 * padding - kernel) // kernel + 1

    def span(off, size, out_n):
        a = off + padding                 # core start in padded coordinates
        b = a + size                      # core end (exclusive)
        assert b <= out_n * kernel, "core extends past the last pooling window"
        i0 = max(a // kernel, 0)
        i1 = min((b - 1) // kernel, out_n - 1)
        lead = a - i0 * kernel
        trail = (i1 + 1) * kernel - b
        return i0, i1, lead, trail

    i0, i1, top, bot = span(off_h, hc, Ho)
    j0, j1, left, right = span(off_w, wc, Wo)
    # Slab = the window-aligned band around the core; zeros elsewhere are exact
    # because the virtual map (and the pool padding) is zero there.
    slab = jnp.pad(core, ((0, 0), (top, bot), (left, right), (0, 0)))
    pooled = max_pool(slab, kernel, kernel, 0)
    return pooled, (i0, i1), (j0, j1), (Ho, Wo)


# ---------------------------------------------------------------------------
# SepConv2d forward (eval path)
# ---------------------------------------------------------------------------
def init_params(key, in_channels, out_channels):
    k1, k2 = jax.random.split(key)
    # snn.Convolution initializes weights ~ N(mean=0.8, std=0.05), no bias
    w1 = 0.8 + 0.05 * jax.random.normal(
        k1, (out_channels, in_channels, 5, 5), jnp.float32)
    w2 = 0.8 + 0.05 * jax.random.normal(
        k2, (out_channels, out_channels, 2, 2), jnp.float32)
    return w1, w2


def sep_conv2d_forward(x, w1, w2):
    # PyTorch hands us NCHW; go channels-last immediately and stay there.
    x = jnp.transpose(x.astype(jnp.float32), (0, 2, 3, 1))        # (B, H, W, Cin)
    x = jnp.pad(x, ((0, 0), (2, 2), (2, 2), (0, 0)))              # sf.pad(...,(2,2,2,2))

    # conv1 (k=5) + fire(t=10): M = B*H*W, N = Cout, K = 25*Cin (one K tile);
    # tm=256 gives >=2 parallel M tiles (v7x megacore) with full 256-wide N
    # tiles for the v6e/v7x MXU.
    spk = conv_fire(x, w1, CONV1_T, tm=256, tn=256)               # (B, Ho, Wo, C)

    c = spk.shape[-1]
    if c == 512:
        xpad, y, z = 2, 50, 1
    elif c == 256:
        xpad, y, z = 47, 2, 1
    else:
        raise ValueError("SepConv2d semantics only define out_channels 256 or 512")

    # first pooling (dense, lane-dense C-last)
    pooled = max_pool(spk, y, y, z)                               # (B, Hp, Wp, C)
    Hp, Wp = pooled.shape[1], pooled.shape[2]

    # conv2 over the xpad halo: fire(0, t=1) == 0 (threshold > 0), so conv2
    # spikes are zero wherever the 2x2 window only sees padding.  Compute only
    # the interior that overlaps real data and track its offset in the
    # "virtual" full map.
    p1 = min(xpad, 1)
    core_in = jnp.pad(pooled, ((0, 0), (p1, p1), (p1, p1), (0, 0)))
    core = conv_fire(core_in, w2, CONV2_T, tm=128, tn=256)        # (B, hc, wc, C)
    off = xpad - p1                                               # core offset in virtual map
    Hv = Hp + 2 * xpad - 1                                        # virtual conv2 output size
    Wv = Wp + 2 * xpad - 1

    # spk_out = pooling(spk2, 2, 2, 1); shape-dependent re-pool (static shapes)
    h_chk = (Hv + 2 - 2) // 2 + 1
    if h_chk == 56:
        pk, extra = 4, 2
    elif h_chk == 52:
        pk, extra = 7, 1
    else:
        pk, extra = 2, 0

    pooled_core, (i0, i1), (j0, j1), (hpo, wpo) = pool_sparse(
        core, off, off, Hv, Wv, pk, 1)

    # Assemble the final (mostly-zero) output directly in NCHW / f32: a single
    # pad folds in both the all-zero pooled region and the trailing sf.pad.
    out_core = jnp.transpose(pooled_core, (0, 3, 1, 2)).astype(jnp.float32)
    out = jnp.pad(out_core,
                  ((0, 0), (0, 0),
                   (i0 + extra, hpo - 1 - i1 + extra),
                   (j0 + extra, wpo - 1 - j1 + extra)))
    return out


if __name__ == "__main__":
    key = jax.random.PRNGKey(0)
    k_param, k_input = jax.random.split(key)

    batch, in_channels, out_channels, spatial = 2, 4, 256, 16
    w1, w2 = init_params(k_param, in_channels, out_channels)
    x = jax.random.uniform(k_input, (batch, in_channels, spatial, spatial),
                           dtype=jnp.float32)

    fwd = jax.jit(sep_conv2d_forward)
    out = jax.block_until_ready(fwd(x, w1, w2))

    assert out.shape == (batch, out_channels, 16, 16), out.shape
    assert out.dtype == jnp.float32, out.dtype
    print("KERNEL_OK")
</pallas_src>

<mosaic_0001>
module attributes {stable_mosaic.version = 11 : i64} {
  func.func @_matmul_fire_kernel(%arg0: i32, %arg1: i32, %arg2: memref<256x128xbf16, #tpu.memory_space<vmem>>, %arg3: memref<128x256xbf16, #tpu.memory_space<vmem>>, %arg4: memref<256x256xbf16, #tpu.memory_space<vmem>>) attributes {dimension_semantics = [#tpu.dimension_semantics<parallel>, #tpu.dimension_semantics<parallel>], iteration_bounds = array<i64: 2, 1>, scalar_prefetch = 0 : i64, scratch_operands = 0 : i64, tpu.core_type = #tpu.core_type<tc>, window_params = [{transform_indices = @transform_0, window_bounds = array<i64: 256, 128>}, {transform_indices = @transform_1, window_bounds = array<i64: 128, 256>}, {transform_indices = @transform_2, window_bounds = array<i64: 256, 256>}]} {
    %c0 = arith.constant 0 : index
    %c0_0 = arith.constant 0 : index
    %0 = vector.load %arg2[%c0, %c0_0] : memref<256x128xbf16, #tpu.memory_space<vmem>>, vector<256x128xbf16>
    %c0_1 = arith.constant 0 : index
    %c0_2 = arith.constant 0 : index
    %1 = vector.load %arg3[%c0_1, %c0_2] : memref<128x256xbf16, #tpu.memory_space<vmem>>, vector<128x256xbf16>
    %cst = arith.constant dense<0.000000e+00> : vector<256x256xf32>
    %2 = tpu.matmul %0, %1, %cst {dimension_numbers = #tpu.dot_dimension_numbers<[1], [0], [0], [1], [0, 0, 1, 1], [], []>} : vector<256x128xbf16>, vector<128x256xbf16>, vector<256x256xf32> -> vector<256x256xf32>
    %cst_3 = arith.constant 1.000000e+01 : f32
    %3 = vector.broadcast %cst_3 : f32 to vector<256x256xf32>
    %4 = arith.cmpf ogt, %2, %3 : vector<256x256xf32>
    %cst_4 = arith.constant 1.000000e+00 : f32
    %cst_5 = arith.constant 0.000000e+00 : f32
    %5 = vector.broadcast %cst_4 : f32 to vector<256x256xf32>
    %6 = vector.broadcast %cst_5 : f32 to vector<256x256xf32>
    %7 = arith.select %4, %5, %6 : vector<256x256xi1>, vector<256x256xf32>
    %8 = arith.truncf %7 : vector<256x256xf32> to vector<256x256xbf16>
    %c0_6 = arith.constant 0 : index
    %c0_7 = arith.constant 0 : index
    %9 = vector.load %arg4[%c0_6, %c0_7] : memref<256x256xbf16, #tpu.memory_space<vmem>>, vector<256x256xbf16>
    tpu.vector_store %arg4[%c0_6, %c0_7], %8 {strides = array<i32>} : memref<256x256xbf16, #tpu.memory_space<vmem>>, vector<256x256xbf16>,
    return
  }
  func.func @transform_0(%arg0: i32, %arg1: i32) -> (i32, i32) {
    %c0_i32 = arith.constant 0 : i32
    %c0_i32_0 = arith.constant 0 : i32
    return %arg0, %c0_i32 : i32, i32
  }
  func.func @transform_1(%arg0: i32, %arg1: i32) -> (i32, i32) {
    %c0_i32 = arith.constant 0 : i32
    %c0_i32_0 = arith.constant 0 : i32
    return %c0_i32, %arg1 : i32, i32
  }
  func.func @transform_2(%arg0: i32, %arg1: i32) -> (i32, i32) {
    %c0_i32 = arith.constant 0 : i32
    return %arg0, %arg1 : i32, i32
  }
}

module attributes {stable_mosaic.version = 11 : i64} {
  func.func @_maxpool_kernel(%arg0: i32, %arg1: i32, %arg2: memref<1x4x9x9x256xbf16, #tpu.memory_space<vmem>>, %arg3: memref<1x9x9x256xbf16, #tpu.memory_space<vmem>>) attributes {dimension_semantics = [#tpu.dimension_semantics<parallel>, #tpu.dimension_semantics<parallel>], iteration_bounds = array<i64: 2, 1>, scalar_prefetch = 0 : i64, scratch_operands = 0 : i64, tpu.core_type = #tpu.core_type<tc>, window_params = [{transform_indices = @transform_0, window_bounds = array<i64: 1, 4, 9, 9, 256>}, {transform_indices = @transform_1, window_bounds = array<i64: 1, 9, 9, 256>}]} {
    %c0 = arith.constant 0 : index
    %c0_0 = arith.constant 0 : index
    %c0_1 = arith.constant 0 : index
    %c0_2 = arith.constant 0 : index
    %c0_3 = arith.constant 0 : index
    %0 = vector.load %arg2[%c0, %c0_0, %c0_1, %c0_2, %c0_3] : memref<1x4x9x9x256xbf16, #tpu.memory_space<vmem>>, vector<1x4x9x9x256xbf16>
    %cst = arith.constant dense<0xFF80> : vector<1x9x9x256xbf16>
    %1 = vector.multi_reduction <maximumf>, %0, %cst [1] : vector<1x4x9x9x256xbf16> to vector<1x9x9x256xbf16>
    %c0_4 = arith.constant 0 : index
    %c0_5 = arith.constant 0 : index
    %c0_6 = arith.constant 0 : index
    %c0_7 = arith.constant 0 : index
    %2 = vector.load %arg3[%c0_4, %c0_5, %c0_6, %c0_7] : memref<1x9x9x256xbf16, #tpu.memory_space<vmem>>, vector<1x9x9x256xbf16>
    tpu.vector_store %arg3[%c0_4, %c0_5, %c0_6, %c0_7], %1 {strides = array<i32>} : memref<1x9x9x256xbf16, #tpu.memory_space<vmem>>, vector<1x9x9x256xbf16>,
    return
  }
  func.func @transform_0(%arg0: i32, %arg1: i32) -> (i32, i32, i32, i32, i32) {
    %c0_i32 = arith.constant 0 : i32
    %c0_i32_0 = arith.constant 0 : i32
    %c0_i32_1 = arith.constant 0 : i32
    %c0_i32_2 = arith.constant 0 : i32
    return %arg0, %c0_i32, %c0_i32_0, %c0_i32_1, %arg1 : i32, i32, i32, i32, i32
  }
  func.func @transform_1(%arg0: i32, %arg1: i32) -> (i32, i32, i32, i32) {
    %c0_i32 = arith.constant 0 : i32
    %c0_i32_0 = arith.constant 0 : i32
    %c0_i32_1 = arith.constant 0 : i32
    return %arg0, %c0_i32, %c0_i32_0, %arg1 : i32, i32, i32, i32
  }
}

module attributes {stable_mosaic.version = 11 : i64} {
  func.func @_matmul_fire_kernel(%arg0: i32, %arg1: i32, %arg2: memref<128x1024xbf16, #tpu.memory_space<vmem>>, %arg3: memref<1024x256xbf16, #tpu.memory_space<vmem>>, %arg4: memref<128x256xbf16, #tpu.memory_space<vmem>>) attributes {dimension_semantics = [#tpu.dimension_semantics<parallel>, #tpu.dimension_semantics<parallel>], iteration_bounds = array<i64: 2, 1>, scalar_prefetch = 0 : i64, scratch_operands = 0 : i64, tpu.core_type = #tpu.core_type<tc>, window_params = [{transform_indices = @transform_0, window_bounds = array<i64: 128, 1024>}, {transform_indices = @transform_1, window_bounds = array<i64: 1024, 256>}, {transform_indices = @transform_2, window_bounds = array<i64: 128, 256>}]} {
    %c0 = arith.constant 0 : index
    %c0_0 = arith.constant 0 : index
    %0 = vector.load %arg2[%c0, %c0_0] : memref<128x1024xbf16, #tpu.memory_space<vmem>>, vector<128x1024xbf16>
    %c0_1 = arith.constant 0 : index
    %c0_2 = arith.constant 0 : index
    %1 = vector.load %arg3[%c0_1, %c0_2] : memref<1024x256xbf16, #tpu.memory_space<vmem>>, vector<1024x256xbf16>
    %cst = arith.constant dense<0.000000e+00> : vector<128x256xf32>
    %2 = tpu.matmul %0, %1, %cst {dimension_numbers = #tpu.dot_dimension_numbers<[1], [0], [0], [1], [0, 0, 1, 1], [], []>} : vector<128x1024xbf16>, vector<1024x256xbf16>, vector<128x256xf32> -> vector<128x256xf32>
    %cst_3 = arith.constant 1.000000e+00 : f32
    %3 = vector.broadcast %cst_3 : f32 to vector<128x256xf32>
    %4 = arith.cmpf ogt, %2, %3 : vector<128x256xf32>
    %cst_4 = arith.constant 1.000000e+00 : f32
    %cst_5 = arith.constant 0.000000e+00 : f32
    %5 = vector.broadcast %cst_4 : f32 to vector<128x256xf32>
    %6 = vector.broadcast %cst_5 : f32 to vector<128x256xf32>
    %7 = arith.select %4, %5, %6 : vector<128x256xi1>, vector<128x256xf32>
    %8 = arith.truncf %7 : vector<128x256xf32> to vector<128x256xbf16>
    %c0_6 = arith.constant 0 : index
    %c0_7 = arith.constant 0 : index
    %9 = vector.load %arg4[%c0_6, %c0_7] : memref<128x256xbf16, #tpu.memory_space<vmem>>, vector<128x256xbf16>
    tpu.vector_store %arg4[%c0_6, %c0_7], %8 {strides = array<i32>} : memref<128x256xbf16, #tpu.memory_space<vmem>>, vector<128x256xbf16>,
    return
  }
  func.func @transform_0(%arg0: i32, %arg1: i32) -> (i32, i32) {
    %c0_i32 = arith.constant 0 : i32
    %c0_i32_0 = arith.constant 0 : i32
    return %arg0, %c0_i32 : i32, i32
  }
  func.func @transform_1(%arg0: i32, %arg1: i32) -> (i32, i32) {
    %c0_i32 = arith.constant 0 : i32
    %c0_i32_0 = arith.constant 0 : i32
    return %c0_i32, %arg1 : i32, i32
  }
  func.func @transform_2(%arg0: i32, %arg1: i32) -> (i32, i32) {
    %c0_i32 = arith.constant 0 : i32
    return %arg0, %arg1 : i32, i32
  }
}

module attributes {stable_mosaic.version = 11 : i64} {
  func.func @_maxpool_kernel(%arg0: i32, %arg1: i32, %arg2: memref<1x49x3x3x256xbf16, #tpu.memory_space<vmem>>, %arg3: memref<1x3x3x256xbf16, #tpu.memory_space<vmem>>) attributes {dimension_semantics = [#tpu.dimension_semantics<parallel>, #tpu.dimension_semantics<parallel>], iteration_bounds = array<i64: 2, 1>, scalar_prefetch = 0 : i64, scratch_operands = 0 : i64, tpu.core_type = #tpu.core_type<tc>, window_params = [{transform_indices = @transform_0, window_bounds = array<i64: 1, 49, 3, 3, 256>}, {transform_indices = @transform_1, window_bounds = array<i64: 1, 3, 3, 256>}]} {
    %c0 = arith.constant 0 : index
    %c0_0 = arith.constant 0 : index
    %c0_1 = arith.constant 0 : index
    %c0_2 = arith.constant 0 : index
    %c0_3 = arith.constant 0 : index
    %0 = vector.load %arg2[%c0, %c0_0, %c0_1, %c0_2, %c0_3] : memref<1x49x3x3x256xbf16, #tpu.memory_space<vmem>>, vector<1x49x3x3x256xbf16>
    %cst = arith.constant dense<0xFF80> : vector<1x3x3x256xbf16>
    %1 = vector.multi_reduction <maximumf>, %0, %cst [1] : vector<1x49x3x3x256xbf16> to vector<1x3x3x256xbf16>
    %c0_4 = arith.constant 0 : index
    %c0_5 = arith.constant 0 : index
    %c0_6 = arith.constant 0 : index
    %c0_7 = arith.constant 0 : index
    %2 = vector.load %arg3[%c0_4, %c0_5, %c0_6, %c0_7] : memref<1x3x3x256xbf16, #tpu.memory_space<vmem>>, vector<1x3x3x256xbf16>
    tpu.vector_store %arg3[%c0_4, %c0_5, %c0_6, %c0_7], %1 {strides = array<i32>} : memref<1x3x3x256xbf16, #tpu.memory_space<vmem>>, vector<1x3x3x256xbf16>,
    return
  }
  func.func @transform_0(%arg0: i32, %arg1: i32) -> (i32, i32, i32, i32, i32) {
    %c0_i32 = arith.constant 0 : i32
    %c0_i32_0 = arith.constant 0 : i32
    %c0_i32_1 = arith.constant 0 : i32
    %c0_i32_2 = arith.constant 0 : i32
    return %arg0, %c0_i32, %c0_i32_0, %c0_i32_1, %arg1 : i32, i32, i32, i32, i32
  }
  func.func @transform_1(%arg0: i32, %arg1: i32) -> (i32, i32, i32, i32) {
    %c0_i32 = arith.constant 0 : i32
    %c0_i32_0 = arith.constant 0 : i32
    %c0_i32_1 = arith.constant 0 : i32
    return %arg0, %c0_i32, %c0_i32_0, %arg1 : i32, i32, i32, i32
  }
}

</mosaic_0001>

<llo_original>
// kernel: sep_conv2d_forward.4
$region0: #{sep_conv2d_forward.4}
  #allocation0 [shape = 'u32[]', space=smem, size = 0x4, offset = 0x4, fixed_abs, tag = 'smem constant byte address 0x4 - core index']
  #allocation1 [shape = 'u32[144,128]{1,0:T(1,128)}', space=vmem, size = 0x12000, scoped, tag = 'internal scratch']
  %s0 = inlined_call_operand.vmem [shape: bf16[512,128], index: 0, kind: input, shape index: {}]
  %s1 = inlined_call_operand.vmem [shape: bf16[128,256], index: 1, kind: input, shape index: {}]
  %s2 = inlined_call_operand.vmem [shape: bf16[512,256], index: 2, kind: output, shape index: {}]
  %s3 = sld [smem:[#allocation0]]
  $region41: #{sep_conv2d_forward.4} parent=0
    _
  %s5 = ssub.s32 1, %s3
  %s6 = scalar_select 0, %s5, %s3
  loop: start=0, step=1, limit=4
  $region2: #{sep_conv2d_forward.4} parent=0 // loop_pre_header
    _
  $region3: #{sep_conv2d_forward.4} parent=0 // loop_header
    %s8 = sphi 0, %s12
    %p9 = scmp.ge.s32.totalorder %s8, 4
    %s15 = sphi 0, %s27
    %s16 = sphi 0, %s23
    %s17 = sphi 0, %s15
    %s18 = sphi 0, %s16
    %s19 = sphi 0, %s17
    %s20 = sphi 0, %s18
    %s30 = sphi 0, %s32
    %s33 = sphi 0, %s30
    %s34 = sphi 0, %s33
    %s50 = sphi 0, %s34
    %s56 = sphi 0, %s58
    %s59 = sphi 0, %s56
    %s60 = sphi 0, %s59
    %s76 = sphi 0, %s60
    %s84 = sphi 0, %s86
    %s87 = sphi 0, %s84
    %s88 = sphi 0, %s87
    %s104 = sphi 0, %s88
  $region4: #{sep_conv2d_forward.4} parent=0 // loop_header_branch
    %11 = sbr.rel (%p9) target = $region8
  $region5: #{sep_conv2d_forward.4} parent=0 // loop_body
    %s13 = ssub.s32 %s8, 1
    %s14 = ssub.s32 %s8, 2
    %s21 = sadd.s32 1, %s16
    %p22 = scmp.ge.s32.totalorder %s21, 1
    %s23 = scalar_select %p22, 0, %s21
    %s24 = sadd.s32 1, %s15
    %s25 = scalar_select %p22, %s24, %s15
    %p26 = scmp.ge.s32.totalorder %s25, 2
    %s27 = scalar_select %p26, 0, %s25
    %s28 = ssub.s32 %s15, %s27
    %p29 = scmp.eq.s32.totalorder %s28, 0
    %s31 = sadd.s32 %s30, 1
    %s32 = scalar_select %p29, %s30, %s31
    %p35 = pneg %p29
    %p36 = scmp.eq.s32.totalorder %s8, 1
    %p37 = por %p35, %p36
    %p38 = scmp.ne.s32.totalorder %s30, %s33
    %p39 = scmp.eq.s32.totalorder %s8, 0
    %p40 = por %p38, %p39
    %p41 = scmp.ne.s32.totalorder %s30, %s33
    %p42 = scmp.eq.s32.totalorder %s13, 1
    %p43 = por %p41, %p42
    %p44 = scmp.ne.s32.totalorder %s33, %s34
    %p45 = scmp.eq.s32.totalorder %s13, 0
    %p46 = por %p44, %p45
    %p47 = scmp.ne.s32.totalorder %s33, %s34
    %p48 = scmp.eq.s32.totalorder %s14, 1
    %p49 = por %p47, %p48
    %p51 = scmp.ne.s32.totalorder %s34, %s50
    %p52 = scmp.eq.s32.totalorder %s14, 0
    %p53 = por %p51, %p52
    %s54 = ssub.s32 %s16, %s23
    %p55 = scmp.eq.s32.totalorder %s54, 0
    %s57 = sadd.s32 %s56, 1
    %s58 = scalar_select %p55, %s56, %s57
    %p61 = pneg %p55
    %p62 = scmp.eq.s32.totalorder %s8, 1
    %p63 = por %p61, %p62
    %p64 = scmp.ne.s32.totalorder %s56, %s59
    %p65 = scmp.eq.s32.totalorder %s8, 0
    %p66 = por %p64, %p65
    %p67 = scmp.ne.s32.totalorder %s56, %s59
    %p68 = scmp.eq.s32.totalorder %s13, 1
    %p69 = por %p67, %p68
    %p70 = scmp.ne.s32.totalorder %s59, %s60
    %p71 = scmp.eq.s32.totalorder %s13, 0
    %p72 = por %p70, %p71
    %p73 = scmp.ne.s32.totalorder %s59, %s60
    %p74 = scmp.eq.s32.totalorder %s14, 1
    %p75 = por %p73, %p74
    %p77 = scmp.ne.s32.totalorder %s60, %s76
    %p78 = scmp.eq.s32.totalorder %s14, 0
    %p79 = por %p77, %p78
    %s80 = ssub.s32 %s15, %s27
    %s81 = ssub.s32 %s16, %s23
    %s82 = sor.u32 %s80, %s81
    %p83 = scmp.eq.s32.totalorder %s82, 0
    %s85 = sadd.s32 %s84, 1
    %s86 = scalar_select %p83, %s84, %s85
    %p89 = pneg %p83
    %p90 = scmp.eq.s32.totalorder %s8, 1
    %p91 = por %p89, %p90
    %p92 = scmp.ne.s32.totalorder %s84, %s87
    %p93 = scmp.eq.s32.totalorder %s8, 0
    %p94 = por %p92, %p93
    %p95 = scmp.ne.s32.totalorder %s84, %s87
    %p96 = scmp.eq.s32.totalorder %s13, 1
    %p97 = por %p95, %p96
    %p98 = scmp.ne.s32.totalorder %s87, %s88
    %p99 = scmp.eq.s32.totalorder %s13, 0
    %p100 = por %p98, %p99
    %p101 = scmp.ne.s32.totalorder %s87, %s88
    %p102 = scmp.eq.s32.totalorder %s14, 1
    %p103 = por %p101, %p102
    %p105 = scmp.ne.s32.totalorder %s88, %s104
    %p106 = scmp.eq.s32.totalorder %s14, 0
    %p107 = por %p105, %p106
    %p108 = scmp.le.s32.totalorder 1, %s8
    %p109 = scmp.lt.s32.totalorder %s8, 3
    %p110 = pnand %p108, %p109
    %p111 = pneg %p110
    // Predicated region
    $region9: #{sep_conv2d_forward.4} parent=5 // pred_check
      _
    $region10: #{sep_conv2d_forward.4} parent=5 // pred_check_branch
      %113 = sbr.rel (%p110) target = $region12
    $region11: #{sep_conv2d_forward.4} parent=5 // pred_region
      %s114 = ssub.s32 %s8, 1
      // Predicated region
      $region13: #{sep_conv2d_forward.4} parent=11 // pred_check
        %p115 = pneg %p72
      $region14: #{sep_conv2d_forward.4} parent=11 // pred_check_branch
        %117 = sbr.rel (%p115) target = $region16
      $region15: #{sep_conv2d_forward.4} parent=11 // pred_region
        %s118 = smul.u32 2, %s18
        %p119 = scmp.lt.s32.totalorder %s118, 1
        %s120 = scalar_select %p119, %s118, 1
        %s121 = smul.addr %s120, 4
        %s122 = scalar_lea.vmem %s1, %s121
        %s123 = smul.u32 2, %s18
      $region16: #{sep_conv2d_forward.4} parent=11 // pred_fallthru
        _
    $region12: #{sep_conv2d_forward.4} parent=5 // pred_fallthru
      _
    %p124 = scmp.lt.s32.totalorder %s8, 2
    // Predicated region
    $region17: #{sep_conv2d_forward.4} parent=5 // pred_check
      %p125 = pneg %p124
    $region18: #{sep_conv2d_forward.4} parent=5 // pred_check_branch
      %127 = sbr.rel (%p125) target = $region20
    $region19: #{sep_conv2d_forward.4} parent=5 // pred_region
      // Predicated region
      $region21: #{sep_conv2d_forward.4} parent=19 // pred_check
        %p128 = pneg %p40
      $region22: #{sep_conv2d_forward.4} parent=19 // pred_check_branch
        %130 = sbr.rel (%p128) target = $region24
      $region23: #{sep_conv2d_forward.4} parent=19 // pred_region
        %s131 = smul.u32 32, %s15
        %p132 = scmp.lt.s32.totalorder %s131, 63
        %s133 = scalar_select %p132, %s131, 63
        %s134 = smul.addr %s133, 4
        %s135 = scalar_lea.vmem %s0, %s134
        %s136 = smul.u32 32, %s15
      $region24: #{sep_conv2d_forward.4} parent=19 // pred_fallthru
        _
    $region20: #{sep_conv2d_forward.4} parent=5 // pred_fallthru
      _
    %p137 = scmp.le.s32.totalorder 1, %s8
    %p138 = scmp.lt.s32.totalorder %s8, 3
    %p139 = pnand %p137, %p138
    %p140 = pneg %p139
    // Predicated region
    $region25: #{sep_conv2d_forward.4} parent=5 // pred_check
      _
    $region26: #{sep_conv2d_forward.4} parent=5 // pred_check_branch
      %142 = sbr.rel (%p139) target = $region28
    $region27: #{sep_conv2d_forward.4} parent=5 // pred_region
      %s143 = ssub.s32 %s8, 1
      %s144 = smul.u32 32, %s17
      %p145 = scmp.lt.s32.totalorder %s144, 63
      %s146 = scalar_select %p145, %s144, 63
      %s147 = smul.addr %s146, 4
      %s148 = scalar_lea.vmem %s0, %s147
      %p149 = pneg %p46
      %p150 = pneg %p43
      %s151 = smul.u32 2, %s18
      %p152 = scmp.lt.s32.totalorder %s151, 1
      %s153 = scalar_select %p152, %s151, 1
      %s154 = smul.addr %s153, 4
      %s155 = scalar_lea.vmem %s1, %s154
      %p156 = pneg %p72
      %p157 = pneg %p69
      %p158 = pneg %p100
      %p159 = pneg %p97
      %s160 = smul.u32 32, %s17
      %s161 = smul.u32 2, %s18
      %p162 = scmp.lt.s32.totalorder %s160, 63
      %s163 = scalar_select %p162, %s160, 63
      %p164 = scmp.lt.s32.totalorder %s161, 1
      %s165 = scalar_select %p164, %s161, 1
      %s166 = smul.addr %s163, 2
      %s167 = sadd.s32 %s165, %s166
      %s168 = smul.addr %s167, 4
      %s169 = scalar_lea.vmem %s2, %s168
      %s170 = smul.u32 32, %s17
      %p171 = scmp.lt.s32.totalorder %s170, 63
      %s172 = scalar_select %p171, %s170, 63
      %s173 = smul.addr %s172, 4
      %s174 = scalar_lea.vmem %s0, %s173
      %s175 = smul.u32 32, %s17
      %s176 = smul.u32 2, %s18
      %p177 = scmp.lt.s32.totalorder %s176, 1
      %s178 = scalar_select %p177, %s176, 1
      %s179 = smul.addr %s178, 4
      %s180 = scalar_lea.vmem %s1, %s179
      %s181 = smul.u32 2, %s18
      %s182 = smul.u32 32, %s17
      %s183 = smul.u32 2, %s18
      %p184 = scmp.lt.s32.totalorder %s182, 63
      %s185 = scalar_select %p184, %s182, 63
      %p186 = scmp.lt.s32.totalorder %s183, 1
      %s187 = scalar_select %p186, %s183, 1
      %s188 = smul.addr %s185, 2
      %s189 = sadd.s32 %s187, %s188
      %s190 = smul.addr %s189, 4
      %s191 = scalar_lea.vmem %s2, %s190
      %s192 = smul.u32 32, %s17
      %s193 = smul.u32 2, %s18
      %v195 = vld [vmem:[%s174] sm:$0xf]
      %v196 = vld [vmem:[%s174 + $0x4] sm:$0xf]
      %v197 = vld [vmem:[%s174 + $0x8] sm:$0xf]
      %v198 = vld [vmem:[%s174 + $0xc] sm:$0xf]
      %v199 = vld [vmem:[%s174 + $0x10] sm:$0xf]
      %v200 = vld [vmem:[%s174 + $0x14] sm:$0xf]
      %v201 = vld [vmem:[%s174 + $0x18] sm:$0xf]
      %v202 = vld [vmem:[%s174 + $0x1c] sm:$0xf]
      %v203 = vld [vmem:[%s174 + $0x20] sm:$0xf]
      %v204 = vld [vmem:[%s174 + $0x24] sm:$0xf]
      %v205 = vld [vmem:[%s174 + $0x28] sm:$0xf]
      %v206 = vld [vmem:[%s174 + $0x2c] sm:$0xf]
      %v207 = vld [vmem:[%s174 + $0x30] sm:$0xf]
      %v208 = vld [vmem:[%s174 + $0x34] sm:$0xf]
      %v209 = vld [vmem:[%s174 + $0x38] sm:$0xf]
      %v210 = vld [vmem:[%s174 + $0x3c] sm:$0xf]
      %v211 = vld [vmem:[%s174 + $0x40] sm:$0xf]
      %v212 = vld [vmem:[%s174 + $0x44] sm:$0xf]
      %v213 = vld [vmem:[%s174 + $0x48] sm:$0xf]
      %v214 = vld [vmem:[%s174 + $0x4c] sm:$0xf]
      %v215 = vld [vmem:[%s174 + $0x50] sm:$0xf]
      %v216 = vld [vmem:[%s174 + $0x54] sm:$0xf]
      %v217 = vld [vmem:[%s174 + $0x58] sm:$0xf]
      %v218 = vld [vmem:[%s174 + $0x5c] sm:$0xf]
      %v219 = vld [vmem:[%s174 + $0x60] sm:$0xf]
      %v220 = vld [vmem:[%s174 + $0x64] sm:$0xf]
      %v221 = vld [vmem:[%s174 + $0x68] sm:$0xf]
      %v222 = vld [vmem:[%s174 + $0x6c] sm:$0xf]
      %v223 = vld [vmem:[%s174 + $0x70] sm:$0xf]
      %v224 = vld [vmem:[%s174 + $0x74] sm:$0xf]
      %v225 = vld [vmem:[%s174 + $0x78] sm:$0xf]
      %v226 = vld [vmem:[%s174 + $0x7c] sm:$0xf]
      %v227 = vld [vmem:[%s180] sm:$0xff]
      %v228 = vld [vmem:[%s180 + $0x8] sm:$0xff]
      %v229 = vld [vmem:[%s180 + $0x10] sm:$0xff]
      %v230 = vld [vmem:[%s180 + $0x18] sm:$0xff]
      %v231 = vld [vmem:[%s180 + $0x20] sm:$0xff]
      %v232 = vld [vmem:[%s180 + $0x28] sm:$0xff]
      %v233 = vld [vmem:[%s180 + $0x30] sm:$0xff]
      %v234 = vld [vmem:[%s180 + $0x38] sm:$0xff]
      %v235 = vld [vmem:[%s180 + $0x40] sm:$0xff]
      %v236 = vld [vmem:[%s180 + $0x48] sm:$0xff]
      %v237 = vld [vmem:[%s180 + $0x50] sm:$0xff]
      %v238 = vld [vmem:[%s180 + $0x58] sm:$0xff]
      %v239 = vld [vmem:[%s180 + $0x60] sm:$0xff]
      %v240 = vld [vmem:[%s180 + $0x68] sm:$0xff]
      %v241 = vld [vmem:[%s180 + $0x70] sm:$0xff]
      %v242 = vld [vmem:[%s180 + $0x78] sm:$0xff]
      %v275 = vunpack.c.l.b16 %v195
      %v276 = vunpack.c.l.b16 %v196
      %v277 = vunpack.c.l.b16 %v197
      %v278 = vunpack.c.l.b16 %v198
      %v279 = vunpack.c.l.b16 %v199
      %v280 = vunpack.c.l.b16 %v200
      %v281 = vunpack.c.l.b16 %v201
      %v282 = vunpack.c.l.b16 %v202
      %v283 = vunpack.c.l.b16 %v203
      %v284 = vunpack.c.l.b16 %v204
      %v285 = vunpack.c.l.b16 %v205
      %v286 = vunpack.c.l.b16 %v206
      %v287 = vunpack.c.l.b16 %v207
      %v288 = vunpack.c.l.b16 %v208
      %v289 = vunpack.c.l.b16 %v209
      %v290 = vunpack.c.l.b16 %v210
      %v291 = vunpack.c.l.b16 %v211
      %v292 = vunpack.c.l.b16 %v212
      %v293 = vunpack.c.l.b16 %v213
      %v294 = vunpack.c.l.b16 %v214
      %v295 = vunpack.c.l.b16 %v215
      %v296 = vunpack.c.l.b16 %v216
      %v297 = vunpack.c.l.b16 %v217
      %v298 = vunpack.c.l.b16 %v218
      %v299 = vunpack.c.l.b16 %v219
      %v300 = vunpack.c.l.b16 %v220
      %v301 = vunpack.c.l.b16 %v221
      %v302 = vunpack.c.l.b16 %v222
      %v303 = vunpack.c.l.b16 %v223
      %v304 = vunpack.c.l.b16 %v224
      %v305 = vunpack.c.l.b16 %v225
      %v306 = vunpack.c.l.b16 %v226
      %v307 = vpack.c.b16 %v276, %v275
      %v308 = vpack.c.b16 %v278, %v277
      %v309 = vpack.c.b16 %v280, %v279
      %v310 = vpack.c.b16 %v282, %v281
      %v311 = vpack.c.b16 %v284, %v283
      %v312 = vpack.c.b16 %v286, %v285
      %v313 = vpack.c.b16 %v288, %v287
      %v314 = vpack.c.b16 %v290, %v289
      %v315 = vpack.c.b16 %v292, %v291
      %v316 = vpack.c.b16 %v294, %v293
      %v317 = vpack.c.b16 %v296, %v295
      %v318 = vpack.c.b16 %v298, %v297
      %v319 = vpack.c.b16 %v300, %v299
      %v320 = vpack.c.b16 %v302, %v301
      %v321 = vpack.c.b16 %v304, %v303
      %v322 = vpack.c.b16 %v306, %v305
      %v355 = vunpack.c.l.b16 %v227
      %v356 = vunpack.c.h.b16 %v227
      %v357 = vunpack.c.l.b16 %v228
      %v358 = vunpack.c.h.b16 %v228
      %v359 = vunpack.c.l.b16 %v229
      %v360 = vunpack.c.h.b16 %v229
      %v361 = vunpack.c.l.b16 %v230
      %v362 = vunpack.c.h.b16 %v230
      %v363 = vunpack.c.l.b16 %v231
      %v364 = vunpack.c.h.b16 %v231
      %v365 = vunpack.c.l.b16 %v232
      %v366 = vunpack.c.h.b16 %v232
      %v367 = vunpack.c.l.b16 %v233
      %v368 = vunpack.c.h.b16 %v233
      %v369 = vunpack.c.l.b16 %v234
      %v370 = vunpack.c.h.b16 %v234
      %v371 = vunpack.c.l.b16 %v235
      %v372 = vunpack.c.h.b16 %v235
      %v373 = vunpack.c.l.b16 %v236
      %v374 = vunpack.c.h.b16 %v236
      %v375 = vunpack.c.l.b16 %v237
      %v376 = vunpack.c.h.b16 %v237
      %v377 = vunpack.c.l.b16 %v238
      %v378 = vunpack.c.h.b16 %v238
      %v379 = vunpack.c.l.b16 %v239
      %v380 = vunpack.c.h.b16 %v239
      %v381 = vunpack.c.l.b16 %v240
      %v382 = vunpack.c.h.b16 %v240
      %v383 = vunpack.c.l.b16 %v241
      %v384 = vunpack.c.h.b16 %v241
      %v385 = vunpack.c.l.b16 %v242
      %v386 = vunpack.c.h.b16 %v242
      %v387 = vpack.c.b16 %v357, %v355
      %v388 = vpack.c.b16 %v358, %v356
      %v389 = vpack.c.b16 %v361, %v359
      %v390 = vpack.c.b16 %v362, %v360
      %v391 = vpack.c.b16 %v365, %v363
      %v392 = vpack.c.b16 %v366, %v364
      %v393 = vpack.c.b16 %v369, %v367
      %v394 = vpack.c.b16 %v370, %v368
      %v395 = vpack.c.b16 %v373, %v371
      %v396 = vpack.c.b16 %v374, %v372
      %v397 = vpack.c.b16 %v377, %v375
      %v398 = vpack.c.b16 %v378, %v376
      %v399 = vpack.c.b16 %v381, %v379
      %v400 = vpack.c.b16 %v382, %v380
      %v401 = vpack.c.b16 %v385, %v383
      %v402 = vpack.c.b16 %v386, %v384
      %419 = vmatprep.subr.bf16.mxu0 %v402
      %420 = vmatpush1.bf16.msra.mxu0 %v401
      %421 = vmatprep.subr.bf16.mxu0 %v400
      %422 = vmatpush1.bf16.msra.mxu0 %v399
      %423 = vmatprep.subr.bf16.mxu0 %v398
      %424 = vmatpush1.bf16.msra.mxu0 %v397
      %425 = vmatprep.subr.bf16.mxu0 %v396
      %426 = vmatpush1.bf16.msra.mxu0 %v395
      %427 = vmatprep.subr.bf16.mxu0 %v394
      %428 = vmatpush1.bf16.msra.mxu0 %v393
      %429 = vmatprep.subr.bf16.mxu0 %v392
      %430 = vmatpush1.bf16.msra.mxu0 %v391
      %431 = vmatprep.subr.bf16.mxu0 %v390
      %432 = vmatpush1.bf16.msra.mxu0 %v389
      %433 = vmatprep.subr.bf16.mxu0 %v388
      %434 = vmatpush1.bf16.msra.mxu0 %v387
      %435 = vmatprep.subr.bf16.mxu0 0
      %436 = vmatpush2.bf16.msra.mxu0 0
      %437 = vmatprep.subr.bf16.mxu0 0
      %438 = vmatpush2.bf16.msra.mxu0 0
      %439 = vmatprep.subr.bf16.mxu0 0
      %440 = vmatpush2.bf16.msra.mxu0 0
      %441 = vmatprep.subr.bf16.mxu0 0
      %442 = vmatpush2.bf16.msra.mxu0 0
      %443 = vmatprep.subr.bf16.mxu0 0
      %444 = vmatpush2.bf16.msra.mxu0 0
      %445 = vmatprep.subr.bf16.mxu0 0
      %446 = vmatpush2.bf16.msra.mxu0 0
      %447 = vmatprep.subr.bf16.mxu0 0
      %448 = vmatpush2.bf16.msra.mxu0 0
      %449 = vmatprep.subr.bf16.mxu0 0
      %450 = vmatpush2.bf16.msra.mxu0 0
      %451 = vmatprep.mubr.bf16.mxu0 0
      %452 = vmatmul.mubr.bf16.gmra.mxu0 %v307
      %v453 = vpop.f32.mrf.mxu0
      %v454 = vadd.f32 0.0, %v453
      %v455 = vpop.f32.mrf.mxu0
      %v456 = vadd.f32 0.0, %v455
      %v457 = vpop.f32.mrf.mxu0
      %v458 = vadd.f32 0.0, %v457
      %v459 = vpop.f32.mrf.mxu0
      %v460 = vadd.f32 0.0, %v459
      %461 = vmatprep.mubr.bf16.mxu0 0
      %462 = vmatmul.mubr.bf16.gmra.mxu0 %v308
      %v463 = vpop.f32.mrf.mxu0
      %v464 = vadd.f32 0.0, %v463
      %v465 = vpop.f32.mrf.mxu0
      %v466 = vadd.f32 0.0, %v465
      %v467 = vpop.f32.mrf.mxu0
      %v468 = vadd.f32 0.0, %v467
      %v469 = vpop.f32.mrf.mxu0
      %v470 = vadd.f32 0.0, %v469
      %471 = vmatprep.mubr.bf16.mxu0 0
      %472 = vmatmul.mubr.bf16.gmra.mxu0 %v309
      %v473 = vpop.f32.mrf.mxu0
      %v474 = vadd.f32 0.0, %v473
      %v475 = vpop.f32.mrf.mxu0
      %v476 = vadd.f32 0.0, %v475
      %v477 = vpop.f32.mrf.mxu0
      %v478 = vadd.f32 0.0, %v477
      %v479 = vpop.f32.mrf.mxu0
      %v480 = vadd.f32 0.0, %v479
      %481 = vmatprep.mubr.bf16.mxu0 0
      %482 = vmatmul.mubr.bf16.gmra.mxu0 %v310
      %v483 = vpop.f32.mrf.mxu0
      %v484 = vadd.f32 0.0, %v483
      %v485 = vpop.f32.mrf.mxu0
      %v486 = vadd.f32 0.0, %v485
      %v487 = vpop.f32.mrf.mxu0
      %v488 = vadd.f32 0.0, %v487
      %v489 = vpop.f32.mrf.mxu0
      %v490 = vadd.f32 0.0, %v489
      %491 = vmatprep.mubr.bf16.mxu0 0
      %492 = vmatmul.mubr.bf16.gmra.mxu0 %v311
      %v493 = vpop.f32.mrf.mxu0
      %v494 = vadd.f32 0.0, %v493
      %v495 = vpop.f32.mrf.mxu0
      %v496 = vadd.f32 0.0, %v495
      %v497 = vpop.f32.mrf.mxu0
      %v498 = vadd.f32 0.0, %v497
      %v499 = vpop.f32.mrf.mxu0
      %v500 = vadd.f32 0.0, %v499
      %501 = vmatprep.mubr.bf16.mxu0 0
      %502 = vmatmul.mubr.bf16.gmra.mxu0 %v312
      %v503 = vpop.f32.mrf.mxu0
      %v504 = vadd.f32 0.0, %v503
      %v505 = vpop.f32.mrf.mxu0
      %v506 = vadd.f32 0.0, %v505
      %v507 = vpop.f32.mrf.mxu0
      %v508 = vadd.f32 0.0, %v507
      %v509 = vpop.f32.mrf.mxu0
      %v510 = vadd.f32 0.0, %v509
      %511 = vmatprep.mubr.bf16.mxu0 0
      %512 = vmatmul.mubr.bf16.gmra.mxu0 %v313
      %v513 = vpop.f32.mrf.mxu0
      %v514 = vadd.f32 0.0, %v513
      %v515 = vpop.f32.mrf.mxu0
      %v516 = vadd.f32 0.0, %v515
      %v517 = vpop.f32.mrf.mxu0
      %v518 = vadd.f32 0.0, %v517
      %v519 = vpop.f32.mrf.mxu0
      %v520 = vadd.f32 0.0, %v519
      %521 = vmatprep.mubr.bf16.mxu0 0
      %522 = vmatmul.mubr.bf16.gmra.mxu0 %v314
      %v523 = vpop.f32.mrf.mxu0
      %v524 = vadd.f32 0.0, %v523
      %v525 = vpop.f32.mrf.mxu0
      %v526 = vadd.f32 0.0, %v525
      %v527 = vpop.f32.mrf.mxu0
      %v528 = vadd.f32 0.0, %v527
      %v529 = vpop.f32.mrf.mxu0
      %v530 = vadd.f32 0.0, %v529
      %531 = vmatprep.mubr.bf16.mxu0 0
      %532 = vmatmul.mubr.bf16.gmra.mxu0 %v315
      %v533 = vpop.f32.mrf.mxu0
      %v534 = vadd.f32 0.0, %v533
      %v535 = vpop.f32.mrf.mxu0
      %v536 = vadd.f32 0.0, %v535
      %v537 = vpop.f32.mrf.mxu0
      %v538 = vadd.f32 0.0, %v537
      %v539 = vpop.f32.mrf.mxu0
      %v540 = vadd.f32 0.0, %v539
      %541 = vmatprep.mubr.bf16.mxu0 0
      %542 = vmatmul.mubr.bf16.gmra.mxu0 %v316
      %v543 = vpop.f32.mrf.mxu0
      %v544 = vadd.f32 0.0, %v543
      %v545 = vpop.f32.mrf.mxu0
      %v546 = vadd.f32 0.0, %v545
      %v547 = vpop.f32.mrf.mxu0
      %v548 = vadd.f32 0.0, %v547
      %v549 = vpop.f32.mrf.mxu0
      %v550 = vadd.f32 0.0, %v549
      %551 = vmatprep.mubr.bf16.mxu0 0
      %552 = vmatmul.mubr.bf16.gmra.mxu0 %v317
      %v553 = vpop.f32.mrf.mxu0
      %v554 = vadd.f32 0.0, %v553
      %v555 = vpop.f32.mrf.mxu0
      %v556 = vadd.f32 0.0, %v555
      %v557 = vpop.f32.mrf.mxu0
      %v558 = vadd.f32 0.0, %v557
      %v559 = vpop.f32.mrf.mxu0
      %v560 = vadd.f32 0.0, %v559
      %561 = vmatprep.mubr.bf16.mxu0 0
      %562 = vmatmul.mubr.bf16.gmra.mxu0 %v318
      %v563 = vpop.f32.mrf.mxu0
      %v564 = vadd.f32 0.0, %v563
      %v565 = vpop.f32.mrf.mxu0
      %v566 = vadd.f32 0.0, %v565
      %v567 = vpop.f32.mrf.mxu0
      %v568 = vadd.f32 0.0, %v567
      %v569 = vpop.f32.mrf.mxu0
      %v570 = vadd.f32 0.0, %v569
      %571 = vmatprep.mubr.bf16.mxu0 0
      %572 = vmatmul.mubr.bf16.gmra.mxu0 %v319
      %v573 = vpop.f32.mrf.mxu0
      %v574 = vadd.f32 0.0, %v573
      %v575 = vpop.f32.mrf.mxu0
      %v576 = vadd.f32 0.0, %v575
      %v577 = vpop.f32.mrf.mxu0
      %v578 = vadd.f32 0.0, %v577
      %v579 = vpop.f32.mrf.mxu0
      %v580 = vadd.f32 0.0, %v579
      %581 = vmatprep.mubr.bf16.mxu0 0
      %582 = vmatmul.mubr.bf16.gmra.mxu0 %v320
      %v583 = vpop.f32.mrf.mxu0
      %v584 = vadd.f32 0.0, %v583
      %v585 = vpop.f32.mrf.mxu0
      %v586 = vadd.f32 0.0, %v585
      %v587 = vpop.f32.mrf.mxu0
      %v588 = vadd.f32 0.0, %v587
      %v589 = vpop.f32.mrf.mxu0
      %v590 = vadd.f32 0.0, %v589
      %591 = vmatprep.mubr.bf16.mxu0 0
      %592 = vmatmul.mubr.bf16.gmra.mxu0 %v321
      %v593 = vpop.f32.mrf.mxu0
      %v594 = vadd.f32 0.0, %v593
      %v595 = vpop.f32.mrf.mxu0
      %v596 = vadd.f32 0.0, %v595
      %v597 = vpop.f32.mrf.mxu0
      %v598 = vadd.f32 0.0, %v597
      %v599 = vpop.f32.mrf.mxu0
      %v600 = vadd.f32 0.0, %v599
      %601 = vmatprep.mubr.bf16.mxu0 0
      %602 = vmatmul.mubr.bf16.gmra.mxu0 %v322
      %v603 = vpop.f32.mrf.mxu0
      %v604 = vadd.f32 0.0, %v603
      %v605 = vpop.f32.mrf.mxu0
      %v606 = vadd.f32 0.0, %v605
      %v607 = vpop.f32.mrf.mxu0
      %v608 = vadd.f32 0.0, %v607
      %v609 = vpop.f32.mrf.mxu0
      %v610 = vadd.f32 0.0, %v609
      %611 = vdwg.mxu0
      %vm612 = vcmp.gt.f32.partialorder %v454, 10.0
      %vm613 = vcmp.gt.f32.partialorder %v456, 10.0
      %vm614 = vcmp.gt.f32.partialorder %v458, 10.0
      %vm615 = vcmp.gt.f32.partialorder %v460, 10.0
      %vm616 = vcmp.gt.f32.partialorder %v464, 10.0
      %vm617 = vcmp.gt.f32.partialorder %v466, 10.0
      %vm618 = vcmp.gt.f32.partialorder %v468, 10.0
      %vm619 = vcmp.gt.f32.partialorder %v470, 10.0
      %vm620 = vcmp.gt.f32.partialorder %v474, 10.0
      %vm621 = vcmp.gt.f32.partialorder %v476, 10.0
      %vm622 = vcmp.gt.f32.partialorder %v478, 10.0
      %vm623 = vcmp.gt.f32.partialorder %v480, 10.0
      %vm624 = vcmp.gt.f32.partialorder %v484, 10.0
      %vm625 = vcmp.gt.f32.partialorder %v486, 10.0
      %vm626 = vcmp.gt.f32.partialorder %v488, 10.0
      %vm627 = vcmp.gt.f32.partialorder %v490, 10.0
      %vm628 = vcmp.gt.f32.partialorder %v494, 10.0
      %vm629 = vcmp.gt.f32.partialorder %v496, 10.0
      %vm630 = vcmp.gt.f32.partialorder %v498, 10.0
      %vm631 = vcmp.gt.f32.partialorder %v500, 10.0
      %vm632 = vcmp.gt.f32.partialorder %v504, 10.0
      %vm633 = vcmp.gt.f32.partialorder %v506, 10.0
      %vm634 = vcmp.gt.f32.partialorder %v508, 10.0
      %vm635 = vcmp.gt.f32.partialorder %v510, 10.0
      %vm636 = vcmp.gt.f32.partialorder %v514, 10.0
      %vm637 = vcmp.gt.f32.partialorder %v516, 10.0
      %vm638 = vcmp.gt.f32.partialorder %v518, 10.0
      %vm639 = vcmp.gt.f32.partialorder %v520, 10.0
      %vm640 = vcmp.gt.f32.partialorder %v524, 10.0
      %vm641 = vcmp.gt.f32.partialorder %v526, 10.0
      %vm642 = vcmp.gt.f32.partialorder %v528, 10.0
      %vm643 = vcmp.gt.f32.partialorder %v530, 10.0
      %vm644 = vcmp.gt.f32.partialorder %v534, 10.0
      %vm645 = vcmp.gt.f32.partialorder %v536, 10.0
      %vm646 = vcmp.gt.f32.partialorder %v538, 10.0
      %vm647 = vcmp.gt.f32.partialorder %v540, 10.0
      %vm648 = vcmp.gt.f32.partialorder %v544, 10.0
      %vm649 = vcmp.gt.f32.partialorder %v546, 10.0
      %vm650 = vcmp.gt.f32.partialorder %v548, 10.0
      %vm651 = vcmp.gt.f32.partialorder %v550, 10.0
      %vm652 = vcmp.gt.f32.partialorder %v554, 10.0
      %vm653 = vcmp.gt.f32.partialorder %v556, 10.0
      %vm654 = vcmp.gt.f32.partialorder %v558, 10.0
      %vm655 = vcmp.gt.f32.partialorder %v560, 10.0
      %vm656 = vcmp.gt.f32.partialorder %v564, 10.0
      %vm657 = vcmp.gt.f32.partialorder %v566, 10.0
      %vm658 = vcmp.gt.f32.partialorder %v568, 10.0
      %vm659 = vcmp.gt.f32.partialorder %v570, 10.0
      %vm660 = vcmp.gt.f32.partialorder %v574, 10.0
      %vm661 = vcmp.gt.f32.partialorder %v576, 10.0
      %vm662 = vcmp.gt.f32.partialorder %v578, 10.0
      %vm663 = vcmp.gt.f32.partialorder %v580, 10.0
      %vm664 = vcmp.gt.f32.partialorder %v584, 10.0
      %vm665 = vcmp.gt.f32.partialorder %v586, 10.0
      %vm666 = vcmp.gt.f32.partialorder %v588, 10.0
      %vm667 = vcmp.gt.f32.partialorder %v590, 10.0
      %vm668 = vcmp.gt.f32.partialorder %v594, 10.0
      %vm669 = vcmp.gt.f32.partialorder %v596, 10.0
      %vm670 = vcmp.gt.f32.partialorder %v598, 10.0
      %vm671 = vcmp.gt.f32.partialorder %v600, 10.0
      %vm672 = vcmp.gt.f32.partialorder %v604, 10.0
      %vm673 = vcmp.gt.f32.partialorder %v606, 10.0
      %vm674 = vcmp.gt.f32.partialorder %v608, 10.0
      %vm675 = vcmp.gt.f32.partialorder %v610, 10.0
      %v676 = vsel %vm612, 1.0, 0.0
      %v677 = vsel %vm613, 1.0, 0.0
      %v678 = vsel %vm614, 1.0, 0.0
      %v679 = vsel %vm615, 1.0, 0.0
      %v680 = vsel %vm616, 1.0, 0.0
      %v681 = vsel %vm617, 1.0, 0.0
      %v682 = vsel %vm618, 1.0, 0.0
      %v683 = vsel %vm619, 1.0, 0.0
      %v684 = vsel %vm620, 1.0, 0.0
      %v685 = vsel %vm621, 1.0, 0.0
      %v686 = vsel %vm622, 1.0, 0.0
      %v687 = vsel %vm623, 1.0, 0.0
      %v688 = vsel %vm624, 1.0, 0.0
      %v689 = vsel %vm625, 1.0, 0.0
      %v690 = vsel %vm626, 1.0, 0.0
      %v691 = vsel %vm627, 1.0, 0.0
      %v692 = vsel %vm628, 1.0, 0.0
      %v693 = vsel %vm629, 1.0, 0.0
      %v694 = vsel %vm630, 1.0, 0.0
      %v695 = vsel %vm631, 1.0, 0.0
      %v696 = vsel %vm632, 1.0, 0.0
      %v697 = vsel %vm633, 1.0, 0.0
      %v698 = vsel %vm634, 1.0, 0.0
      %v699 = vsel %vm635, 1.0, 0.0
      %v700 = vsel %vm636, 1.0, 0.0
      %v701 = vsel %vm637, 1.0, 0.0
      %v702 = vsel %vm638, 1.0, 0.0
      %v703 = vsel %vm639, 1.0, 0.0
      %v704 = vsel %vm640, 1.0, 0.0
      %v705 = vsel %vm641, 1.0, 0.0
      %v706 = vsel %vm642, 1.0, 0.0
      %v707 = vsel %vm643, 1.0, 0.0
      %v708 = vsel %vm644, 1.0, 0.0
      %v709 = vsel %vm645, 1.0, 0.0
      %v710 = vsel %vm646, 1.0, 0.0
      %v711 = vsel %vm647, 1.0, 0.0
      %v712 = vsel %vm648, 1.0, 0.0
      %v713 = vsel %vm649, 1.0, 0.0
      %v714 = vsel %vm650, 1.0, 0.0
      %v715 = vsel %vm651, 1.0, 0.0
      %v716 = vsel %vm652, 1.0, 0.0
      %v717 = vsel %vm653, 1.0, 0.0
      %v718 = vsel %vm654, 1.0, 0.0
      %v719 = vsel %vm655, 1.0, 0.0
      %v720 = vsel %vm656, 1.0, 0.0
      %v721 = vsel %vm657, 1.0, 0.0
      %v722 = vsel %vm658, 1.0, 0.0
      %v723 = vsel %vm659, 1.0, 0.0
      %v724 = vsel %vm660, 1.0, 0.0
      %v725 = vsel %vm661, 1.0, 0.0
      %v726 = vsel %vm662, 1.0, 0.0
      %v727 = vsel %vm663, 1.0, 0.0
      %v728 = vsel %vm664, 1.0, 0.0
      %v729 = vsel %vm665, 1.0, 0.0
      %v730 = vsel %vm666, 1.0, 0.0
      %v731 = vsel %vm667, 1.0, 0.0
      %v732 = vsel %vm668, 1.0, 0.0
      %v733 = vsel %vm669, 1.0, 0.0
      %v734 = vsel %vm670, 1.0, 0.0
      %v735 = vsel %vm671, 1.0, 0.0
      %v736 = vsel %vm672, 1.0, 0.0
      %v737 = vsel %vm673, 1.0, 0.0
      %v738 = vsel %vm674, 1.0, 0.0
      %v739 = vsel %vm675, 1.0, 0.0
      %v740 = vpack.c.bf16 %v678, %v676
      %v741 = vpack.c.bf16 %v679, %v677
      %v742 = vpack.c.bf16 %v682, %v680
      %v743 = vpack.c.bf16 %v683, %v681
      %v744 = vpack.c.bf16 %v686, %v684
      %v745 = vpack.c.bf16 %v687, %v685
      %v746 = vpack.c.bf16 %v690, %v688
      %v747 = vpack.c.bf16 %v691, %v689
      %v748 = vpack.c.bf16 %v694, %v692
      %v749 = vpack.c.bf16 %v695, %v693
      %v750 = vpack.c.bf16 %v698, %v696
      %v751 = vpack.c.bf16 %v699, %v697
      %v752 = vpack.c.bf16 %v702, %v700
      %v753 = vpack.c.bf16 %v703, %v701
      %v754 = vpack.c.bf16 %v706, %v704
      %v755 = vpack.c.bf16 %v707, %v705
      %v756 = vpack.c.bf16 %v710, %v708
      %v757 = vpack.c.bf16 %v711, %v709
      %v758 = vpack.c.bf16 %v714, %v712
      %v759 = vpack.c.bf16 %v715, %v713
      %v760 = vpack.c.bf16 %v718, %v716
      %v761 = vpack.c.bf16 %v719, %v717
      %v762 = vpack.c.bf16 %v722, %v720
      %v763 = vpack.c.bf16 %v723, %v721
      %v764 = vpack.c.bf16 %v726, %v724
      %v765 = vpack.c.bf16 %v727, %v725
      %v766 = vpack.c.bf16 %v730, %v728
      %v767 = vpack.c.bf16 %v731, %v729
      %v768 = vpack.c.bf16 %v734, %v732
      %v769 = vpack.c.bf16 %v735, %v733
      %v770 = vpack.c.bf16 %v738, %v736
      %v771 = vpack.c.bf16 %v739, %v737
      %v804 = vunpack.c.l.b16 %v740
      %v805 = vunpack.c.l.b16 %v741
      %v806 = vunpack.c.h.b16 %v740
      %v807 = vunpack.c.h.b16 %v741
      %v808 = vunpack.c.l.b16 %v742
      %v809 = vunpack.c.l.b16 %v743
      %v810 = vunpack.c.h.b16 %v742
      %v811 = vunpack.c.h.b16 %v743
      %v812 = vunpack.c.l.b16 %v744
      %v813 = vunpack.c.l.b16 %v745
      %v814 = vunpack.c.h.b16 %v744
      %v815 = vunpack.c.h.b16 %v745
      %v816 = vunpack.c.l.b16 %v746
      %v817 = vunpack.c.l.b16 %v747
      %v818 = vunpack.c.h.b16 %v746
      %v819 = vunpack.c.h.b16 %v747
      %v820 = vunpack.c.l.b16 %v748
      %v821 = vunpack.c.l.b16 %v749
      %v822 = vunpack.c.h.b16 %v748
      %v823 = vunpack.c.h.b16 %v749
      %v824 = vunpack.c.l.b16 %v750
      %v825 = vunpack.c.l.b16 %v751
      %v826 = vunpack.c.h.b16 %v750
      %v827 = vunpack.c.h.b16 %v751
      %v828 = vunpack.c.l.b16 %v752
      %v829 = vunpack.c.l.b16 %v753
      %v830 = vunpack.c.h.b16 %v752
      %v831 = vunpack.c.h.b16 %v753
      %v832 = vunpack.c.l.b16 %v754
      %v833 = vunpack.c.l.b16 %v755
      %v834 = vunpack.c.h.b16 %v754
      %v835 = vunpack.c.h.b16 %v755
      %v836 = vunpack.c.l.b16 %v756
      %v837 = vunpack.c.l.b16 %v757
      %v838 = vunpack.c.h.b16 %v756
      %v839 = vunpack.c.h.b16 %v757
      %v840 = vunpack.c.l.b16 %v758
      %v841 = vunpack.c.l.b16 %v759
      %v842 = vunpack.c.h.b16 %v758
      %v843 = vunpack.c.h.b16 %v759
      %v844 = vunpack.c.l.b16 %v760
      %v845 = vunpack.c.l.b16 %v761
      %v846 = vunpack.c.h.b16 %v760
      %v847 = vunpack.c.h.b16 %v761
      %v848 = vunpack.c.l.b16 %v762
      %v849 = vunpack.c.l.b16 %v763
      %v850 = vunpack.c.h.b16 %v762
      %v851 = vunpack.c.h.b16 %v763
      %v852 = vunpack.c.l.b16 %v764
      %v853 = vunpack.c.l.b16 %v765
      %v854 = vunpack.c.h.b16 %v764
      %v855 = vunpack.c.h.b16 %v765
      %v856 = vunpack.c.l.b16 %v766
      %v857 = vunpack.c.l.b16 %v767
      %v858 = vunpack.c.h.b16 %v766
      %v859 = vunpack.c.h.b16 %v767
      %v860 = vunpack.c.l.b16 %v768
      %v861 = vunpack.c.l.b16 %v769
      %v862 = vunpack.c.h.b16 %v768
      %v863 = vunpack.c.h.b16 %v769
      %v864 = vunpack.c.l.b16 %v770
      %v865 = vunpack.c.l.b16 %v771
      %v866 = vunpack.c.h.b16 %v770
      %v867 = vunpack.c.h.b16 %v771
      %v868 = vpack.c.b16 %v805, %v804
      %v869 = vpack.c.b16 %v807, %v806
      %v870 = vpack.c.b16 %v809, %v808
      %v871 = vpack.c.b16 %v811, %v810
      %v872 = vpack.c.b16 %v813, %v812
      %v873 = vpack.c.b16 %v815, %v814
      %v874 = vpack.c.b16 %v817, %v816
      %v875 = vpack.c.b16 %v819, %v818
      %v876 = vpack.c.b16 %v821, %v820
      %v877 = vpack.c.b16 %v823, %v822
      %v878 = vpack.c.b16 %v825, %v824
      %v879 = vpack.c.b16 %v827, %v826
      %v880 = vpack.c.b16 %v829, %v828
      %v881 = vpack.c.b16 %v831, %v830
      %v882 = vpack.c.b16 %v833, %v832
      %v883 = vpack.c.b16 %v835, %v834
      %v884 = vpack.c.b16 %v837, %v836
      %v885 = vpack.c.b16 %v839, %v838
      %v886 = vpack.c.b16 %v841, %v840
      %v887 = vpack.c.b16 %v843, %v842
      %v888 = vpack.c.b16 %v845, %v844
      %v889 = vpack.c.b16 %v847, %v846
      %v890 = vpack.c.b16 %v849, %v848
      %v891 = vpack.c.b16 %v851, %v850
      %v892 = vpack.c.b16 %v853, %v852
      %v893 = vpack.c.b16 %v855, %v854
      %v894 = vpack.c.b16 %v857, %v856
      %v895 = vpack.c.b16 %v859, %v858
      %v896 = vpack.c.b16 %v861, %v860
      %v897 = vpack.c.b16 %v863, %v862
      %v898 = vpack.c.b16 %v865, %v864
      %v899 = vpack.c.b16 %v867, %v866
      %932 = vst [vmem:[%s191] sm:$0xff] %v868
      %933 = vst [vmem:[%s191 + $0x8] sm:$0xff] %v869
      %934 = vst [vmem:[%s191 + $0x10] sm:$0xff] %v870
      %935 = vst [vmem:[%s191 + $0x18] sm:$0xff] %v871
      %936 = vst [vmem:[%s191 + $0x20] sm:$0xff] %v872
      %937 = vst [vmem:[%s191 + $0x28] sm:$0xff] %v873
      %938 = vst [vmem:[%s191 + $0x30] sm:$0xff] %v874
      %939 = vst [vmem:[%s191 + $0x38] sm:$0xff] %v875
      %940 = vst [vmem:[%s191 + $0x40] sm:$0xff] %v876
      %941 = vst [vmem:[%s191 + $0x48] sm:$0xff] %v877
      %942 = vst [vmem:[%s191 + $0x50] sm:$0xff] %v878
      %943 = vst [vmem:[%s191 + $0x58] sm:$0xff] %v879
      %944 = vst [vmem:[%s191 + $0x60] sm:$0xff] %v880
      %945 = vst [vmem:[%s191 + $0x68] sm:$0xff] %v881
      %946 = vst [vmem:[%s191 + $0x70] sm:$0xff] %v882
      %947 = vst [vmem:[%s191 + $0x78] sm:$0xff] %v883
      %948 = vst [vmem:[%s191 + $0x80] sm:$0xff] %v884
      %949 = vst [vmem:[%s191 + $0x88] sm:$0xff] %v885
      %950 = vst [vmem:[%s191 + $0x90] sm:$0xff] %v886
      %951 = vst [vmem:[%s191 + $0x98] sm:$0xff] %v887
      %952 = vst [vmem:[%s191 + $0xa0] sm:$0xff] %v888
      %953 = vst [vmem:[%s191 + $0xa8] sm:$0xff] %v889
      %954 = vst [vmem:[%s191 + $0xb0] sm:$0xff] %v890
      %955 = vst [vmem:[%s191 + $0xb8] sm:$0xff] %v891
      %956 = vst [vmem:[%s191 + $0xc0] sm:$0xff] %v892
      %957 = vst [vmem:[%s191 + $0xc8] sm:$0xff] %v893
      %958 = vst [vmem:[%s191 + $0xd0] sm:$0xff] %v894
      %959 = vst [vmem:[%s191 + $0xd8] sm:$0xff] %v895
      %960 = vst [vmem:[%s191 + $0xe0] sm:$0xff] %v896
      %961 = vst [vmem:[%s191 + $0xe8] sm:$0xff] %v897
      %962 = vst [vmem:[%s191 + $0xf0] sm:$0xff] %v898
      %963 = vst [vmem:[%s191 + $0xf8] sm:$0xff] %v899
      %s964 = smul.u32 32, %s17
      %s965 = smul.u32 2, %s18
      %p966 = scmp.lt.s32.totalorder %s964, 63
      %s967 = scalar_select %p966, %s964, 63
      %p968 = scmp.lt.s32.totalorder %s965, 1
      %s969 = scalar_select %p968, %s965, 1
      %s970 = smul.addr %s967, 2
      %s971 = sadd.s32 %s969, %s970
      %s972 = smul.addr %s971, 4
      %s973 = scalar_lea.vmem %s2, %s972
      // Predicated region
      $region29: #{sep_conv2d_forward.4} parent=27 // pred_check
        %p974 = pneg %p97
      $region30: #{sep_conv2d_forward.4} parent=27 // pred_check_branch
        %976 = sbr.rel (%p974) target = $region32
      $region31: #{sep_conv2d_forward.4} parent=27 // pred_region
        %s977 = smul.u32 32, %s17
        %s978 = smul.u32 2, %s18
      $region32: #{sep_conv2d_forward.4} parent=27 // pred_fallthru
        _
    $region28: #{sep_conv2d_forward.4} parent=5 // pred_fallthru
      _
    %p979 = scmp.le.s32.totalorder 2, %s8
    // Predicated region
    $region33: #{sep_conv2d_forward.4} parent=5 // pred_check
      %p980 = pneg %p979
    $region34: #{sep_conv2d_forward.4} parent=5 // pred_check_branch
      %982 = sbr.rel (%p980) target = $region36
    $region35: #{sep_conv2d_forward.4} parent=5 // pred_region
      %s983 = ssub.s32 %s8, 2
      // Predicated region
      $region37: #{sep_conv2d_forward.4} parent=35 // pred_check
        %p984 = pneg %p103
      $region38: #{sep_conv2d_forward.4} parent=35 // pred_check_branch
        %986 = sbr.rel (%p984) target = $region40
      $region39: #{sep_conv2d_forward.4} parent=35 // pred_region
        %s987 = smul.u32 32, %s19
        %s988 = smul.u32 2, %s20
        %p989 = scmp.lt.s32.totalorder %s987, 63
        %s990 = scalar_select %p989, %s987, 63
        %p991 = scmp.lt.s32.totalorder %s988, 1
        %s992 = scalar_select %p991, %s988, 1
        %s993 = smul.addr %s990, 2
        %s994 = sadd.s32 %s992, %s993
        %s995 = smul.addr %s994, 4
        %s996 = scalar_lea.vmem %s2, %s995
      $region40: #{sep_conv2d_forward.4} parent=35 // pred_fallthru
        _
    $region36: #{sep_conv2d_forward.4} parent=5 // pred_fallthru
      _
  $region6: #{sep_conv2d_forward.4} parent=0 // loop_footer
    %s12 = sadd.s32 1, %s8
  $region7: #{sep_conv2d_forward.4} parent=0 // loop_footer_branch
    %7 = sbr.rel target = $region3
  $region8: #{sep_conv2d_forward.4} parent=0 // loop_exit
    _

// kernel: sep_conv2d_forward.5
$region0: #{sep_conv2d_forward.5}
  #allocation0 [shape = 'u32[]', space=smem, size = 0x4, offset = 0x4, fixed_abs, tag = 'smem constant byte address 0x4 - core index']
  #allocation1 [shape = 'u32[144,128]{1,0:T(1,128)}', space=vmem, size = 0x12000, scoped, tag = 'internal scratch']
  %s0 = inlined_call_operand.vmem [shape: bf16[2,4,9,9,256], index: 0, kind: input, shape index: {}]
  %s1 = inlined_call_operand.vmem [shape: bf16[2,9,9,256], index: 1, kind: output, shape index: {}]
  %s2 = sld [smem:[#allocation0]]
  $region37: #{sep_conv2d_forward.5} parent=0
    _
  %s4 = ssub.s32 1, %s2
  %s5 = scalar_select 0, %s4, %s2
  loop: start=0, step=1, limit=4
  $region2: #{sep_conv2d_forward.5} parent=0 // loop_pre_header
    _
  $region3: #{sep_conv2d_forward.5} parent=0 // loop_header
    %s7 = sphi 0, %s11
    %p8 = scmp.ge.s32.totalorder %s7, 4
    %s14 = sphi 0, %s26
    %s15 = sphi 0, %s22
    %s16 = sphi 0, %s14
    %s17 = sphi 0, %s15
    %s18 = sphi 0, %s16
    %s19 = sphi 0, %s17
    %s31 = sphi 0, %s33
    %s34 = sphi 0, %s31
    %s35 = sphi 0, %s34
    %s51 = sphi 0, %s35
    %s59 = sphi 0, %s61
    %s62 = sphi 0, %s59
    %s63 = sphi 0, %s62
    %s79 = sphi 0, %s63
  $region4: #{sep_conv2d_forward.5} parent=0 // loop_header_branch
    %10 = sbr.rel (%p8) target = $region8
  $region5: #{sep_conv2d_forward.5} parent=0 // loop_body
    %s12 = ssub.s32 %s7, 1
    %s13 = ssub.s32 %s7, 2
    %s20 = sadd.s32 1, %s15
    %p21 = scmp.ge.s32.totalorder %s20, 1
    %s22 = scalar_select %p21, 0, %s20
    %s23 = sadd.s32 1, %s14
    %s24 = scalar_select %p21, %s23, %s14
    %p25 = scmp.ge.s32.totalorder %s24, 2
    %s26 = scalar_select %p25, 0, %s24
    %s27 = ssub.s32 %s14, %s26
    %s28 = ssub.s32 %s15, %s22
    %s29 = sor.u32 %s27, %s28
    %p30 = scmp.eq.s32.totalorder %s29, 0
    %s32 = sadd.s32 %s31, 1
    %s33 = scalar_select %p30, %s31, %s32
    %p36 = pneg %p30
    %p37 = scmp.eq.s32.totalorder %s7, 1
    %p38 = por %p36, %p37
    %p39 = scmp.ne.s32.totalorder %s31, %s34
    %p40 = scmp.eq.s32.totalorder %s7, 0
    %p41 = por %p39, %p40
    %p42 = scmp.ne.s32.totalorder %s31, %s34
    %p43 = scmp.eq.s32.totalorder %s12, 1
    %p44 = por %p42, %p43
    %p45 = scmp.ne.s32.totalorder %s34, %s35
    %p46 = scmp.eq.s32.totalorder %s12, 0
    %p47 = por %p45, %p46
    %p48 = scmp.ne.s32.totalorder %s34, %s35
    %p49 = scmp.eq.s32.totalorder %s13, 1
    %p50 = por %p48, %p49
    %p52 = scmp.ne.s32.totalorder %s35, %s51
    %p53 = scmp.eq.s32.totalorder %s13, 0
    %p54 = por %p52, %p53
    %s55 = ssub.s32 %s14, %s26
    %s56 = ssub.s32 %s15, %s22
    %s57 = sor.u32 %s55, %s56
    %p58 = scmp.eq.s32.totalorder %s57, 0
    %s60 = sadd.s32 %s59, 1
    %s61 = scalar_select %p58, %s59, %s60
    %p64 = pneg %p58
    %p65 = scmp.eq.s32.totalorder %s7, 1
    %p66 = por %p64, %p65
    %p67 = scmp.ne.s32.totalorder %s59, %s62
    %p68 = scmp.eq.s32.totalorder %s7, 0
    %p69 = por %p67, %p68
    %p70 = scmp.ne.s32.totalorder %s59, %s62
    %p71 = scmp.eq.s32.totalorder %s12, 1
    %p72 = por %p70, %p71
    %p73 = scmp.ne.s32.totalorder %s62, %s63
    %p74 = scmp.eq.s32.totalorder %s12, 0
    %p75 = por %p73, %p74
    %p76 = scmp.ne.s32.totalorder %s62, %s63
    %p77 = scmp.eq.s32.totalorder %s13, 1
    %p78 = por %p76, %p77
    %p80 = scmp.ne.s32.totalorder %s63, %s79
    %p81 = scmp.eq.s32.totalorder %s13, 0
    %p82 = por %p80, %p81
    %p83 = scmp.le.s32.totalorder 1, %s7
    %p84 = scmp.lt.s32.totalorder %s7, 3
    %p85 = pnand %p83, %p84
    %p86 = pneg %p85
    // Predicated region
    $region9: #{sep_conv2d_forward.5} parent=5 // pred_check
      _
    $region10: #{sep_conv2d_forward.5} parent=5 // pred_check_branch
      %88 = sbr.rel (%p85) target = $region12
    $region11: #{sep_conv2d_forward.5} parent=5 // pred_region
      %s89 = ssub.s32 %s7, 1
    $region12: #{sep_conv2d_forward.5} parent=5 // pred_fallthru
      _
    %p90 = scmp.lt.s32.totalorder %s7, 2
    // Predicated region
    $region13: #{sep_conv2d_forward.5} parent=5 // pred_check
      %p91 = pneg %p90
    $region14: #{sep_conv2d_forward.5} parent=5 // pred_check_branch
      %93 = sbr.rel (%p91) target = $region16
    $region15: #{sep_conv2d_forward.5} parent=5 // pred_region
      // Predicated region
      $region17: #{sep_conv2d_forward.5} parent=15 // pred_check
        %p94 = pneg %p41
      $region18: #{sep_conv2d_forward.5} parent=15 // pred_check_branch
        %96 = sbr.rel (%p94) target = $region20
      $region19: #{sep_conv2d_forward.5} parent=15 // pred_region
        %s97 = smul.u32 2, %s15
        %p98 = scmp.lt.s32.totalorder %s14, 1
        %s99 = scalar_select %p98, %s14, 1
        %p100 = scmp.lt.s32.totalorder %s97, 1
        %s101 = scalar_select %p100, %s97, 1
        %s102 = smul.addr %s99, 144
        %s103 = sadd.s32 %s101, %s102
        %s104 = smul.addr %s103, 4
        %s105 = scalar_lea.vmem %s0, %s104
        %s106 = smul.u32 2, %s15
      $region20: #{sep_conv2d_forward.5} parent=15 // pred_fallthru
        _
    $region16: #{sep_conv2d_forward.5} parent=5 // pred_fallthru
      _
    %p107 = scmp.le.s32.totalorder 1, %s7
    %p108 = scmp.lt.s32.totalorder %s7, 3
    %p109 = pnand %p107, %p108
    %p110 = pneg %p109
    // Predicated region
    $region21: #{sep_conv2d_forward.5} parent=5 // pred_check
      _
    $region22: #{sep_conv2d_forward.5} parent=5 // pred_check_branch
      %112 = sbr.rel (%p109) target = $region24
    $region23: #{sep_conv2d_forward.5} parent=5 // pred_region
      %s113 = ssub.s32 %s7, 1
      %s114 = smul.u32 2, %s17
      %p115 = scmp.lt.s32.totalorder %s16, 1
      %s116 = scalar_select %p115, %s16, 1
      %p117 = scmp.lt.s32.totalorder %s114, 1
      %s118 = scalar_select %p117, %s114, 1
      %s119 = smul.addr %s116, 144
      %s120 = sadd.s32 %s118, %s119
      %s121 = smul.addr %s120, 4
      %s122 = scalar_lea.vmem %s0, %s121
      %p123 = pneg %p47
      %p124 = pneg %p44
      %p125 = pneg %p75
      %p126 = pneg %p72
      %s127 = smul.u32 2, %s17
      %p128 = scmp.lt.s32.totalorder %s16, 1
      %s129 = scalar_select %p128, %s16, 1
      %p130 = scmp.lt.s32.totalorder %s127, 1
      %s131 = scalar_select %p130, %s127, 1
      %s132 = smul.addr %s129, 36
      %s133 = sadd.s32 %s131, %s132
      %s134 = smul.addr %s133, 4
      %s135 = scalar_lea.vmem %s1, %s134
      %s136 = smul.u32 2, %s17
      %p137 = scmp.lt.s32.totalorder %s16, 1
      %s138 = scalar_select %p137, %s16, 1
      %p139 = scmp.lt.s32.totalorder %s136, 1
      %s140 = scalar_select %p139, %s136, 1
      %s141 = smul.addr %s138, 144
      %s142 = sadd.s32 %s140, %s141
      %s143 = smul.addr %s142, 4
      %s144 = scalar_lea.vmem %s0, %s143
      %s145 = smul.u32 2, %s17
      %s146 = smul.u32 2, %s17
      %p147 = scmp.lt.s32.totalorder %s16, 1
      %s148 = scalar_select %p147, %s16, 1
      %p149 = scmp.lt.s32.totalorder %s146, 1
      %s150 = scalar_select %p149, %s146, 1
      %s151 = smul.addr %s148, 36
      %s152 = sadd.s32 %s150, %s151
      %s153 = smul.addr %s152, 4
      %s154 = scalar_lea.vmem %s1, %s153
      %s155 = smul.u32 2, %s17
      %v157 = vld [vmem:[%s144] sm:$0xff]
      %v158 = vld [vmem:[%s144 + $0x8] sm:$0x11]
      %v159 = vld [vmem:[%s144 + $0x10] sm:$0xff]
      %v160 = vld [vmem:[%s144 + $0x18] sm:$0x11]
      %v161 = vld [vmem:[%s144 + $0x20] sm:$0xff]
      %v162 = vld [vmem:[%s144 + $0x28] sm:$0x11]
      %v163 = vld [vmem:[%s144 + $0x30] sm:$0xff]
      %v164 = vld [vmem:[%s144 + $0x38] sm:$0x11]
      %v165 = vld [vmem:[%s144 + $0x40] sm:$0xff]
      %v166 = vld [vmem:[%s144 + $0x48] sm:$0x11]
      %v167 = vld [vmem:[%s144 + $0x50] sm:$0xff]
      %v168 = vld [vmem:[%s144 + $0x58] sm:$0x11]
      %v169 = vld [vmem:[%s144 + $0x60] sm:$0xff]
      %v170 = vld [vmem:[%s144 + $0x68] sm:$0x11]
      %v171 = vld [vmem:[%s144 + $0x70] sm:$0xff]
      %v172 = vld [vmem:[%s144 + $0x78] sm:$0x11]
      %v173 = vld [vmem:[%s144 + $0x80] sm:$0xff]
      %v174 = vld [vmem:[%s144 + $0x88] sm:$0x11]
      %v175 = vld [vmem:[%s144 + $0x90] sm:$0xff]
      %v176 = vld [vmem:[%s144 + $0x98] sm:$0x11]
      %v177 = vld [vmem:[%s144 + $0xa0] sm:$0xff]
      %v178 = vld [vmem:[%s144 + $0xa8] sm:$0x11]
      %v179 = vld [vmem:[%s144 + $0xb0] sm:$0xff]
      %v180 = vld [vmem:[%s144 + $0xb8] sm:$0x11]
      %v181 = vld [vmem:[%s144 + $0xc0] sm:$0xff]
      %v182 = vld [vmem:[%s144 + $0xc8] sm:$0x11]
      %v183 = vld [vmem:[%s144 + $0xd0] sm:$0xff]
      %v184 = vld [vmem:[%s144 + $0xd8] sm:$0x11]
      %v185 = vld [vmem:[%s144 + $0xe0] sm:$0xff]
      %v186 = vld [vmem:[%s144 + $0xe8] sm:$0x11]
      %v187 = vld [vmem:[%s144 + $0xf0] sm:$0xff]
      %v188 = vld [vmem:[%s144 + $0xf8] sm:$0x11]
      %v189 = vld [vmem:[%s144 + $0x100] sm:$0xff]
      %v190 = vld [vmem:[%s144 + $0x108] sm:$0x11]
      %v191 = vld [vmem:[%s144 + $0x110] sm:$0xff]
      %v192 = vld [vmem:[%s144 + $0x118] sm:$0x11]
      %v193 = vld [vmem:[%s144 + $0x120] sm:$0xff]
      %v194 = vld [vmem:[%s144 + $0x128] sm:$0x11]
      %v195 = vld [vmem:[%s144 + $0x130] sm:$0xff]
      %v196 = vld [vmem:[%s144 + $0x138] sm:$0x11]
      %v197 = vld [vmem:[%s144 + $0x140] sm:$0xff]
      %v198 = vld [vmem:[%s144 + $0x148] sm:$0x11]
      %v199 = vld [vmem:[%s144 + $0x150] sm:$0xff]
      %v200 = vld [vmem:[%s144 + $0x158] sm:$0x11]
      %v201 = vld [vmem:[%s144 + $0x160] sm:$0xff]
      %v202 = vld [vmem:[%s144 + $0x168] sm:$0x11]
      %v203 = vld [vmem:[%s144 + $0x170] sm:$0xff]
      %v204 = vld [vmem:[%s144 + $0x178] sm:$0x11]
      %v205 = vld [vmem:[%s144 + $0x180] sm:$0xff]
      %v206 = vld [vmem:[%s144 + $0x188] sm:$0x11]
      %v207 = vld [vmem:[%s144 + $0x190] sm:$0xff]
      %v208 = vld [vmem:[%s144 + $0x198] sm:$0x11]
      %v209 = vld [vmem:[%s144 + $0x1a0] sm:$0xff]
      %v210 = vld [vmem:[%s144 + $0x1a8] sm:$0x11]
      %v211 = vld [vmem:[%s144 + $0x1b0] sm:$0xff]
      %v212 = vld [vmem:[%s144 + $0x1b8] sm:$0x11]
      %v213 = vld [vmem:[%s144 + $0x1c0] sm:$0xff]
      %v214 = vld [vmem:[%s144 + $0x1c8] sm:$0x11]
      %v215 = vld [vmem:[%s144 + $0x1d0] sm:$0xff]
      %v216 = vld [vmem:[%s144 + $0x1d8] sm:$0x11]
      %v217 = vld [vmem:[%s144 + $0x1e0] sm:$0xff]
      %v218 = vld [vmem:[%s144 + $0x1e8] sm:$0x11]
      %v219 = vld [vmem:[%s144 + $0x1f0] sm:$0xff]
      %v220 = vld [vmem:[%s144 + $0x1f8] sm:$0x11]
      %v221 = vld [vmem:[%s144 + $0x200] sm:$0xff]
      %v222 = vld [vmem:[%s144 + $0x208] sm:$0x11]
      %v223 = vld [vmem:[%s144 + $0x210] sm:$0xff]
      %v224 = vld [vmem:[%s144 + $0x218] sm:$0x11]
      %v225 = vld [vmem:[%s144 + $0x220] sm:$0xff]
      %v226 = vld [vmem:[%s144 + $0x228] sm:$0x11]
      %v227 = vld [vmem:[%s144 + $0x230] sm:$0xff]
      %v228 = vld [vmem:[%s144 + $0x238] sm:$0x11]
      %v229 = vmax.bf16 %v157, %v175
      %v230 = vmax.bf16 %v229, %v193
      %v231 = vmax.bf16 %v230, %v211
      %vm232 = vcmask 1040384
      %vm233 = vsmask.f32 256
      %vm234 = vmand %vm232, %vm233
      %vm235 = vcmask 1044484
      %vm236 = vsmask.f32 4352
      %vm237 = vmand %vm235, %vm236
      %vm238 = vmor %vm237, %vm234
      %v239 = vsel %vm238, %v158, 4286644096
      %v240 = vsel %vm238, %v176, 4286644096
      %v241 = vmax.bf16 %v239, %v240
      %v242 = vsel %vm238, %v194, 4286644096
      %v243 = vmax.bf16 %v241, %v242
      %v244 = vsel %vm238, %v212, 4286644096
      %v245 = vmax.bf16 %v243, %v244
      %v246 = vmax.bf16 %v159, %v177
      %v247 = vmax.bf16 %v246, %v195
      %v248 = vmax.bf16 %v247, %v213
      %v249 = vsel %vm238, %v160, 4286644096
      %v250 = vsel %vm238, %v178, 4286644096
      %v251 = vmax.bf16 %v249, %v250
      %v252 = vsel %vm238, %v196, 4286644096
      %v253 = vmax.bf16 %v251, %v252
      %v254 = vsel %vm238, %v214, 4286644096
      %v255 = vmax.bf16 %v253, %v254
      %v256 = vmax.bf16 %v161, %v179
      %v257 = vmax.bf16 %v256, %v197
      %v258 = vmax.bf16 %v257, %v215
      %v259 = vsel %vm238, %v162, 4286644096
      %v260 = vsel %vm238, %v180, 4286644096
      %v261 = vmax.bf16 %v259, %v260
      %v262 = vsel %vm238, %v198, 4286644096
      %v263 = vmax.bf16 %v261, %v262
      %v264 = vsel %vm238, %v216, 4286644096
      %v265 = vmax.bf16 %v263, %v264
      %v266 = vmax.bf16 %v163, %v181
      %v267 = vmax.bf16 %v266, %v199
      %v268 = vmax.bf16 %v267, %v217
      %v269 = vsel %vm238, %v164, 4286644096
      %v270 = vsel %vm238, %v182, 4286644096
      %v271 = vmax.bf16 %v269, %v270
      %v272 = vsel %vm238, %v200, 4286644096
      %v273 = vmax.bf16 %v271, %v272
      %v274 = vsel %vm238, %v218, 4286644096
      %v275 = vmax.bf16 %v273, %v274
      %v276 = vmax.bf16 %v165, %v183
      %v277 = vmax.bf16 %v276, %v201
      %v278 = vmax.bf16 %v277, %v219
      %v279 = vsel %vm238, %v166, 4286644096
      %v280 = vsel %vm238, %v184, 4286644096
      %v281 = vmax.bf16 %v279, %v280
      %v282 = vsel %vm238, %v202, 4286644096
      %v283 = vmax.bf16 %v281, %v282
      %v284 = vsel %vm238, %v220, 4286644096
      %v285 = vmax.bf16 %v283, %v284
      %v286 = vmax.bf16 %v167, %v185
      %v287 = vmax.bf16 %v286, %v203
      %v288 = vmax.bf16 %v287, %v221
      %v289 = vsel %vm238, %v168, 4286644096
      %v290 = vsel %vm238, %v186, 4286644096
      %v291 = vmax.bf16 %v289, %v290
      %v292 = vsel %vm238, %v204, 4286644096
      %v293 = vmax.bf16 %v291, %v292
      %v294 = vsel %vm238, %v222, 4286644096
      %v295 = vmax.bf16 %v293, %v294
      %v296 = vmax.bf16 %v169, %v187
      %v297 = vmax.bf16 %v296, %v205
      %v298 = vmax.bf16 %v297, %v223
      %v299 = vsel %vm238, %v170, 4286644096
      %v300 = vsel %vm238, %v188, 4286644096
      %v301 = vmax.bf16 %v299, %v300
      %v302 = vsel %vm238, %v206, 4286644096
      %v303 = vmax.bf16 %v301, %v302
      %v304 = vsel %vm238, %v224, 4286644096
      %v305 = vmax.bf16 %v303, %v304
      %v306 = vmax.bf16 %v171, %v189
      %v307 = vmax.bf16 %v306, %v207
      %v308 = vmax.bf16 %v307, %v225
      %v309 = vsel %vm238, %v172, 4286644096
      %v310 = vsel %vm238, %v190, 4286644096
      %v311 = vmax.bf16 %v309, %v310
      %v312 = vsel %vm238, %v208, 4286644096
      %v313 = vmax.bf16 %v311, %v312
      %v314 = vsel %vm238, %v226, 4286644096
      %v315 = vmax.bf16 %v313, %v314
      %v316 = vmax.bf16 %v173, %v191
      %v317 = vmax.bf16 %v316, %v209
      %v318 = vmax.bf16 %v317, %v227
      %v319 = vsel %vm238, %v174, 4286644096
      %v320 = vsel %vm238, %v192, 4286644096
      %v321 = vmax.bf16 %v319, %v320
      %v322 = vsel %vm238, %v210, 4286644096
      %v323 = vmax.bf16 %v321, %v322
      %v324 = vsel %vm238, %v228, 4286644096
      %v325 = vmax.bf16 %v323, %v324
      %326 = vst [vmem:[%s154] sm:$0xff] %v231
      %v327 = vld [vmem:[%s154 + $0x8] sm:$0x11]
      %v328 = vsel %vm238, %v245, %v327
      %329 = vst [vmem:[%s154 + $0x8] sm:$0x11] %v328
      %330 = vst [vmem:[%s154 + $0x10] sm:$0xff] %v248
      %v331 = vld [vmem:[%s154 + $0x18] sm:$0x11]
      %v332 = vsel %vm238, %v255, %v331
      %333 = vst [vmem:[%s154 + $0x18] sm:$0x11] %v332
      %334 = vst [vmem:[%s154 + $0x20] sm:$0xff] %v258
      %v335 = vld [vmem:[%s154 + $0x28] sm:$0x11]
      %v336 = vsel %vm238, %v265, %v335
      %337 = vst [vmem:[%s154 + $0x28] sm:$0x11] %v336
      %338 = vst [vmem:[%s154 + $0x30] sm:$0xff] %v268
      %v339 = vld [vmem:[%s154 + $0x38] sm:$0x11]
      %v340 = vsel %vm238, %v275, %v339
      %341 = vst [vmem:[%s154 + $0x38] sm:$0x11] %v340
      %342 = vst [vmem:[%s154 + $0x40] sm:$0xff] %v278
      %v343 = vld [vmem:[%s154 + $0x48] sm:$0x11]
      %v344 = vsel %vm238, %v285, %v343
      %345 = vst [vmem:[%s154 + $0x48] sm:$0x11] %v344
      %346 = vst [vmem:[%s154 + $0x50] sm:$0xff] %v288
      %v347 = vld [vmem:[%s154 + $0x58] sm:$0x11]
      %v348 = vsel %vm238, %v295, %v347
      %349 = vst [vmem:[%s154 + $0x58] sm:$0x11] %v348
      %350 = vst [vmem:[%s154 + $0x60] sm:$0xff] %v298
      %v351 = vld [vmem:[%s154 + $0x68] sm:$0x11]
      %v352 = vsel %vm238, %v305, %v351
      %353 = vst [vmem:[%s154 + $0x68] sm:$0x11] %v352
      %354 = vst [vmem:[%s154 + $0x70] sm:$0xff] %v308
      %v355 = vld [vmem:[%s154 + $0x78] sm:$0x11]
      %v356 = vsel %vm238, %v315, %v355
      %357 = vst [vmem:[%s154 + $0x78] sm:$0x11] %v356
      %358 = vst [vmem:[%s154 + $0x80] sm:$0xff] %v318
      %v359 = vld [vmem:[%s154 + $0x88] sm:$0x11]
      %v360 = vsel %vm238, %v325, %v359
      %361 = vst [vmem:[%s154 + $0x88] sm:$0x11] %v360
      %s362 = smul.u32 2, %s17
      %p363 = scmp.lt.s32.totalorder %s16, 1
      %s364 = scalar_select %p363, %s16, 1
      %p365 = scmp.lt.s32.totalorder %s362, 1
      %s366 = scalar_select %p365, %s362, 1
      %s367 = smul.addr %s364, 36
      %s368 = sadd.s32 %s366, %s367
      %s369 = smul.addr %s368, 4
      %s370 = scalar_lea.vmem %s1, %s369
      // Predicated region
      $region25: #{sep_conv2d_forward.5} parent=23 // pred_check
        %p371 = pneg %p72
      $region26: #{sep_conv2d_forward.5} parent=23 // pred_check_branch
        %373 = sbr.rel (%p371) target = $region28
      $region27: #{sep_conv2d_forward.5} parent=23 // pred_region
        %s374 = smul.u32 2, %s17
      $region28: #{sep_conv2d_forward.5} parent=23 // pred_fallthru
        _
    $region24: #{sep_conv2d_forward.5} parent=5 // pred_fallthru
      _
    %p375 = scmp.le.s32.totalorder 2, %s7
    // Predicated region
    $region29: #{sep_conv2d_forward.5} parent=5 // pred_check
      %p376 = pneg %p375
    $region30: #{sep_conv2d_forward.5} parent=5 // pred_check_branch
      %378 = sbr.rel (%p376) target = $region32
    $region31: #{sep_conv2d_forward.5} parent=5 // pred_region
      %s379 = ssub.s32 %s7, 2
      // Predicated region
      $region33: #{sep_conv2d_forward.5} parent=31 // pred_check
        %p380 = pneg %p78
      $region34: #{sep_conv2d_forward.5} parent=31 // pred_check_branch
        %382 = sbr.rel (%p380) target = $region36
      $region35: #{sep_conv2d_forward.5} parent=31 // pred_region
        %s383 = smul.u32 2, %s19
        %p384 = scmp.lt.s32.totalorder %s18, 1
        %s385 = scalar_select %p384, %s18, 1
        %p386 = scmp.lt.s32.totalorder %s383, 1
        %s387 = scalar_select %p386, %s383, 1
        %s388 = smul.addr %s385, 36
        %s389 = sadd.s32 %s387, %s388
        %s390 = smul.addr %s389, 4
        %s391 = scalar_lea.vmem %s1, %s390
      $region36: #{sep_conv2d_forward.5} parent=31 // pred_fallthru
        _
    $region32: #{sep_conv2d_forward.5} parent=5 // pred_fallthru
      _
  $region6: #{sep_conv2d_forward.5} parent=0 // loop_footer
    %s11 = sadd.s32 1, %s7
  $region7: #{sep_conv2d_forward.5} parent=0 // loop_footer_branch
    %6 = sbr.rel target = $region3
  $region8: #{sep_conv2d_forward.5} parent=0 // loop_exit
    _

// kernel: sep_conv2d_forward.6
$region0: #{sep_conv2d_forward.6}
  #allocation0 [shape = 'u32[]', space=smem, size = 0x4, offset = 0x4, fixed_abs, tag = 'smem constant byte address 0x4 - core index']
  #allocation1 [shape = 'u32[144,128]{1,0:T(1,128)}', space=vmem, size = 0x12000, scoped, tag = 'internal scratch']
  %s0 = inlined_call_operand.vmem [shape: bf16[256,1024], index: 0, kind: input, shape index: {}]
  %s1 = inlined_call_operand.vmem [shape: bf16[1024,256], index: 1, kind: input, shape index: {}]
  %s2 = inlined_call_operand.vmem [shape: bf16[256,256], index: 2, kind: output, shape index: {}]
  %s3 = sld [smem:[#allocation0]]
  $region41: #{sep_conv2d_forward.6} parent=0
    _
  %s5 = ssub.s32 1, %s3
  %s6 = scalar_select 0, %s5, %s3
  loop: start=0, step=1, limit=4
  $region2: #{sep_conv2d_forward.6} parent=0 // loop_pre_header
    _
  $region3: #{sep_conv2d_forward.6} parent=0 // loop_header
    %s8 = sphi 0, %s12
    %p9 = scmp.ge.s32.totalorder %s8, 4
    %s15 = sphi 0, %s27
    %s16 = sphi 0, %s23
    %s17 = sphi 0, %s15
    %s18 = sphi 0, %s16
    %s19 = sphi 0, %s17
    %s20 = sphi 0, %s18
    %s30 = sphi 0, %s32
    %s33 = sphi 0, %s30
    %s34 = sphi 0, %s33
    %s50 = sphi 0, %s34
    %s56 = sphi 0, %s58
    %s59 = sphi 0, %s56
    %s60 = sphi 0, %s59
    %s76 = sphi 0, %s60
    %s84 = sphi 0, %s86
    %s87 = sphi 0, %s84
    %s88 = sphi 0, %s87
    %s104 = sphi 0, %s88
  $region4: #{sep_conv2d_forward.6} parent=0 // loop_header_branch
    %11 = sbr.rel (%p9) target = $region8
  $region5: #{sep_conv2d_forward.6} parent=0 // loop_body
    %s13 = ssub.s32 %s8, 1
    %s14 = ssub.s32 %s8, 2
    %s21 = sadd.s32 1, %s16
    %p22 = scmp.ge.s32.totalorder %s21, 1
    %s23 = scalar_select %p22, 0, %s21
    %s24 = sadd.s32 1, %s15
    %s25 = scalar_select %p22, %s24, %s15
    %p26 = scmp.ge.s32.totalorder %s25, 2
    %s27 = scalar_select %p26, 0, %s25
    %s28 = ssub.s32 %s15, %s27
    %p29 = scmp.eq.s32.totalorder %s28, 0
    %s31 = sadd.s32 %s30, 1
    %s32 = scalar_select %p29, %s30, %s31
    %p35 = pneg %p29
    %p36 = scmp.eq.s32.totalorder %s8, 1
    %p37 = por %p35, %p36
    %p38 = scmp.ne.s32.totalorder %s30, %s33
    %p39 = scmp.eq.s32.totalorder %s8, 0
    %p40 = por %p38, %p39
    %p41 = scmp.ne.s32.totalorder %s30, %s33
    %p42 = scmp.eq.s32.totalorder %s13, 1
    %p43 = por %p41, %p42
    %p44 = scmp.ne.s32.totalorder %s33, %s34
    %p45 = scmp.eq.s32.totalorder %s13, 0
    %p46 = por %p44, %p45
    %p47 = scmp.ne.s32.totalorder %s33, %s34
    %p48 = scmp.eq.s32.totalorder %s14, 1
    %p49 = por %p47, %p48
    %p51 = scmp.ne.s32.totalorder %s34, %s50
    %p52 = scmp.eq.s32.totalorder %s14, 0
    %p53 = por %p51, %p52
    %s54 = ssub.s32 %s16, %s23
    %p55 = scmp.eq.s32.totalorder %s54, 0
    %s57 = sadd.s32 %s56, 1
    %s58 = scalar_select %p55, %s56, %s57
    %p61 = pneg %p55
    %p62 = scmp.eq.s32.totalorder %s8, 1
    %p63 = por %p61, %p62
    %p64 = scmp.ne.s32.totalorder %s56, %s59
    %p65 = scmp.eq.s32.totalorder %s8, 0
    %p66 = por %p64, %p65
    %p67 = scmp.ne.s32.totalorder %s56, %s59
    %p68 = scmp.eq.s32.totalorder %s13, 1
    %p69 = por %p67, %p68
    %p70 = scmp.ne.s32.totalorder %s59, %s60
    %p71 = scmp.eq.s32.totalorder %s13, 0
    %p72 = por %p70, %p71
    %p73 = scmp.ne.s32.totalorder %s59, %s60
    %p74 = scmp.eq.s32.totalorder %s14, 1
    %p75 = por %p73, %p74
    %p77 = scmp.ne.s32.totalorder %s60, %s76
    %p78 = scmp.eq.s32.totalorder %s14, 0
    %p79 = por %p77, %p78
    %s80 = ssub.s32 %s15, %s27
    %s81 = ssub.s32 %s16, %s23
    %s82 = sor.u32 %s80, %s81
    %p83 = scmp.eq.s32.totalorder %s82, 0
    %s85 = sadd.s32 %s84, 1
    %s86 = scalar_select %p83, %s84, %s85
    %p89 = pneg %p83
    %p90 = scmp.eq.s32.totalorder %s8, 1
    %p91 = por %p89, %p90
    %p92 = scmp.ne.s32.totalorder %s84, %s87
    %p93 = scmp.eq.s32.totalorder %s8, 0
    %p94 = por %p92, %p93
    %p95 = scmp.ne.s32.totalorder %s84, %s87
    %p96 = scmp.eq.s32.totalorder %s13, 1
    %p97 = por %p95, %p96
    %p98 = scmp.ne.s32.totalorder %s87, %s88
    %p99 = scmp.eq.s32.totalorder %s13, 0
    %p100 = por %p98, %p99
    %p101 = scmp.ne.s32.totalorder %s87, %s88
    %p102 = scmp.eq.s32.totalorder %s14, 1
    %p103 = por %p101, %p102
    %p105 = scmp.ne.s32.totalorder %s88, %s104
    %p106 = scmp.eq.s32.totalorder %s14, 0
    %p107 = por %p105, %p106
    %p108 = scmp.le.s32.totalorder 1, %s8
    %p109 = scmp.lt.s32.totalorder %s8, 3
    %p110 = pnand %p108, %p109
    %p111 = pneg %p110
    // Predicated region
    $region9: #{sep_conv2d_forward.6} parent=5 // pred_check
      _
    $region10: #{sep_conv2d_forward.6} parent=5 // pred_check_branch
      %113 = sbr.rel (%p110) target = $region12
    $region11: #{sep_conv2d_forward.6} parent=5 // pred_region
      %s114 = ssub.s32 %s8, 1
      // Predicated region
      $region13: #{sep_conv2d_forward.6} parent=11 // pred_check
        %p115 = pneg %p72
      $region14: #{sep_conv2d_forward.6} parent=11 // pred_check_branch
        %117 = sbr.rel (%p115) target = $region16
      $region15: #{sep_conv2d_forward.6} parent=11 // pred_region
        %s118 = smul.u32 2, %s18
        %p119 = scmp.lt.s32.totalorder %s118, 1
        %s120 = scalar_select %p119, %s118, 1
        %s121 = smul.addr %s120, 4
        %s122 = scalar_lea.vmem %s1, %s121
        %s123 = smul.u32 2, %s18
      $region16: #{sep_conv2d_forward.6} parent=11 // pred_fallthru
        _
    $region12: #{sep_conv2d_forward.6} parent=5 // pred_fallthru
      _
    %p124 = scmp.lt.s32.totalorder %s8, 2
    // Predicated region
    $region17: #{sep_conv2d_forward.6} parent=5 // pred_check
      %p125 = pneg %p124
    $region18: #{sep_conv2d_forward.6} parent=5 // pred_check_branch
      %127 = sbr.rel (%p125) target = $region20
    $region19: #{sep_conv2d_forward.6} parent=5 // pred_region
      // Predicated region
      $region21: #{sep_conv2d_forward.6} parent=19 // pred_check
        %p128 = pneg %p40
      $region22: #{sep_conv2d_forward.6} parent=19 // pred_check_branch
        %130 = sbr.rel (%p128) target = $region24
      $region23: #{sep_conv2d_forward.6} parent=19 // pred_region
        %s131 = smul.u32 16, %s15
        %p132 = scmp.lt.s32.totalorder %s131, 31
        %s133 = scalar_select %p132, %s131, 31
        %s134 = smul.addr %s133, 8
        %s135 = smul.addr %s134, 4
        %s136 = scalar_lea.vmem %s0, %s135
        %s137 = smul.u32 16, %s15
      $region24: #{sep_conv2d_forward.6} parent=19 // pred_fallthru
        _
    $region20: #{sep_conv2d_forward.6} parent=5 // pred_fallthru
      _
    %p138 = scmp.le.s32.totalorder 1, %s8
    %p139 = scmp.lt.s32.totalorder %s8, 3
    %p140 = pnand %p138, %p139
    %p141 = pneg %p140
    // Predicated region
    $region25: #{sep_conv2d_forward.6} parent=5 // pred_check
      _
    $region26: #{sep_conv2d_forward.6} parent=5 // pred_check_branch
      %143 = sbr.rel (%p140) target = $region28
    $region27: #{sep_conv2d_forward.6} parent=5 // pred_region
      %s144 = ssub.s32 %s8, 1
      %s145 = smul.u32 16, %s17
      %p146 = scmp.lt.s32.totalorder %s145, 31
      %s147 = scalar_select %p146, %s145, 31
      %s148 = smul.addr %s147, 8
      %s149 = smul.addr %s148, 4
      %s150 = scalar_lea.vmem %s0, %s149
      %p151 = pneg %p46
      %p152 = pneg %p43
      %s153 = smul.u32 2, %s18
      %p154 = scmp.lt.s32.totalorder %s153, 1
      %s155 = scalar_select %p154, %s153, 1
      %s156 = smul.addr %s155, 4
      %s157 = scalar_lea.vmem %s1, %s156
      %p158 = pneg %p72
      %p159 = pneg %p69
      %p160 = pneg %p100
      %p161 = pneg %p97
      %s162 = smul.u32 16, %s17
      %s163 = smul.u32 2, %s18
      %p164 = scmp.lt.s32.totalorder %s162, 31
      %s165 = scalar_select %p164, %s162, 31
      %p166 = scmp.lt.s32.totalorder %s163, 1
      %s167 = scalar_select %p166, %s163, 1
      %s168 = smul.addr %s165, 2
      %s169 = sadd.s32 %s167, %s168
      %s170 = smul.addr %s169, 4
      %s171 = scalar_lea.vmem %s2, %s170
      %s172 = smul.u32 16, %s17
      %p173 = scmp.lt.s32.totalorder %s172, 31
      %s174 = scalar_select %p173, %s172, 31
      %s175 = smul.addr %s174, 8
      %s176 = smul.addr %s175, 4
      %s177 = scalar_lea.vmem %s0, %s176
      %s178 = smul.u32 16, %s17
      %s179 = smul.u32 2, %s18
      %p180 = scmp.lt.s32.totalorder %s179, 1
      %s181 = scalar_select %p180, %s179, 1
      %s182 = smul.addr %s181, 4
      %s183 = scalar_lea.vmem %s1, %s182
      %s184 = smul.u32 2, %s18
      %s185 = smul.u32 16, %s17
      %s186 = smul.u32 2, %s18
      %p187 = scmp.lt.s32.totalorder %s185, 31
      %s188 = scalar_select %p187, %s185, 31
      %p189 = scmp.lt.s32.totalorder %s186, 1
      %s190 = scalar_select %p189, %s186, 1
      %s191 = smul.addr %s188, 2
      %s192 = sadd.s32 %s190, %s191
      %s193 = smul.addr %s192, 4
      %s194 = scalar_lea.vmem %s2, %s193
      %s195 = smul.u32 16, %s17
      %s196 = smul.u32 2, %s18
      %v197 = vld [vmem:[%s177] sm:$0xff]
      %v198 = vld [vmem:[%s177 + $0x8] sm:$0xff]
      %v199 = vld [vmem:[%s177 + $0x10] sm:$0xff]
      %v200 = vld [vmem:[%s177 + $0x18] sm:$0xff]
      %v201 = vld [vmem:[%s177 + $0x20] sm:$0xff]
      %v202 = vld [vmem:[%s177 + $0x28] sm:$0xff]
      %v203 = vld [vmem:[%s177 + $0x30] sm:$0xff]
      %v204 = vld [vmem:[%s177 + $0x38] sm:$0xff]
      %v205 = vld [vmem:[%s177 + $0x40] sm:$0xff]
      %v206 = vld [vmem:[%s177 + $0x48] sm:$0xff]
      %v207 = vld [vmem:[%s177 + $0x50] sm:$0xff]
      %v208 = vld [vmem:[%s177 + $0x58] sm:$0xff]
      %v209 = vld [vmem:[%s177 + $0x60] sm:$0xff]
      %v210 = vld [vmem:[%s177 + $0x68] sm:$0xff]
      %v211 = vld [vmem:[%s177 + $0x70] sm:$0xff]
      %v212 = vld [vmem:[%s177 + $0x78] sm:$0xff]
      %v213 = vld [vmem:[%s177 + $0x80] sm:$0xff]
      %v214 = vld [vmem:[%s177 + $0x88] sm:$0xff]
      %v215 = vld [vmem:[%s177 + $0x90] sm:$0xff]
      %v216 = vld [vmem:[%s177 + $0x98] sm:$0xff]
      %v217 = vld [vmem:[%s177 + $0xa0] sm:$0xff]
      %v218 = vld [vmem:[%s177 + $0xa8] sm:$0xff]
      %v219 = vld [vmem:[%s177 + $0xb0] sm:$0xff]
      %v220 = vld [vmem:[%s177 + $0xb8] sm:$0xff]
      %v221 = vld [vmem:[%s177 + $0xc0] sm:$0xff]
      %v222 = vld [vmem:[%s177 + $0xc8] sm:$0xff]
      %v223 = vld [vmem:[%s177 + $0xd0] sm:$0xff]
      %v224 = vld [vmem:[%s177 + $0xd8] sm:$0xff]
      %v225 = vld [vmem:[%s177 + $0xe0] sm:$0xff]
      %v226 = vld [vmem:[%s177 + $0xe8] sm:$0xff]
      %v227 = vld [vmem:[%s177 + $0xf0] sm:$0xff]
      %v228 = vld [vmem:[%s177 + $0xf8] sm:$0xff]
      %v229 = vld [vmem:[%s177 + $0x100] sm:$0xff]
      %v230 = vld [vmem:[%s177 + $0x108] sm:$0xff]
      %v231 = vld [vmem:[%s177 + $0x110] sm:$0xff]
      %v232 = vld [vmem:[%s177 + $0x118] sm:$0xff]
      %v233 = vld [vmem:[%s177 + $0x120] sm:$0xff]
      %v234 = vld [vmem:[%s177 + $0x128] sm:$0xff]
      %v235 = vld [vmem:[%s177 + $0x130] sm:$0xff]
      %v236 = vld [vmem:[%s177 + $0x138] sm:$0xff]
      %v237 = vld [vmem:[%s177 + $0x140] sm:$0xff]
      %v238 = vld [vmem:[%s177 + $0x148] sm:$0xff]
      %v239 = vld [vmem:[%s177 + $0x150] sm:$0xff]
      %v240 = vld [vmem:[%s177 + $0x158] sm:$0xff]
      %v241 = vld [vmem:[%s177 + $0x160] sm:$0xff]
      %v242 = vld [vmem:[%s177 + $0x168] sm:$0xff]
      %v243 = vld [vmem:[%s177 + $0x170] sm:$0xff]
      %v244 = vld [vmem:[%s177 + $0x178] sm:$0xff]
      %v245 = vld [vmem:[%s177 + $0x180] sm:$0xff]
      %v246 = vld [vmem:[%s177 + $0x188] sm:$0xff]
      %v247 = vld [vmem:[%s177 + $0x190] sm:$0xff]
      %v248 = vld [vmem:[%s177 + $0x198] sm:$0xff]
      %v249 = vld [vmem:[%s177 + $0x1a0] sm:$0xff]
      %v250 = vld [vmem:[%s177 + $0x1a8] sm:$0xff]
      %v251 = vld [vmem:[%s177 + $0x1b0] sm:$0xff]
      %v252 = vld [vmem:[%s177 + $0x1b8] sm:$0xff]
      %v253 = vld [vmem:[%s177 + $0x1c0] sm:$0xff]
      %v254 = vld [vmem:[%s177 + $0x1c8] sm:$0xff]
      %v255 = vld [vmem:[%s177 + $0x1d0] sm:$0xff]
      %v256 = vld [vmem:[%s177 + $0x1d8] sm:$0xff]
      %v257 = vld [vmem:[%s177 + $0x1e0] sm:$0xff]
      %v258 = vld [vmem:[%s177 + $0x1e8] sm:$0xff]
      %v259 = vld [vmem:[%s177 + $0x1f0] sm:$0xff]
      %v260 = vld [vmem:[%s177 + $0x1f8] sm:$0xff]
      %v261 = vld [vmem:[%s183] sm:$0xff]
      %v262 = vld [vmem:[%s183 + $0x8] sm:$0xff]
      %v263 = vld [vmem:[%s183 + $0x10] sm:$0xff]
      %v264 = vld [vmem:[%s183 + $0x18] sm:$0xff]
      %v265 = vld [vmem:[%s183 + $0x20] sm:$0xff]
      %v266 = vld [vmem:[%s183 + $0x28] sm:$0xff]
      %v267 = vld [vmem:[%s183 + $0x30] sm:$0xff]
      %v268 = vld [vmem:[%s183 + $0x38] sm:$0xff]
      %v269 = vld [vmem:[%s183 + $0x40] sm:$0xff]
      %v270 = vld [vmem:[%s183 + $0x48] sm:$0xff]
      %v271 = vld [vmem:[%s183 + $0x50] sm:$0xff]
      %v272 = vld [vmem:[%s183 + $0x58] sm:$0xff]
      %v273 = vld [vmem:[%s183 + $0x60] sm:$0xff]
      %v274 = vld [vmem:[%s183 + $0x68] sm:$0xff]
      %v275 = vld [vmem:[%s183 + $0x70] sm:$0xff]
      %v276 = vld [vmem:[%s183 + $0x78] sm:$0xff]
      %v277 = vld [vmem:[%s183 + $0x80] sm:$0xff]
      %v278 = vld [vmem:[%s183 + $0x88] sm:$0xff]
      %v279 = vld [vmem:[%s183 + $0x90] sm:$0xff]
      %v280 = vld [vmem:[%s183 + $0x98] sm:$0xff]
      %v281 = vld [vmem:[%s183 + $0xa0] sm:$0xff]
      %v282 = vld [vmem:[%s183 + $0xa8] sm:$0xff]
      %v283 = vld [vmem:[%s183 + $0xb0] sm:$0xff]
      %v284 = vld [vmem:[%s183 + $0xb8] sm:$0xff]
      %v285 = vld [vmem:[%s183 + $0xc0] sm:$0xff]
      %v286 = vld [vmem:[%s183 + $0xc8] sm:$0xff]
      %v287 = vld [vmem:[%s183 + $0xd0] sm:$0xff]
      %v288 = vld [vmem:[%s183 + $0xd8] sm:$0xff]
      %v289 = vld [vmem:[%s183 + $0xe0] sm:$0xff]
      %v290 = vld [vmem:[%s183 + $0xe8] sm:$0xff]
      %v291 = vld [vmem:[%s183 + $0xf0] sm:$0xff]
      %v292 = vld [vmem:[%s183 + $0xf8] sm:$0xff]
      %v293 = vld [vmem:[%s183 + $0x100] sm:$0xff]
      %v294 = vld [vmem:[%s183 + $0x108] sm:$0xff]
      %v295 = vld [vmem:[%s183 + $0x110] sm:$0xff]
      %v296 = vld [vmem:[%s183 + $0x118] sm:$0xff]
      %v297 = vld [vmem:[%s183 + $0x120] sm:$0xff]
      %v298 = vld [vmem:[%s183 + $0x128] sm:$0xff]
      %v299 = vld [vmem:[%s183 + $0x130] sm:$0xff]
      %v300 = vld [vmem:[%s183 + $0x138] sm:$0xff]
      %v301 = vld [vmem:[%s183 + $0x140] sm:$0xff]
      %v302 = vld [vmem:[%s183 + $0x148] sm:$0xff]
      %v303 = vld [vmem:[%s183 + $0x150] sm:$0xff]
      %v304 = vld [vmem:[%s183 + $0x158] sm:$0xff]
      %v305 = vld [vmem:[%s183 + $0x160] sm:$0xff]
      %v306 = vld [vmem:[%s183 + $0x168] sm:$0xff]
      %v307 = vld [vmem:[%s183 + $0x170] sm:$0xff]
      %v308 = vld [vmem:[%s183 + $0x178] sm:$0xff]
      %v309 = vld [vmem:[%s183 + $0x180] sm:$0xff]
      %v310 = vld [vmem:[%s183 + $0x188] sm:$0xff]
      %v311 = vld [vmem:[%s183 + $0x190] sm:$0xff]
      %v312 = vld [vmem:[%s183 + $0x198] sm:$0xff]
      %v313 = vld [vmem:[%s183 + $0x1a0] sm:$0xff]
      %v314 = vld [vmem:[%s183 + $0x1a8] sm:$0xff]
      %v315 = vld [vmem:[%s183 + $0x1b0] sm:$0xff]
      %v316 = vld [vmem:[%s183 + $0x1b8] sm:$0xff]
      %v317 = vld [vmem:[%s183 + $0x1c0] sm:$0xff]
      %v318 = vld [vmem:[%s183 + $0x1c8] sm:$0xff]
      %v319 = vld [vmem:[%s183 + $0x1d0] sm:$0xff]
      %v320 = vld [vmem:[%s183 + $0x1d8] sm:$0xff]
      %v321 = vld [vmem:[%s183 + $0x1e0] sm:$0xff]
      %v322 = vld [vmem:[%s183 + $0x1e8] sm:$0xff]
      %v323 = vld [vmem:[%s183 + $0x1f0] sm:$0xff]
      %v324 = vld [vmem:[%s183 + $0x1f8] sm:$0xff]
      %v325 = vld [vmem:[%s183 + $0x200] sm:$0xff]
      %v326 = vld [vmem:[%s183 + $0x208] sm:$0xff]
      %v327 = vld [vmem:[%s183 + $0x210] sm:$0xff]
      %v328 = vld [vmem:[%s183 + $0x218] sm:$0xff]
      %v329 = vld [vmem:[%s183 + $0x220] sm:$0xff]
      %v330 = vld [vmem:[%s183 + $0x228] sm:$0xff]
      %v331 = vld [vmem:[%s183 + $0x230] sm:$0xff]
      %v332 = vld [vmem:[%s183 + $0x238] sm:$0xff]
      %v333 = vld [vmem:[%s183 + $0x240] sm:$0xff]
      %v334 = vld [vmem:[%s183 + $0x248] sm:$0xff]
      %v335 = vld [vmem:[%s183 + $0x250] sm:$0xff]
      %v336 = vld [vmem:[%s183 + $0x258] sm:$0xff]
      %v337 = vld [vmem:[%s183 + $0x260] sm:$0xff]
      %v338 = vld [vmem:[%s183 + $0x268] sm:$0xff]
      %v339 = vld [vmem:[%s183 + $0x270] sm:$0xff]
      %v340 = vld [vmem:[%s183 + $0x278] sm:$0xff]
      %v341 = vld [vmem:[%s183 + $0x280] sm:$0xff]
      %v342 = vld [vmem:[%s183 + $0x288] sm:$0xff]
      %v343 = vld [vmem:[%s183 + $0x290] sm:$0xff]
      %v344 = vld [vmem:[%s183 + $0x298] sm:$0xff]
      %v345 = vld [vmem:[%s183 + $0x2a0] sm:$0xff]
      %v346 = vld [vmem:[%s183 + $0x2a8] sm:$0xff]
      %v347 = vld [vmem:[%s183 + $0x2b0] sm:$0xff]
      %v348 = vld [vmem:[%s183 + $0x2b8] sm:$0xff]
      %v349 = vld [vmem:[%s183 + $0x2c0] sm:$0xff]
      %v350 = vld [vmem:[%s183 + $0x2c8] sm:$0xff]
      %v351 = vld [vmem:[%s183 + $0x2d0] sm:$0xff]
      %v352 = vld [vmem:[%s183 + $0x2d8] sm:$0xff]
      %v353 = vld [vmem:[%s183 + $0x2e0] sm:$0xff]
      %v354 = vld [vmem:[%s183 + $0x2e8] sm:$0xff]
      %v355 = vld [vmem:[%s183 + $0x2f0] sm:$0xff]
      %v356 = vld [vmem:[%s183 + $0x2f8] sm:$0xff]
      %v357 = vld [vmem:[%s183 + $0x300] sm:$0xff]
      %v358 = vld [vmem:[%s183 + $0x308] sm:$0xff]
      %v359 = vld [vmem:[%s183 + $0x310] sm:$0xff]
      %v360 = vld [vmem:[%s183 + $0x318] sm:$0xff]
      %v361 = vld [vmem:[%s183 + $0x320] sm:$0xff]
      %v362 = vld [vmem:[%s183 + $0x328] sm:$0xff]
      %v363 = vld [vmem:[%s183 + $0x330] sm:$0xff]
      %v364 = vld [vmem:[%s183 + $0x338] sm:$0xff]
      %v365 = vld [vmem:[%s183 + $0x340] sm:$0xff]
      %v366 = vld [vmem:[%s183 + $0x348] sm:$0xff]
      %v367 = vld [vmem:[%s183 + $0x350] sm:$0xff]
      %v368 = vld [vmem:[%s183 + $0x358] sm:$0xff]
      %v369 = vld [vmem:[%s183 + $0x360] sm:$0xff]
      %v370 = vld [vmem:[%s183 + $0x368] sm:$0xff]
      %v371 = vld [vmem:[%s183 + $0x370] sm:$0xff]
      %v372 = vld [vmem:[%s183 + $0x378] sm:$0xff]
      %v373 = vld [vmem:[%s183 + $0x380] sm:$0xff]
      %v374 = vld [vmem:[%s183 + $0x388] sm:$0xff]
      %v375 = vld [vmem:[%s183 + $0x390] sm:$0xff]
      %v376 = vld [vmem:[%s183 + $0x398] sm:$0xff]
      %v377 = vld [vmem:[%s183 + $0x3a0] sm:$0xff]
      %v378 = vld [vmem:[%s183 + $0x3a8] sm:$0xff]
      %v379 = vld [vmem:[%s183 + $0x3b0] sm:$0xff]
      %v380 = vld [vmem:[%s183 + $0x3b8] sm:$0xff]
      %v381 = vld [vmem:[%s183 + $0x3c0] sm:$0xff]
      %v382 = vld [vmem:[%s183 + $0x3c8] sm:$0xff]
      %v383 = vld [vmem:[%s183 + $0x3d0] sm:$0xff]
      %v384 = vld [vmem:[%s183 + $0x3d8] sm:$0xff]
      %v385 = vld [vmem:[%s183 + $0x3e0] sm:$0xff]
      %v386 = vld [vmem:[%s183 + $0x3e8] sm:$0xff]
      %v387 = vld [vmem:[%s183 + $0x3f0] sm:$0xff]
      %v388 = vld [vmem:[%s183 + $0x3f8] sm:$0xff]
      %v453 = vunpack.c.l.b16 %v197
      %v454 = vunpack.c.h.b16 %v197
      %v455 = vunpack.c.l.b16 %v198
      %v456 = vunpack.c.h.b16 %v198
      %v457 = vunpack.c.l.b16 %v199
      %v458 = vunpack.c.h.b16 %v199
      %v459 = vunpack.c.l.b16 %v200
      %v460 = vunpack.c.h.b16 %v200
      %v461 = vunpack.c.l.b16 %v201
      %v462 = vunpack.c.h.b16 %v201
      %v463 = vunpack.c.l.b16 %v202
      %v464 = vunpack.c.h.b16 %v202
      %v465 = vunpack.c.l.b16 %v203
      %v466 = vunpack.c.h.b16 %v203
      %v467 = vunpack.c.l.b16 %v204
      %v468 = vunpack.c.h.b16 %v204
      %v469 = vunpack.c.l.b16 %v205
      %v470 = vunpack.c.h.b16 %v205
      %v471 = vunpack.c.l.b16 %v206
      %v472 = vunpack.c.h.b16 %v206
      %v473 = vunpack.c.l.b16 %v207
      %v474 = vunpack.c.h.b16 %v207
      %v475 = vunpack.c.l.b16 %v208
      %v476 = vunpack.c.h.b16 %v208
      %v477 = vunpack.c.l.b16 %v209
      %v478 = vunpack.c.h.b16 %v209
      %v479 = vunpack.c.l.b16 %v210
      %v480 = vunpack.c.h.b16 %v210
      %v481 = vunpack.c.l.b16 %v211
      %v482 = vunpack.c.h.b16 %v211
      %v483 = vunpack.c.l.b16 %v212
      %v484 = vunpack.c.h.b16 %v212
      %v485 = vunpack.c.l.b16 %v213
      %v486 = vunpack.c.h.b16 %v213
      %v487 = vunpack.c.l.b16 %v214
      %v488 = vunpack.c.h.b16 %v214
      %v489 = vunpack.c.l.b16 %v215
      %v490 = vunpack.c.h.b16 %v215
      %v491 = vunpack.c.l.b16 %v216
      %v492 = vunpack.c.h.b16 %v216
      %v493 = vunpack.c.l.b16 %v217
      %v494 = vunpack.c.h.b16 %v217
      %v495 = vunpack.c.l.b16 %v218
      %v496 = vunpack.c.h.b16 %v218
      %v497 = vunpack.c.l.b16 %v219
      %v498 = vunpack.c.h.b16 %v219
      %v499 = vunpack.c.l.b16 %v220
      %v500 = vunpack.c.h.b16 %v220
      %v501 = vunpack.c.l.b16 %v221
      %v502 = vunpack.c.h.b16 %v221
      %v503 = vunpack.c.l.b16 %v222
      %v504 = vunpack.c.h.b16 %v222
      %v505 = vunpack.c.l.b16 %v223
      %v506 = vunpack.c.h.b16 %v223
      %v507 = vunpack.c.l.b16 %v224
      %v508 = vunpack.c.h.b16 %v224
      %v509 = vunpack.c.l.b16 %v225
      %v510 = vunpack.c.h.b16 %v225
      %v511 = vunpack.c.l.b16 %v226
      %v512 = vunpack.c.h.b16 %v226
      %v513 = vunpack.c.l.b16 %v227
      %v514 = vunpack.c.h.b16 %v227
      %v515 = vunpack.c.l.b16 %v228
      %v516 = vunpack.c.h.b16 %v228
      %v517 = vunpack.c.l.b16 %v229
      %v518 = vunpack.c.h.b16 %v229
      %v519 = vunpack.c.l.b16 %v230
      %v520 = vunpack.c.h.b16 %v230
      %v521 = vunpack.c.l.b16 %v231
      %v522 = vunpack.c.h.b16 %v231
      %v523 = vunpack.c.l.b16 %v232
      %v524 = vunpack.c.h.b16 %v232
      %v525 = vunpack.c.l.b16 %v233
      %v526 = vunpack.c.h.b16 %v233
      %v527 = vunpack.c.l.b16 %v234
      %v528 = vunpack.c.h.b16 %v234
      %v529 = vunpack.c.l.b16 %v235
      %v530 = vunpack.c.h.b16 %v235
      %v531 = vunpack.c.l.b16 %v236
      %v532 = vunpack.c.h.b16 %v236
      %v533 = vunpack.c.l.b16 %v237
      %v534 = vunpack.c.h.b16 %v237
      %v535 = vunpack.c.l.b16 %v238
      %v536 = vunpack.c.h.b16 %v238
      %v537 = vunpack.c.l.b16 %v239
      %v538 = vunpack.c.h.b16 %v239
      %v539 = vunpack.c.l.b16 %v240
      %v540 = vunpack.c.h.b16 %v240
      %v541 = vunpack.c.l.b16 %v241
      %v542 = vunpack.c.h.b16 %v241
      %v543 = vunpack.c.l.b16 %v242
      %v544 = vunpack.c.h.b16 %v242
      %v545 = vunpack.c.l.b16 %v243
      %v546 = vunpack.c.h.b16 %v243
      %v547 = vunpack.c.l.b16 %v244
      %v548 = vunpack.c.h.b16 %v244
      %v549 = vunpack.c.l.b16 %v245
      %v550 = vunpack.c.h.b16 %v245
      %v551 = vunpack.c.l.b16 %v246
      %v552 = vunpack.c.h.b16 %v246
      %v553 = vunpack.c.l.b16 %v247
      %v554 = vunpack.c.h.b16 %v247
      %v555 = vunpack.c.l.b16 %v248
      %v556 = vunpack.c.h.b16 %v248
      %v557 = vunpack.c.l.b16 %v249
      %v558 = vunpack.c.h.b16 %v249
      %v559 = vunpack.c.l.b16 %v250
      %v560 = vunpack.c.h.b16 %v250
      %v561 = vunpack.c.l.b16 %v251
      %v562 = vunpack.c.h.b16 %v251
      %v563 = vunpack.c.l.b16 %v252
      %v564 = vunpack.c.h.b16 %v252
      %v565 = vunpack.c.l.b16 %v253
      %v566 = vunpack.c.h.b16 %v253
      %v567 = vunpack.c.l.b16 %v254
      %v568 = vunpack.c.h.b16 %v254
      %v569 = vunpack.c.l.b16 %v255
      %v570 = vunpack.c.h.b16 %v255
      %v571 = vunpack.c.l.b16 %v256
      %v572 = vunpack.c.h.b16 %v256
      %v573 = vunpack.c.l.b16 %v257
      %v574 = vunpack.c.h.b16 %v257
      %v575 = vunpack.c.l.b16 %v258
      %v576 = vunpack.c.h.b16 %v258
      %v577 = vunpack.c.l.b16 %v259
      %v578 = vunpack.c.h.b16 %v259
      %v579 = vunpack.c.l.b16 %v260
      %v580 = vunpack.c.h.b16 %v260
      %v581 = vpack.c.b16 %v461, %v453
      %v582 = vpack.c.b16 %v462, %v454
      %v583 = vpack.c.b16 %v463, %v455
      %v584 = vpack.c.b16 %v464, %v456
      %v585 = vpack.c.b16 %v465, %v457
      %v586 = vpack.c.b16 %v466, %v458
      %v587 = vpack.c.b16 %v467, %v459
      %v588 = vpack.c.b16 %v468, %v460
      %v589 = vpack.c.b16 %v477, %v469
      %v590 = vpack.c.b16 %v478, %v470
      %v591 = vpack.c.b16 %v479, %v471
      %v592 = vpack.c.b16 %v480, %v472
      %v593 = vpack.c.b16 %v481, %v473
      %v594 = vpack.c.b16 %v482, %v474
      %v595 = vpack.c.b16 %v483, %v475
      %v596 = vpack.c.b16 %v484, %v476
      %v597 = vpack.c.b16 %v493, %v485
      %v598 = vpack.c.b16 %v494, %v486
      %v599 = vpack.c.b16 %v495, %v487
      %v600 = vpack.c.b16 %v496, %v488
      %v601 = vpack.c.b16 %v497, %v489
      %v602 = vpack.c.b16 %v498, %v490
      %v603 = vpack.c.b16 %v499, %v491
      %v604 = vpack.c.b16 %v500, %v492
      %v605 = vpack.c.b16 %v509, %v501
      %v606 = vpack.c.b16 %v510, %v502
      %v607 = vpack.c.b16 %v511, %v503
      %v608 = vpack.c.b16 %v512, %v504
      %v609 = vpack.c.b16 %v513, %v505
      %v610 = vpack.c.b16 %v514, %v506
      %v611 = vpack.c.b16 %v515, %v507
      %v612 = vpack.c.b16 %v516, %v508
      %v613 = vpack.c.b16 %v525, %v517
      %v614 = vpack.c.b16 %v526, %v518
      %v615 = vpack.c.b16 %v527, %v519
      %v616 = vpack.c.b16 %v528, %v520
      %v617 = vpack.c.b16 %v529, %v521
      %v618 = vpack.c.b16 %v530, %v522
      %v619 = vpack.c.b16 %v531, %v523
      %v620 = vpack.c.b16 %v532, %v524
      %v621 = vpack.c.b16 %v541, %v533
      %v622 = vpack.c.b16 %v542, %v534
      %v623 = vpack.c.b16 %v543, %v535
      %v624 = vpack.c.b16 %v544, %v536
      %v625 = vpack.c.b16 %v545, %v537
      %v626 = vpack.c.b16 %v546, %v538
      %v627 = vpack.c.b16 %v547, %v539
      %v628 = vpack.c.b16 %v548, %v540
      %v629 = vpack.c.b16 %v557, %v549
      %v630 = vpack.c.b16 %v558, %v550
      %v631 = vpack.c.b16 %v559, %v551
      %v632 = vpack.c.b16 %v560, %v552
      %v633 = vpack.c.b16 %v561, %v553
      %v634 = vpack.c.b16 %v562, %v554
      %v635 = vpack.c.b16 %v563, %v555
      %v636 = vpack.c.b16 %v564, %v556
      %v637 = vpack.c.b16 %v573, %v565
      %v638 = vpack.c.b16 %v574, %v566
      %v639 = vpack.c.b16 %v575, %v567
      %v640 = vpack.c.b16 %v576, %v568
      %v641 = vpack.c.b16 %v577, %v569
      %v642 = vpack.c.b16 %v578, %v570
      %v643 = vpack.c.b16 %v579, %v571
      %v644 = vpack.c.b16 %v580, %v572
      %v837 = vunpack.c.l.b16 %v261
      %v838 = vunpack.c.h.b16 %v261
      %v839 = vunpack.c.l.b16 %v262
      %v840 = vunpack.c.h.b16 %v262
      %v841 = vunpack.c.l.b16 %v263
      %v842 = vunpack.c.h.b16 %v263
      %v843 = vunpack.c.l.b16 %v264
      %v844 = vunpack.c.h.b16 %v264
      %v845 = vunpack.c.l.b16 %v265
      %v846 = vunpack.c.h.b16 %v265
      %v847 = vunpack.c.l.b16 %v266
      %v848 = vunpack.c.h.b16 %v266
      %v849 = vunpack.c.l.b16 %v267
      %v850 = vunpack.c.h.b16 %v267
      %v851 = vunpack.c.l.b16 %v268
      %v852 = vunpack.c.h.b16 %v268
      %v853 = vunpack.c.l.b16 %v269
      %v854 = vunpack.c.h.b16 %v269
      %v855 = vunpack.c.l.b16 %v270
      %v856 = vunpack.c.h.b16 %v270
      %v857 = vunpack.c.l.b16 %v271
      %v858 = vunpack.c.h.b16 %v271
      %v859 = vunpack.c.l.b16 %v272
      %v860 = vunpack.c.h.b16 %v272
      %v861 = vunpack.c.l.b16 %v273
      %v862 = vunpack.c.h.b16 %v273
      %v863 = vunpack.c.l.b16 %v274
      %v864 = vunpack.c.h.b16 %v274
      %v865 = vunpack.c.l.b16 %v275
      %v866 = vunpack.c.h.b16 %v275
      %v867 = vunpack.c.l.b16 %v276
      %v868 = vunpack.c.h.b16 %v276
      %v869 = vunpack.c.l.b16 %v277
      %v870 = vunpack.c.h.b16 %v277
      %v871 = vunpack.c.l.b16 %v278
      %v872 = vunpack.c.h.b16 %v278
      %v873 = vunpack.c.l.b16 %v279
      %v874 = vunpack.c.h.b16 %v279
      %v875 = vunpack.c.l.b16 %v280
      %v876 = vunpack.c.h.b16 %v280
      %v877 = vunpack.c.l.b16 %v281
      %v878 = vunpack.c.h.b16 %v281
      %v879 = vunpack.c.l.b16 %v282
      %v880 = vunpack.c.h.b16 %v282
      %v881 = vunpack.c.l.b16 %v283
      %v882 = vunpack.c.h.b16 %v283
      %v883 = vunpack.c.l.b16 %v284
      %v884 = vunpack.c.h.b16 %v284
      %v885 = vunpack.c.l.b16 %v285
      %v886 = vunpack.c.h.b16 %v285
      %v887 = vunpack.c.l.b16 %v286
      %v888 = vunpack.c.h.b16 %v286
      %v889 = vunpack.c.l.b16 %v287
      %v890 = vunpack.c.h.b16 %v287
      %v891 = vunpack.c.l.b16 %v288
      %v892 = vunpack.c.h.b16 %v288
      %v893 = vunpack.c.l.b16 %v289
      %v894 = vunpack.c.h.b16 %v289
      %v895 = vunpack.c.l.b16 %v290
      %v896 = vunpack.c.h.b16 %v290
      %v897 = vunpack.c.l.b16 %v291
      %v898 = vunpack.c.h.b16 %v291
      %v899 = vunpack.c.l.b16 %v292
      %v900 = vunpack.c.h.b16 %v292
      %v901 = vunpack.c.l.b16 %v293
      %v902 = vunpack.c.h.b16 %v293
      %v903 = vunpack.c.l.b16 %v294
      %v904 = vunpack.c.h.b16 %v294
      %v905 = vunpack.c.l.b16 %v295
      %v906 = vunpack.c.h.b16 %v295
      %v907 = vunpack.c.l.b16 %v296
      %v908 = vunpack.c.h.b16 %v296
      %v909 = vunpack.c.l.b16 %v297
      %v910 = vunpack.c.h.b16 %v297
      %v911 = vunpack.c.l.b16 %v298
      %v912 = vunpack.c.h.b16 %v298
      %v913 = vunpack.c.l.b16 %v299
      %v914 = vunpack.c.h.b16 %v299
      %v915 = vunpack.c.l.b16 %v300
      %v916 = vunpack.c.h.b16 %v300
      %v917 = vunpack.c.l.b16 %v301
      %v918 = vunpack.c.h.b16 %v301
      %v919 = vunpack.c.l.b16 %v302
      %v920 = vunpack.c.h.b16 %v302
      %v921 = vunpack.c.l.b16 %v303
      %v922 = vunpack.c.h.b16 %v303
      %v923 = vunpack.c.l.b16 %v304
      %v924 = vunpack.c.h.b16 %v304
      %v925 = vunpack.c.l.b16 %v305
      %v926 = vunpack.c.h.b16 %v305
      %v927 = vunpack.c.l.b16 %v306
      %v928 = vunpack.c.h.b16 %v306
      %v929 = vunpack.c.l.b16 %v307
      %v930 = vunpack.c.h.b16 %v307
      %v931 = vunpack.c.l.b16 %v308
      %v932 = vunpack.c.h.b16 %v308
      %v933 = vunpack.c.l.b16 %v309
      %v934 = vunpack.c.h.b16 %v309
      %v935 = vunpack.c.l.b16 %v310
      %v936 = vunpack.c.h.b16 %v310
      %v937 = vunpack.c.l.b16 %v311
      %v938 = vunpack.c.h.b16 %v311
      %v939 = vunpack.c.l.b16 %v312
      %v940 = vunpack.c.h.b16 %v312
      %v941 = vunpack.c.l.b16 %v313
      %v942 = vunpack.c.h.b16 %v313
      %v943 = vunpack.c.l.b16 %v314
      %v944 = vunpack.c.h.b16 %v314
      %v945 = vunpack.c.l.b16 %v315
      %v946 = vunpack.c.h.b16 %v315
      %v947 = vunpack.c.l.b16 %v316
      %v948 = vunpack.c.h.b16 %v316
      %v949 = vunpack.c.l.b16 %v317
      %v950 = vunpack.c.h.b16 %v317
      %v951 = vunpack.c.l.b16 %v318
      %v952 = vunpack.c.h.b16 %v318
      %v953 = vunpack.c.l.b16 %v319
      %v954 = vunpack.c.h.b16 %v319
      %v955 = vunpack.c.l.b16 %v320
      %v956 = vunpack.c.h.b16 %v320
      %v957 = vunpack.c.l.b16 %v321
      %v958 = vunpack.c.h.b16 %v321
      %v959 = vunpack.c.l.b16 %v322
      %v960 = vunpack.c.h.b16 %v322
      %v961 = vunpack.c.l.b16 %v323
      %v962 = vunpack.c.h.b16 %v323
      %v963 = vunpack.c.l.b16 %v324
      %v964 = vunpack.c.h.b16 %v324
      %v965 = vunpack.c.l.b16 %v325
      %v966 = vunpack.c.h.b16 %v325
      %v967 = vunpack.c.l.b16 %v326
      %v968 = vunpack.c.h.b16 %v326
      %v969 = vunpack.c.l.b16 %v327
      %v970 = vunpack.c.h.b16 %v327
      %v971 = vunpack.c.l.b16 %v328
      %v972 = vunpack.c.h.b16 %v328
      %v973 = vunpack.c.l.b16 %v329
      %v974 = vunpack.c.h.b16 %v329
      %v975 = vunpack.c.l.b16 %v330
      %v976 = vunpack.c.h.b16 %v330
      %v977 = vunpack.c.l.b16 %v331
      %v978 = vunpack.c.h.b16 %v331
      %v979 = vunpack.c.l.b16 %v332
      %v980 = vunpack.c.h.b16 %v332
      %v981 = vunpack.c.l.b16 %v333
      %v982 = vunpack.c.h.b16 %v333
      %v983 = vunpack.c.l.b16 %v334
      %v984 = vunpack.c.h.b16 %v334
      %v985 = vunpack.c.l.b16 %v335
      %v986 = vunpack.c.h.b16 %v335
      %v987 = vunpack.c.l.b16 %v336
      %v988 = vunpack.c.h.b16 %v336
      %v989 = vunpack.c.l.b16 %v337
      %v990 = vunpack.c.h.b16 %v337
      %v991 = vunpack.c.l.b16 %v338
      %v992 = vunpack.c.h.b16 %v338
      %v993 = vunpack.c.l.b16 %v339
      %v994 = vunpack.c.h.b16 %v339
      %v995 = vunpack.c.l.b16 %v340
      %v996 = vunpack.c.h.b16 %v340
      %v997 = vunpack.c.l.b16 %v341
      %v998 = vunpack.c.h.b16 %v341
      %v999 = vunpack.c.l.b16 %v342
      %v1000 = vunpack.c.h.b16 %v342
      %v1001 = vunpack.c.l.b16 %v343
      %v1002 = vunpack.c.h.b16 %v343
      %v1003 = vunpack.c.l.b16 %v344
      %v1004 = vunpack.c.h.b16 %v344
      %v1005 = vunpack.c.l.b16 %v345
      %v1006 = vunpack.c.h.b16 %v345
      %v1007 = vunpack.c.l.b16 %v346
      %v1008 = vunpack.c.h.b16 %v346
      %v1009 = vunpack.c.l.b16 %v347
      %v1010 = vunpack.c.h.b16 %v347
      %v1011 = vunpack.c.l.b16 %v348
      %v1012 = vunpack.c.h.b16 %v348
      %v1013 = vunpack.c.l.b16 %v349
      %v1014 = vunpack.c.h.b16 %v349
      %v1015 = vunpack.c.l.b16 %v350
      %v1016 = vunpack.c.h.b16 %v350
      %v1017 = vunpack.c.l.b16 %v351
      %v1018 = vunpack.c.h.b16 %v351
      %v1019 = vunpack.c.l.b16 %v352
      %v1020 = vunpack.c.h.b16 %v352
      %v1021 = vunpack.c.l.b16 %v353
      %v1022 = vunpack.c.h.b16 %v353
      %v1023 = vunpack.c.l.b16 %v354
      %v1024 = vunpack.c.h.b16 %v354
      %v1025 = vunpack.c.l.b16 %v355
      %v1026 = vunpack.c.h.b16 %v355
      %v1027 = vunpack.c.l.b16 %v356
      %v1028 = vunpack.c.h.b16 %v356
      %v1029 = vunpack.c.l.b16 %v357
      %v1030 = vunpack.c.h.b16 %v357
      %v1031 = vunpack.c.l.b16 %v358
      %v1032 = vunpack.c.h.b16 %v358
      %v1033 = vunpack.c.l.b16 %v359
      %v1034 = vunpack.c.h.b16 %v359
      %v1035 = vunpack.c.l.b16 %v360
      %v1036 = vunpack.c.h.b16 %v360
      %v1037 = vunpack.c.l.b16 %v361
      %v1038 = vunpack.c.h.b16 %v361
      %v1039 = vunpack.c.l.b16 %v362
      %v1040 = vunpack.c.h.b16 %v362
      %v1041 = vunpack.c.l.b16 %v363
      %v1042 = vunpack.c.h.b16 %v363
      %v1043 = vunpack.c.l.b16 %v364
      %v1044 = vunpack.c.h.b16 %v364
      %v1045 = vunpack.c.l.b16 %v365
      %v1046 = vunpack.c.h.b16 %v365
      %v1047 = vunpack.c.l.b16 %v366
      %v1048 = vunpack.c.h.b16 %v366
      %v1049 = vunpack.c.l.b16 %v367
      %v1050 = vunpack.c.h.b16 %v367
      %v1051 = vunpack.c.l.b16 %v368
      %v1052 = vunpack.c.h.b16 %v368
      %v1053 = vunpack.c.l.b16 %v369
      %v1054 = vunpack.c.h.b16 %v369
      %v1055 = vunpack.c.l.b16 %v370
      %v1056 = vunpack.c.h.b16 %v370
      %v1057 = vunpack.c.l.b16 %v371
      %v1058 = vunpack.c.h.b16 %v371
      %v1059 = vunpack.c.l.b16 %v372
      %v1060 = vunpack.c.h.b16 %v372
      %v1061 = vunpack.c.l.b16 %v373
      %v1062 = vunpack.c.h.b16 %v373
      %v1063 = vunpack.c.l.b16 %v374
      %v1064 = vunpack.c.h.b16 %v374
      %v1065 = vunpack.c.l.b16 %v375
      %v1066 = vunpack.c.h.b16 %v375
      %v1067 = vunpack.c.l.b16 %v376
      %v1068 = vunpack.c.h.b16 %v376
      %v1069 = vunpack.c.l.b16 %v377
      %v1070 = vunpack.c.h.b16 %v377
      %v1071 = vunpack.c.l.b16 %v378
      %v1072 = vunpack.c.h.b16 %v378
      %v1073 = vunpack.c.l.b16 %v379
      %v1074 = vunpack.c.h.b16 %v379
      %v1075 = vunpack.c.l.b16 %v380
      %v1076 = vunpack.c.h.b16 %v380
      %v1077 = vunpack.c.l.b16 %v381
      %v1078 = vunpack.c.h.b16 %v381
      %v1079 = vunpack.c.l.b16 %v382
      %v1080 = vunpack.c.h.b16 %v382
      %v1081 = vunpack.c.l.b16 %v383
      %v1082 = vunpack.c.h.b16 %v383
      %v1083 = vunpack.c.l.b16 %v384
      %v1084 = vunpack.c.h.b16 %v384
      %v1085 = vunpack.c.l.b16 %v385
      %v1086 = vunpack.c.h.b16 %v385
      %v1087 = vunpack.c.l.b16 %v386
      %v1088 = vunpack.c.h.b16 %v386
      %v1089 = vunpack.c.l.b16 %v387
      %v1090 = vunpack.c.h.b16 %v387
      %v1091 = vunpack.c.l.b16 %v388
      %v1092 = vunpack.c.h.b16 %v388
      %v1093 = vpack.c.b16 %v839, %v837
      %v1094 = vpack.c.b16 %v840, %v838
      %v1095 = vpack.c.b16 %v843, %v841
      %v1096 = vpack.c.b16 %v844, %v842
      %v1097 = vpack.c.b16 %v847, %v845
      %v1098 = vpack.c.b16 %v848, %v846
      %v1099 = vpack.c.b16 %v851, %v849
      %v1100 = vpack.c.b16 %v852, %v850
      %v1101 = vpack.c.b16 %v855, %v853
      %v1102 = vpack.c.b16 %v856, %v854
      %v1103 = vpack.c.b16 %v859, %v857
      %v1104 = vpack.c.b16 %v860, %v858
      %v1105 = vpack.c.b16 %v863, %v861
      %v1106 = vpack.c.b16 %v864, %v862
      %v1107 = vpack.c.b16 %v867, %v865
      %v1108 = vpack.c.b16 %v868, %v866
      %v1109 = vpack.c.b16 %v871, %v869
      %v1110 = vpack.c.b16 %v872, %v870
      %v1111 = vpack.c.b16 %v875, %v873
      %v1112 = vpack.c.b16 %v876, %v874
      %v1113 = vpack.c.b16 %v879, %v877
      %v1114 = vpack.c.b16 %v880, %v878
      %v1115 = vpack.c.b16 %v883, %v881
      %v1116 = vpack.c.b16 %v884, %v882
      %v1117 = vpack.c.b16 %v887, %v885
      %v1118 = vpack.c.b16 %v888, %v886
      %v1119 = vpack.c.b16 %v891, %v889
      %v1120 = vpack.c.b16 %v892, %v890
      %v1121 = vpack.c.b16 %v895, %v893
      %v1122 = vpack.c.b16 %v896, %v894
      %v1123 = vpack.c.b16 %v899, %v897
      %v1124 = vpack.c.b16 %v900, %v898
      %v1125 = vpack.c.b16 %v903, %v901
      %v1126 = vpack.c.b16 %v904, %v902
      %v1127 = vpack.c.b16 %v907, %v905
      %v1128 = vpack.c.b16 %v908, %v906
      %v1129 = vpack.c.b16 %v911, %v909
      %v1130 = vpack.c.b16 %v912, %v910
      %v1131 = vpack.c.b16 %v915, %v913
      %v1132 = vpack.c.b16 %v916, %v914
      %v1133 = vpack.c.b16 %v919, %v917
      %v1134 = vpack.c.b16 %v920, %v918
      %v1135 = vpack.c.b16 %v923, %v921
      %v1136 = vpack.c.b16 %v924, %v922
      %v1137 = vpack.c.b16 %v927, %v925
      %v1138 = vpack.c.b16 %v928, %v926
      %v1139 = vpack.c.b16 %v931, %v929
      %v1140 = vpack.c.b16 %v932, %v930
      %v1141 = vpack.c.b16 %v935, %v933
      %v1142 = vpack.c.b16 %v936, %v934
      %v1143 = vpack.c.b16 %v939, %v937
      %v1144 = vpack.c.b16 %v940, %v938
      %v1145 = vpack.c.b16 %v943, %v941
      %v1146 = vpack.c.b16 %v944, %v942
      %v1147 = vpack.c.b16 %v947, %v945
      %v1148 = vpack.c.b16 %v948, %v946
      %v1149 = vpack.c.b16 %v951, %v949
      %v1150 = vpack.c.b16 %v952, %v950
      %v1151 = vpack.c.b16 %v955, %v953
      %v1152 = vpack.c.b16 %v956, %v954
      %v1153 = vpack.c.b16 %v959, %v957
      %v1154 = vpack.c.b16 %v960, %v958
      %v1155 = vpack.c.b16 %v963, %v961
      %v1156 = vpack.c.b16 %v964, %v962
      %v1157 = vpack.c.b16 %v967, %v965
      %v1158 = vpack.c.b16 %v968, %v966
      %v1159 = vpack.c.b16 %v971, %v969
      %v1160 = vpack.c.b16 %v972, %v970
      %v1161 = vpack.c.b16 %v975, %v973
      %v1162 = vpack.c.b16 %v976, %v974
      %v1163 = vpack.c.b16 %v979, %v977
      %v1164 = vpack.c.b16 %v980, %v978
      %v1165 = vpack.c.b16 %v983, %v981
      %v1166 = vpack.c.b16 %v984, %v982
      %v1167 = vpack.c.b16 %v987, %v985
      %v1168 = vpack.c.b16 %v988, %v986
      %v1169 = vpack.c.b16 %v991, %v989
      %v1170 = vpack.c.b16 %v992, %v990
      %v1171 = vpack.c.b16 %v995, %v993
      %v1172 = vpack.c.b16 %v996, %v994
      %v1173 = vpack.c.b16 %v999, %v997
      %v1174 = vpack.c.b16 %v1000, %v998
      %v1175 = vpack.c.b16 %v1003, %v1001
      %v1176 = vpack.c.b16 %v1004, %v1002
      %v1177 = vpack.c.b16 %v1007, %v1005
      %v1178 = vpack.c.b16 %v1008, %v1006
      %v1179 = vpack.c.b16 %v1011, %v1009
      %v1180 = vpack.c.b16 %v1012, %v1010
      %v1181 = vpack.c.b16 %v1015, %v1013
      %v1182 = vpack.c.b16 %v1016, %v1014
      %v1183 = vpack.c.b16 %v1019, %v1017
      %v1184 = vpack.c.b16 %v1020, %v1018
      %v1185 = vpack.c.b16 %v1023, %v1021
      %v1186 = vpack.c.b16 %v1024, %v1022
      %v1187 = vpack.c.b16 %v1027, %v1025
      %v1188 = vpack.c.b16 %v1028, %v1026
      %v1189 = vpack.c.b16 %v1031, %v1029
      %v1190 = vpack.c.b16 %v1032, %v1030
      %v1191 = vpack.c.b16 %v1035, %v1033
      %v1192 = vpack.c.b16 %v1036, %v1034
      %v1193 = vpack.c.b16 %v1039, %v1037
      %v1194 = vpack.c.b16 %v1040, %v1038
      %v1195 = vpack.c.b16 %v1043, %v1041
      %v1196 = vpack.c.b16 %v1044, %v1042
      %v1197 = vpack.c.b16 %v1047, %v1045
      %v1198 = vpack.c.b16 %v1048, %v1046
      %v1199 = vpack.c.b16 %v1051, %v1049
      %v1200 = vpack.c.b16 %v1052, %v1050
      %v1201 = vpack.c.b16 %v1055, %v1053
      %v1202 = vpack.c.b16 %v1056, %v1054
      %v1203 = vpack.c.b16 %v1059, %v1057
      %v1204 = vpack.c.b16 %v1060, %v1058
      %v1205 = vpack.c.b16 %v1063, %v1061
      %v1206 = vpack.c.b16 %v1064, %v1062
      %v1207 = vpack.c.b16 %v1067, %v1065
      %v1208 = vpack.c.b16 %v1068, %v1066
      %v1209 = vpack.c.b16 %v1071, %v1069
      %v1210 = vpack.c.b16 %v1072, %v1070
      %v1211 = vpack.c.b16 %v1075, %v1073
      %v1212 = vpack.c.b16 %v1076, %v1074
      %v1213 = vpack.c.b16 %v1079, %v1077
      %v1214 = vpack.c.b16 %v1080, %v1078
      %v1215 = vpack.c.b16 %v1083, %v1081
      %v1216 = vpack.c.b16 %v1084, %v1082
      %v1217 = vpack.c.b16 %v1087, %v1085
      %v1218 = vpack.c.b16 %v1088, %v1086
      %v1219 = vpack.c.b16 %v1091, %v1089
      %v1220 = vpack.c.b16 %v1092, %v1090
      %1349 = vmatprep.subr.bf16.mxu0 %v1108
      %1350 = vmatpush1.bf16.msra.mxu0 %v1107
      %1351 = vmatprep.subr.bf16.mxu0 %v1106
      %1352 = vmatpush1.bf16.msra.mxu0 %v1105
      %1353 = vmatprep.subr.bf16.mxu0 %v1104
      %1354 = vmatpush1.bf16.msra.mxu0 %v1103
      %1355 = vmatprep.subr.bf16.mxu0 %v1102
      %1356 = vmatpush1.bf16.msra.mxu0 %v1101
      %1357 = vmatprep.subr.bf16.mxu0 %v1100
      %1358 = vmatpush1.bf16.msra.mxu0 %v1099
      %1359 = vmatprep.subr.bf16.mxu0 %v1098
      %1360 = vmatpush1.bf16.msra.mxu0 %v1097
      %1361 = vmatprep.subr.bf16.mxu0 %v1096
      %1362 = vmatpush1.bf16.msra.mxu0 %v1095
      %1363 = vmatprep.subr.bf16.mxu0 %v1094
      %1364 = vmatpush1.bf16.msra.mxu0 %v1093
      %1365 = vmatprep.subr.bf16.mxu0 %v1124
      %1366 = vmatpush2.bf16.msra.mxu0 %v1123
      %1367 = vmatprep.subr.bf16.mxu0 %v1122
      %1368 = vmatpush2.bf16.msra.mxu0 %v1121
      %1369 = vmatprep.subr.bf16.mxu0 %v1120
      %1370 = vmatpush2.bf16.msra.mxu0 %v1119
      %1371 = vmatprep.subr.bf16.mxu0 %v1118
      %1372 = vmatpush2.bf16.msra.mxu0 %v1117
      %1373 = vmatprep.subr.bf16.mxu0 %v1116
      %1374 = vmatpush2.bf16.msra.mxu0 %v1115
      %1375 = vmatprep.subr.bf16.mxu0 %v1114
      %1376 = vmatpush2.bf16.msra.mxu0 %v1113
      %1377 = vmatprep.subr.bf16.mxu0 %v1112
      %1378 = vmatpush2.bf16.msra.mxu0 %v1111
      %1379 = vmatprep.subr.bf16.mxu0 %v1110
      %1380 = vmatpush2.bf16.msra.mxu0 %v1109
      %1381 = vmatprep.mubr.bf16.mxu0 %v582
      %1382 = vmatmul.mubr.bf16.gmra.mxu0 %v581
      %v1383 = vpop.f32.mrf.mxu0
      %v1384 = vadd.f32 0.0, %v1383
      %v1385 = vpop.f32.mrf.mxu0
      %v1386 = vadd.f32 0.0, %v1385
      %v1387 = vpop.f32.mrf.mxu0
      %v1388 = vadd.f32 0.0, %v1387
      %v1389 = vpop.f32.mrf.mxu0
      %v1390 = vadd.f32 0.0, %v1389
      %1391 = vmatprep.mubr.bf16.mxu0 %v590
      %1392 = vmatmul.mubr.bf16.gmra.mxu0 %v589
      %v1393 = vpop.f32.mrf.mxu0
      %v1394 = vadd.f32 0.0, %v1393
      %v1395 = vpop.f32.mrf.mxu0
      %v1396 = vadd.f32 0.0, %v1395
      %v1397 = vpop.f32.mrf.mxu0
      %v1398 = vadd.f32 0.0, %v1397
      %v1399 = vpop.f32.mrf.mxu0
      %v1400 = vadd.f32 0.0, %v1399
      %1401 = vmatprep.mubr.bf16.mxu0 %v598
      %1402 = vmatmul.mubr.bf16.gmra.mxu0 %v597
      %v1403 = vpop.f32.mrf.mxu0
      %v1404 = vadd.f32 0.0, %v1403
      %v1405 = vpop.f32.mrf.mxu0
      %v1406 = vadd.f32 0.0, %v1405
      %v1407 = vpop.f32.mrf.mxu0
      %v1408 = vadd.f32 0.0, %v1407
      %v1409 = vpop.f32.mrf.mxu0
      %v1410 = vadd.f32 0.0, %v1409
      %1411 = vmatprep.mubr.bf16.mxu0 %v606
      %1412 = vmatmul.mubr.bf16.gmra.mxu0 %v605
      %v1413 = vpop.f32.mrf.mxu0
      %v1414 = vadd.f32 0.0, %v1413
      %v1415 = vpop.f32.mrf.mxu0
      %v1416 = vadd.f32 0.0, %v1415
      %v1417 = vpop.f32.mrf.mxu0
      %v1418 = vadd.f32 0.0, %v1417
      %v1419 = vpop.f32.mrf.mxu0
      %v1420 = vadd.f32 0.0, %v1419
      %1421 = vmatprep.mubr.bf16.mxu0 %v614
      %1422 = vmatmul.mubr.bf16.gmra.mxu0 %v613
      %v1423 = vpop.f32.mrf.mxu0
      %v1424 = vadd.f32 0.0, %v1423
      %v1425 = vpop.f32.mrf.mxu0
      %v1426 = vadd.f32 0.0, %v1425
      %v1427 = vpop.f32.mrf.mxu0
      %v1428 = vadd.f32 0.0, %v1427
      %v1429 = vpop.f32.mrf.mxu0
      %v1430 = vadd.f32 0.0, %v1429
      %1431 = vmatprep.mubr.bf16.mxu0 %v622
      %1432 = vmatmul.mubr.bf16.gmra.mxu0 %v621
      %v1433 = vpop.f32.mrf.mxu0
      %v1434 = vadd.f32 0.0, %v1433
      %v1435 = vpop.f32.mrf.mxu0
      %v1436 = vadd.f32 0.0, %v1435
      %v1437 = vpop.f32.mrf.mxu0
      %v1438 = vadd.f32 0.0, %v1437
      %v1439 = vpop.f32.mrf.mxu0
      %v1440 = vadd.f32 0.0, %v1439
      %1441 = vmatprep.mubr.bf16.mxu0 %v630
      %1442 = vmatmul.mubr.bf16.gmra.mxu0 %v629
      %v1443 = vpop.f32.mrf.mxu0
      %v1444 = vadd.f32 0.0, %v1443
      %v1445 = vpop.f32.mrf.mxu0
      %v1446 = vadd.f32 0.0, %v1445
      %v1447 = vpop.f32.mrf.mxu0
      %v1448 = vadd.f32 0.0, %v1447
      %v1449 = vpop.f32.mrf.mxu0
      %v1450 = vadd.f32 0.0, %v1449
      %1451 = vmatprep.mubr.bf16.mxu0 %v638
      %1452 = vmatmul.mubr.bf16.gmra.mxu0 %v637
      %v1453 = vpop.f32.mrf.mxu0
      %v1454 = vadd.f32 0.0, %v1453
      %v1455 = vpop.f32.mrf.mxu0
      %v1456 = vadd.f32 0.0, %v1455
      %v1457 = vpop.f32.mrf.mxu0
      %v1458 = vadd.f32 0.0, %v1457
      %v1459 = vpop.f32.mrf.mxu0
      %v1460 = vadd.f32 0.0, %v1459
      %1461 = vdwg.mxu0
      %1462 = vmatprep.subr.bf16.mxu0 %v1140
      %1463 = vmatpush1.bf16.msra.mxu0 %v1139
      %1464 = vmatprep.subr.bf16.mxu0 %v1138
      %1465 = vmatpush1.bf16.msra.mxu0 %v1137
      %1466 = vmatprep.subr.bf16.mxu0 %v1136
      %1467 = vmatpush1.bf16.msra.mxu0 %v1135
      %1468 = vmatprep.subr.bf16.mxu0 %v1134
      %1469 = vmatpush1.bf16.msra.mxu0 %v1133
      %1470 = vmatprep.subr.bf16.mxu0 %v1132
      %1471 = vmatpush1.bf16.msra.mxu0 %v1131
      %1472 = vmatprep.subr.bf16.mxu0 %v1130
      %1473 = vmatpush1.bf16.msra.mxu0 %v1129
      %1474 = vmatprep.subr.bf16.mxu0 %v1128
      %1475 = vmatpush1.bf16.msra.mxu0 %v1127
      %1476 = vmatprep.subr.bf16.mxu0 %v1126
      %1477 = vmatpush1.bf16.msra.mxu0 %v1125
      %1478 = vmatprep.subr.bf16.mxu0 %v1156
      %1479 = vmatpush2.bf16.msra.mxu0 %v1155
      %1480 = vmatprep.subr.bf16.mxu0 %v1154
      %1481 = vmatpush2.bf16.msra.mxu0 %v1153
      %1482 = vmatprep.subr.bf16.mxu0 %v1152
      %1483 = vmatpush2.bf16.msra.mxu0 %v1151
      %1484 = vmatprep.subr.bf16.mxu0 %v1150
      %1485 = vmatpush2.bf16.msra.mxu0 %v1149
      %1486 = vmatprep.subr.bf16.mxu0 %v1148
      %1487 = vmatpush2.bf16.msra.mxu0 %v1147
      %1488 = vmatprep.subr.bf16.mxu0 %v1146
      %1489 = vmatpush2.bf16.msra.mxu0 %v1145
      %1490 = vmatprep.subr.bf16.mxu0 %v1144
      %1491 = vmatpush2.bf16.msra.mxu0 %v1143
      %1492 = vmatprep.subr.bf16.mxu0 %v1142
      %1493 = vmatpush2.bf16.msra.mxu0 %v1141
      %1494 = vmatprep.mubr.bf16.mxu0 %v584
      %1495 = vmatmul.mubr.bf16.gmra.mxu0 %v583
      %v1496 = vpop.f32.mrf.mxu0
      %v1497 = vadd.f32 %v1384, %v1496
      %v1498 = vpop.f32.mrf.mxu0
      %v1499 = vadd.f32 %v1386, %v1498
      %v1500 = vpop.f32.mrf.mxu0
      %v1501 = vadd.f32 %v1388, %v1500
      %v1502 = vpop.f32.mrf.mxu0
      %v1503 = vadd.f32 %v1390, %v1502
      %1504 = vmatprep.mubr.bf16.mxu0 %v592
      %1505 = vmatmul.mubr.bf16.gmra.mxu0 %v591
      %v1506 = vpop.f32.mrf.mxu0
      %v1507 = vadd.f32 %v1394, %v1506
      %v1508 = vpop.f32.mrf.mxu0
      %v1509 = vadd.f32 %v1396, %v1508
      %v1510 = vpop.f32.mrf.mxu0
      %v1511 = vadd.f32 %v1398, %v1510
      %v1512 = vpop.f32.mrf.mxu0
      %v1513 = vadd.f32 %v1400, %v1512
      %1514 = vmatprep.mubr.bf16.mxu0 %v600
      %1515 = vmatmul.mubr.bf16.gmra.mxu0 %v599
      %v1516 = vpop.f32.mrf.mxu0
      %v1517 = vadd.f32 %v1404, %v1516
      %v1518 = vpop.f32.mrf.mxu0
      %v1519 = vadd.f32 %v1406, %v1518
      %v1520 = vpop.f32.mrf.mxu0
      %v1521 = vadd.f32 %v1408, %v1520
      %v1522 = vpop.f32.mrf.mxu0
      %v1523 = vadd.f32 %v1410, %v1522
      %1524 = vmatprep.mubr.bf16.mxu0 %v608
      %1525 = vmatmul.mubr.bf16.gmra.mxu0 %v607
      %v1526 = vpop.f32.mrf.mxu0
      %v1527 = vadd.f32 %v1414, %v1526
      %v1528 = vpop.f32.mrf.mxu0
      %v1529 = vadd.f32 %v1416, %v1528
      %v1530 = vpop.f32.mrf.mxu0
      %v1531 = vadd.f32 %v1418, %v1530
      %v1532 = vpop.f32.mrf.mxu0
      %v1533 = vadd.f32 %v1420, %v1532
      %1534 = vmatprep.mubr.bf16.mxu0 %v616
      %1535 = vmatmul.mubr.bf16.gmra.mxu0 %v615
      %v1536 = vpop.f32.mrf.mxu0
      %v1537 = vadd.f32 %v1424, %v1536
      %v1538 = vpop.f32.mrf.mxu0
      %v1539 = vadd.f32 %v1426, %v1538
      %v1540 = vpop.f32.mrf.mxu0
      %v1541 = vadd.f32 %v1428, %v1540
      %v1542 = vpop.f32.mrf.mxu0
      %v1543 = vadd.f32 %v1430, %v1542
      %1544 = vmatprep.mubr.bf16.mxu0 %v624
      %1545 = vmatmul.mubr.bf16.gmra.mxu0 %v623
      %v1546 = vpop.f32.mrf.mxu0
      %v1547 = vadd.f32 %v1434, %v1546
      %v1548 = vpop.f32.mrf.mxu0
      %v1549 = vadd.f32 %v1436, %v1548
      %v1550 = vpop.f32.mrf.mxu0
      %v1551 = vadd.f32 %v1438, %v1550
      %v1552 = vpop.f32.mrf.mxu0
      %v1553 = vadd.f32 %v1440, %v1552
      %1554 = vmatprep.mubr.bf16.mxu0 %v632
      %1555 = vmatmul.mubr.bf16.gmra.mxu0 %v631
      %v1556 = vpop.f32.mrf.mxu0
      %v1557 = vadd.f32 %v1444, %v1556
      %v1558 = vpop.f32.mrf.mxu0
      %v1559 = vadd.f32 %v1446, %v1558
      %v1560 = vpop.f32.mrf.mxu0
      %v1561 = vadd.f32 %v1448, %v1560
      %v1562 = vpop.f32.mrf.mxu0
      %v1563 = vadd.f32 %v1450, %v1562
      %1564 = vmatprep.mubr.bf16.mxu0 %v640
      %1565 = vmatmul.mubr.bf16.gmra.mxu0 %v639
      %v1566 = vpop.f32.mrf.mxu0
      %v1567 = vadd.f32 %v1454, %v1566
      %v1568 = vpop.f32.mrf.mxu0
      %v1569 = vadd.f32 %v1456, %v1568
      %v1570 = vpop.f32.mrf.mxu0
      %v1571 = vadd.f32 %v1458, %v1570
      %v1572 = vpop.f32.mrf.mxu0
      %v1573 = vadd.f32 %v1460, %v1572
      %1574 = vdwg.mxu0
      %1575 = vmatprep.subr.bf16.mxu0 %v1172
      %1576 = vmatpush1.bf16.msra.mxu0 %v1171
      %1577 = vmatprep.subr.bf16.mxu0 %v1170
      %1578 = vmatpush1.bf16.msra.mxu0 %v1169
      %1579 = vmatprep.subr.bf16.mxu0 %v1168
      %1580 = vmatpush1.bf16.msra.mxu0 %v1167
      %1581 = vmatprep.subr.bf16.mxu0 %v1166
      %1582 = vmatpush1.bf16.msra.mxu0 %v1165
      %1583 = vmatprep.subr.bf16.mxu0 %v1164
      %1584 = vmatpush1.bf16.msra.mxu0 %v1163
      %1585 = vmatprep.subr.bf16.mxu0 %v1162
      %1586 = vmatpush1.bf16.msra.mxu0 %v1161
      %1587 = vmatprep.subr.bf16.mxu0 %v1160
      %1588 = vmatpush1.bf16.msra.mxu0 %v1159
      %1589 = vmatprep.subr.bf16.mxu0 %v1158
      %1590 = vmatpush1.bf16.msra.mxu0 %v1157
      %1591 = vmatprep.subr.bf16.mxu0 %v1188
      %1592 = vmatpush2.bf16.msra.mxu0 %v1187
      %1593 = vmatprep.subr.bf16.mxu0 %v1186
      %1594 = vmatpush2.bf16.msra.mxu0 %v1185
      %1595 = vmatprep.subr.bf16.mxu0 %v1184
      %1596 = vmatpush2.bf16.msra.mxu0 %v1183
      %1597 = vmatprep.subr.bf16.mxu0 %v1182
      %1598 = vmatpush2.bf16.msra.mxu0 %v1181
      %1599 = vmatprep.subr.bf16.mxu0 %v1180
      %1600 = vmatpush2.bf16.msra.mxu0 %v1179
      %1601 = vmatprep.subr.bf16.mxu0 %v1178
      %1602 = vmatpush2.bf16.msra.mxu0 %v1177
      %1603 = vmatprep.subr.bf16.mxu0 %v1176
      %1604 = vmatpush2.bf16.msra.mxu0 %v1175
      %1605 = vmatprep.subr.bf16.mxu0 %v1174
      %1606 = vmatpush2.bf16.msra.mxu0 %v1173
      %1607 = vmatprep.mubr.bf16.mxu0 %v586
      %1608 = vmatmul.mubr.bf16.gmra.mxu0 %v585
      %v1609 = vpop.f32.mrf.mxu0
      %v1610 = vadd.f32 %v1497, %v1609
      %v1611 = vpop.f32.mrf.mxu0
      %v1612 = vadd.f32 %v1499, %v1611
      %v1613 = vpop.f32.mrf.mxu0
      %v1614 = vadd.f32 %v1501, %v1613
      %v1615 = vpop.f32.mrf.mxu0
      %v1616 = vadd.f32 %v1503, %v1615
      %1617 = vmatprep.mubr.bf16.mxu0 %v594
      %1618 = vmatmul.mubr.bf16.gmra.mxu0 %v593
      %v1619 = vpop.f32.mrf.mxu0
      %v1620 = vadd.f32 %v1507, %v1619
      %v1621 = vpop.f32.mrf.mxu0
      %v1622 = vadd.f32 %v1509, %v1621
      %v1623 = vpop.f32.mrf.mxu0
      %v1624 = vadd.f32 %v1511, %v1623
      %v1625 = vpop.f32.mrf.mxu0
      %v1626 = vadd.f32 %v1513, %v1625
      %1627 = vmatprep.mubr.bf16.mxu0 %v602
      %1628 = vmatmul.mubr.bf16.gmra.mxu0 %v601
      %v1629 = vpop.f32.mrf.mxu0
      %v1630 = vadd.f32 %v1517, %v1629
      %v1631 = vpop.f32.mrf.mxu0
      %v1632 = vadd.f32 %v1519, %v1631
      %v1633 = vpop.f32.mrf.mxu0
      %v1634 = vadd.f32 %v1521, %v1633
      %v1635 = vpop.f32.mrf.mxu0
      %v1636 = vadd.f32 %v1523, %v1635
      %1637 = vmatprep.mubr.bf16.mxu0 %v610
      %1638 = vmatmul.mubr.bf16.gmra.mxu0 %v609
      %v1639 = vpop.f32.mrf.mxu0
      %v1640 = vadd.f32 %v1527, %v1639
      %v1641 = vpop.f32.mrf.mxu0
      %v1642 = vadd.f32 %v1529, %v1641
      %v1643 = vpop.f32.mrf.mxu0
      %v1644 = vadd.f32 %v1531, %v1643
      %v1645 = vpop.f32.mrf.mxu0
      %v1646 = vadd.f32 %v1533, %v1645
      %1647 = vmatprep.mubr.bf16.mxu0 %v618
      %1648 = vmatmul.mubr.bf16.gmra.mxu0 %v617
      %v1649 = vpop.f32.mrf.mxu0
      %v1650 = vadd.f32 %v1537, %v1649
      %v1651 = vpop.f32.mrf.mxu0
      %v1652 = vadd.f32 %v1539, %v1651
      %v1653 = vpop.f32.mrf.mxu0
      %v1654 = vadd.f32 %v1541, %v1653
      %v1655 = vpop.f32.mrf.mxu0
      %v1656 = vadd.f32 %v1543, %v1655
      %1657 = vmatprep.mubr.bf16.mxu0 %v626
      %1658 = vmatmul.mubr.bf16.gmra.mxu0 %v625
      %v1659 = vpop.f32.mrf.mxu0
      %v1660 = vadd.f32 %v1547, %v1659
      %v1661 = vpop.f32.mrf.mxu0
      %v1662 = vadd.f32 %v1549, %v1661
      %v1663 = vpop.f32.mrf.mxu0
      %v1664 = vadd.f32 %v1551, %v1663
      %v1665 = vpop.f32.mrf.mxu0
      %v1666 = vadd.f32 %v1553, %v1665
      %1667 = vmatprep.mubr.bf16.mxu0 %v634
      %1668 = vmatmul.mubr.bf16.gmra.mxu0 %v633
      %v1669 = vpop.f32.mrf.mxu0
      %v1670 = vadd.f32 %v1557, %v1669
      %v1671 = vpop.f32.mrf.mxu0
      %v1672 = vadd.f32 %v1559, %v1671
      %v1673 = vpop.f32.mrf.mxu0
      %v1674 = vadd.f32 %v1561, %v1673
      %v1675 = vpop.f32.mrf.mxu0
      %v1676 = vadd.f32 %v1563, %v1675
      %1677 = vmatprep.mubr.bf16.mxu0 %v642
      %1678 = vmatmul.mubr.bf16.gmra.mxu0 %v641
      %v1679 = vpop.f32.mrf.mxu0
      %v1680 = vadd.f32 %v1567, %v1679
      %v1681 = vpop.f32.mrf.mxu0
      %v1682 = vadd.f32 %v1569, %v1681
      %v1683 = vpop.f32.mrf.mxu0
      %v1684 = vadd.f32 %v1571, %v1683
      %v1685 = vpop.f32.mrf.mxu0
      %v1686 = vadd.f32 %v1573, %v1685
      %1687 = vdwg.mxu0
      %1688 = vmatprep.subr.bf16.mxu0 %v1204
      %1689 = vmatpush1.bf16.msra.mxu0 %v1203
      %1690 = vmatprep.subr.bf16.mxu0 %v1202
      %1691 = vmatpush1.bf16.msra.mxu0 %v1201
      %1692 = vmatprep.subr.bf16.mxu0 %v1200
      %1693 = vmatpush1.bf16.msra.mxu0 %v1199
      %1694 = vmatprep.subr.bf16.mxu0 %v1198
      %1695 = vmatpush1.bf16.msra.mxu0 %v1197
      %1696 = vmatprep.subr.bf16.mxu0 %v1196
      %1697 = vmatpush1.bf16.msra.mxu0 %v1195
      %1698 = vmatprep.subr.bf16.mxu0 %v1194
      %1699 = vmatpush1.bf16.msra.mxu0 %v1193
      %1700 = vmatprep.subr.bf16.mxu0 %v1192
      %1701 = vmatpush1.bf16.msra.mxu0 %v1191
      %1702 = vmatprep.subr.bf16.mxu0 %v1190
      %1703 = vmatpush1.bf16.msra.mxu0 %v1189
      %1704 = vmatprep.subr.bf16.mxu0 %v1220
      %1705 = vmatpush2.bf16.msra.mxu0 %v1219
      %1706 = vmatprep.subr.bf16.mxu0 %v1218
      %1707 = vmatpush2.bf16.msra.mxu0 %v1217
      %1708 = vmatprep.subr.bf16.mxu0 %v1216
      %1709 = vmatpush2.bf16.msra.mxu0 %v1215
      %1710 = vmatprep.subr.bf16.mxu0 %v1214
      %1711 = vmatpush2.bf16.msra.mxu0 %v1213
      %1712 = vmatprep.subr.bf16.mxu0 %v1212
      %1713 = vmatpush2.bf16.msra.mxu0 %v1211
      %1714 = vmatprep.subr.bf16.mxu0 %v1210
      %1715 = vmatpush2.bf16.msra.mxu0 %v1209
      %1716 = vmatprep.subr.bf16.mxu0 %v1208
      %1717 = vmatpush2.bf16.msra.mxu0 %v1207
      %1718 = vmatprep.subr.bf16.mxu0 %v1206
      %1719 = vmatpush2.bf16.msra.mxu0 %v1205
      %1720 = vmatprep.mubr.bf16.mxu0 %v588
      %1721 = vmatmul.mubr.bf16.gmra.mxu0 %v587
      %v1722 = vpop.f32.mrf.mxu0
      %v1723 = vadd.f32 %v1610, %v1722
      %v1724 = vpop.f32.mrf.mxu0
      %v1725 = vadd.f32 %v1612, %v1724
      %v1726 = vpop.f32.mrf.mxu0
      %v1727 = vadd.f32 %v1614, %v1726
      %v1728 = vpop.f32.mrf.mxu0
      %v1729 = vadd.f32 %v1616, %v1728
      %1730 = vmatprep.mubr.bf16.mxu0 %v596
      %1731 = vmatmul.mubr.bf16.gmra.mxu0 %v595
      %v1732 = vpop.f32.mrf.mxu0
      %v1733 = vadd.f32 %v1620, %v1732
      %v1734 = vpop.f32.mrf.mxu0
      %v1735 = vadd.f32 %v1622, %v1734
      %v1736 = vpop.f32.mrf.mxu0
      %v1737 = vadd.f32 %v1624, %v1736
      %v1738 = vpop.f32.mrf.mxu0
      %v1739 = vadd.f32 %v1626, %v1738
      %1740 = vmatprep.mubr.bf16.mxu0 %v604
      %1741 = vmatmul.mubr.bf16.gmra.mxu0 %v603
      %v1742 = vpop.f32.mrf.mxu0
      %v1743 = vadd.f32 %v1630, %v1742
      %v1744 = vpop.f32.mrf.mxu0
      %v1745 = vadd.f32 %v1632, %v1744
      %v1746 = vpop.f32.mrf.mxu0
      %v1747 = vadd.f32 %v1634, %v1746
      %v1748 = vpop.f32.mrf.mxu0
      %v1749 = vadd.f32 %v1636, %v1748
      %1750 = vmatprep.mubr.bf16.mxu0 %v612
      %1751 = vmatmul.mubr.bf16.gmra.mxu0 %v611
      %v1752 = vpop.f32.mrf.mxu0
      %v1753 = vadd.f32 %v1640, %v1752
      %v1754 = vpop.f32.mrf.mxu0
      %v1755 = vadd.f32 %v1642, %v1754
      %v1756 = vpop.f32.mrf.mxu0
      %v1757 = vadd.f32 %v1644, %v1756
      %v1758 = vpop.f32.mrf.mxu0
      %v1759 = vadd.f32 %v1646, %v1758
      %1760 = vmatprep.mubr.bf16.mxu0 %v620
      %1761 = vmatmul.mubr.bf16.gmra.mxu0 %v619
      %v1762 = vpop.f32.mrf.mxu0
      %v1763 = vadd.f32 %v1650, %v1762
      %v1764 = vpop.f32.mrf.mxu0
      %v1765 = vadd.f32 %v1652, %v1764
      %v1766 = vpop.f32.mrf.mxu0
      %v1767 = vadd.f32 %v1654, %v1766
      %v1768 = vpop.f32.mrf.mxu0
      %v1769 = vadd.f32 %v1656, %v1768
      %1770 = vmatprep.mubr.bf16.mxu0 %v628
      %1771 = vmatmul.mubr.bf16.gmra.mxu0 %v627
      %v1772 = vpop.f32.mrf.mxu0
      %v1773 = vadd.f32 %v1660, %v1772
      %v1774 = vpop.f32.mrf.mxu0
      %v1775 = vadd.f32 %v1662, %v1774
      %v1776 = vpop.f32.mrf.mxu0
      %v1777 = vadd.f32 %v1664, %v1776
      %v1778 = vpop.f32.mrf.mxu0
      %v1779 = vadd.f32 %v1666, %v1778
      %1780 = vmatprep.mubr.bf16.mxu0 %v636
      %1781 = vmatmul.mubr.bf16.gmra.mxu0 %v635
      %v1782 = vpop.f32.mrf.mxu0
      %v1783 = vadd.f32 %v1670, %v1782
      %v1784 = vpop.f32.mrf.mxu0
      %v1785 = vadd.f32 %v1672, %v1784
      %v1786 = vpop.f32.mrf.mxu0
      %v1787 = vadd.f32 %v1674, %v1786
      %v1788 = vpop.f32.mrf.mxu0
      %v1789 = vadd.f32 %v1676, %v1788
      %1790 = vmatprep.mubr.bf16.mxu0 %v644
      %1791 = vmatmul.mubr.bf16.gmra.mxu0 %v643
      %v1792 = vpop.f32.mrf.mxu0
      %v1793 = vadd.f32 %v1680, %v1792
      %v1794 = vpop.f32.mrf.mxu0
      %v1795 = vadd.f32 %v1682, %v1794
      %v1796 = vpop.f32.mrf.mxu0
      %v1797 = vadd.f32 %v1684, %v1796
      %v1798 = vpop.f32.mrf.mxu0
      %v1799 = vadd.f32 %v1686, %v1798
      %1800 = vdwg.mxu0
      %vm1801 = vcmp.gt.f32.partialorder %v1723, 1.0
      %vm1802 = vcmp.gt.f32.partialorder %v1725, 1.0
      %vm1803 = vcmp.gt.f32.partialorder %v1727, 1.0
      %vm1804 = vcmp.gt.f32.partialorder %v1729, 1.0
      %vm1805 = vcmp.gt.f32.partialorder %v1733, 1.0
      %vm1806 = vcmp.gt.f32.partialorder %v1735, 1.0
      %vm1807 = vcmp.gt.f32.partialorder %v1737, 1.0
      %vm1808 = vcmp.gt.f32.partialorder %v1739, 1.0
      %vm1809 = vcmp.gt.f32.partialorder %v1743, 1.0
      %vm1810 = vcmp.gt.f32.partialorder %v1745, 1.0
      %vm1811 = vcmp.gt.f32.partialorder %v1747, 1.0
      %vm1812 = vcmp.gt.f32.partialorder %v1749, 1.0
      %vm1813 = vcmp.gt.f32.partialorder %v1753, 1.0
      %vm1814 = vcmp.gt.f32.partialorder %v1755, 1.0
      %vm1815 = vcmp.gt.f32.partialorder %v1757, 1.0
      %vm1816 = vcmp.gt.f32.partialorder %v1759, 1.0
      %vm1817 = vcmp.gt.f32.partialorder %v1763, 1.0
      %vm1818 = vcmp.gt.f32.partialorder %v1765, 1.0
      %vm1819 = vcmp.gt.f32.partialorder %v1767, 1.0
      %vm1820 = vcmp.gt.f32.partialorder %v1769, 1.0
      %vm1821 = vcmp.gt.f32.partialorder %v1773, 1.0
      %vm1822 = vcmp.gt.f32.partialorder %v1775, 1.0
      %vm1823 = vcmp.gt.f32.partialorder %v1777, 1.0
      %vm1824 = vcmp.gt.f32.partialorder %v1779, 1.0
      %vm1825 = vcmp.gt.f32.partialorder %v1783, 1.0
      %vm1826 = vcmp.gt.f32.partialorder %v1785, 1.0
      %vm1827 = vcmp.gt.f32.partialorder %v1787, 1.0
      %vm1828 = vcmp.gt.f32.partialorder %v1789, 1.0
      %vm1829 = vcmp.gt.f32.partialorder %v1793, 1.0
      %vm1830 = vcmp.gt.f32.partialorder %v1795, 1.0
      %vm1831 = vcmp.gt.f32.partialorder %v1797, 1.0
      %vm1832 = vcmp.gt.f32.partialorder %v1799, 1.0
      %v1833 = vsel %vm1801, 1.0, 0.0
      %v1834 = vsel %vm1802, 1.0, 0.0
      %v1835 = vsel %vm1803, 1.0, 0.0
      %v1836 = vsel %vm1804, 1.0, 0.0
      %v1837 = vsel %vm1805, 1.0, 0.0
      %v1838 = vsel %vm1806, 1.0, 0.0
      %v1839 = vsel %vm1807, 1.0, 0.0
      %v1840 = vsel %vm1808, 1.0, 0.0
      %v1841 = vsel %vm1809, 1.0, 0.0
      %v1842 = vsel %vm1810, 1.0, 0.0
      %v1843 = vsel %vm1811, 1.0, 0.0
      %v1844 = vsel %vm1812, 1.0, 0.0
      %v1845 = vsel %vm1813, 1.0, 0.0
      %v1846 = vsel %vm1814, 1.0, 0.0
      %v1847 = vsel %vm1815, 1.0, 0.0
      %v1848 = vsel %vm1816, 1.0, 0.0
      %v1849 = vsel %vm1817, 1.0, 0.0
      %v1850 = vsel %vm1818, 1.0, 0.0
      %v1851 = vsel %vm1819, 1.0, 0.0
      %v1852 = vsel %vm1820, 1.0, 0.0
      %v1853 = vsel %vm1821, 1.0, 0.0
      %v1854 = vsel %vm1822, 1.0, 0.0
      %v1855 = vsel %vm1823, 1.0, 0.0
      %v1856 = vsel %vm1824, 1.0, 0.0
      %v1857 = vsel %vm1825, 1.0, 0.0
      %v1858 = vsel %vm1826, 1.0, 0.0
      %v1859 = vsel %vm1827, 1.0, 0.0
      %v1860 = vsel %vm1828, 1.0, 0.0
      %v1861 = vsel %vm1829, 1.0, 0.0
      %v1862 = vsel %vm1830, 1.0, 0.0
      %v1863 = vsel %vm1831, 1.0, 0.0
      %v1864 = vsel %vm1832, 1.0, 0.0
      %v1865 = vpack.c.bf16 %v1835, %v1833
      %v1866 = vpack.c.bf16 %v1836, %v1834
      %v1867 = vpack.c.bf16 %v1839, %v1837
      %v1868 = vpack.c.bf16 %v1840, %v1838
      %v1869 = vpack.c.bf16 %v1843, %v1841
      %v1870 = vpack.c.bf16 %v1844, %v1842
      %v1871 = vpack.c.bf16 %v1847, %v1845
      %v1872 = vpack.c.bf16 %v1848, %v1846
      %v1873 = vpack.c.bf16 %v1851, %v1849
      %v1874 = vpack.c.bf16 %v1852, %v1850
      %v1875 = vpack.c.bf16 %v1855, %v1853
      %v1876 = vpack.c.bf16 %v1856, %v1854
      %v1877 = vpack.c.bf16 %v1859, %v1857
      %v1878 = vpack.c.bf16 %v1860, %v1858
      %v1879 = vpack.c.bf16 %v1863, %v1861
      %v1880 = vpack.c.bf16 %v1864, %v1862
      %v1897 = vunpack.c.l.b16 %v1865
      %v1898 = vunpack.c.l.b16 %v1866
      %v1899 = vunpack.c.h.b16 %v1865
      %v1900 = vunpack.c.h.b16 %v1866
      %v1901 = vunpack.c.l.b16 %v1867
      %v1902 = vunpack.c.l.b16 %v1868
      %v1903 = vunpack.c.h.b16 %v1867
      %v1904 = vunpack.c.h.b16 %v1868
      %v1905 = vunpack.c.l.b16 %v1869
      %v1906 = vunpack.c.l.b16 %v1870
      %v1907 = vunpack.c.h.b16 %v1869
      %v1908 = vunpack.c.h.b16 %v1870
      %v1909 = vunpack.c.l.b16 %v1871
      %v1910 = vunpack.c.l.b16 %v1872
      %v1911 = vunpack.c.h.b16 %v1871
      %v1912 = vunpack.c.h.b16 %v1872
      %v1913 = vunpack.c.l.b16 %v1873
      %v1914 = vunpack.c.l.b16 %v1874
      %v1915 = vunpack.c.h.b16 %v1873
      %v1916 = vunpack.c.h.b16 %v1874
      %v1917 = vunpack.c.l.b16 %v1875
      %v1918 = vunpack.c.l.b16 %v1876
      %v1919 = vunpack.c.h.b16 %v1875
      %v1920 = vunpack.c.h.b16 %v1876
      %v1921 = vunpack.c.l.b16 %v1877
      %v1922 = vunpack.c.l.b16 %v1878
      %v1923 = vunpack.c.h.b16 %v1877
      %v1924 = vunpack.c.h.b16 %v1878
      %v1925 = vunpack.c.l.b16 %v1879
      %v1926 = vunpack.c.l.b16 %v1880
      %v1927 = vunpack.c.h.b16 %v1879
      %v1928 = vunpack.c.h.b16 %v1880
      %v1929 = vpack.c.b16 %v1898, %v1897
      %v1930 = vpack.c.b16 %v1900, %v1899
      %v1931 = vpack.c.b16 %v1902, %v1901
      %v1932 = vpack.c.b16 %v1904, %v1903
      %v1933 = vpack.c.b16 %v1906, %v1905
      %v1934 = vpack.c.b16 %v1908, %v1907
      %v1935 = vpack.c.b16 %v1910, %v1909
      %v1936 = vpack.c.b16 %v1912, %v1911
      %v1937 = vpack.c.b16 %v1914, %v1913
      %v1938 = vpack.c.b16 %v1916, %v1915
      %v1939 = vpack.c.b16 %v1918, %v1917
      %v1940 = vpack.c.b16 %v1920, %v1919
      %v1941 = vpack.c.b16 %v1922, %v1921
      %v1942 = vpack.c.b16 %v1924, %v1923
      %v1943 = vpack.c.b16 %v1926, %v1925
      %v1944 = vpack.c.b16 %v1928, %v1927
      %1961 = vst [vmem:[%s194] sm:$0xff] %v1929
      %1962 = vst [vmem:[%s194 + $0x8] sm:$0xff] %v1930
      %1963 = vst [vmem:[%s194 + $0x10] sm:$0xff] %v1931
      %1964 = vst [vmem:[%s194 + $0x18] sm:$0xff] %v1932
      %1965 = vst [vmem:[%s194 + $0x20] sm:$0xff] %v1933
      %1966 = vst [vmem:[%s194 + $0x28] sm:$0xff] %v1934
      %1967 = vst [vmem:[%s194 + $0x30] sm:$0xff] %v1935
      %1968 = vst [vmem:[%s194 + $0x38] sm:$0xff] %v1936
      %1969 = vst [vmem:[%s194 + $0x40] sm:$0xff] %v1937
      %1970 = vst [vmem:[%s194 + $0x48] sm:$0xff] %v1938
      %1971 = vst [vmem:[%s194 + $0x50] sm:$0xff] %v1939
      %1972 = vst [vmem:[%s194 + $0x58] sm:$0xff] %v1940
      %1973 = vst [vmem:[%s194 + $0x60] sm:$0xff] %v1941
      %1974 = vst [vmem:[%s194 + $0x68] sm:$0xff] %v1942
      %1975 = vst [vmem:[%s194 + $0x70] sm:$0xff] %v1943
      %1976 = vst [vmem:[%s194 + $0x78] sm:$0xff] %v1944
      %s1977 = smul.u32 16, %s17
      %s1978 = smul.u32 2, %s18
      %p1979 = scmp.lt.s32.totalorder %s1977, 31
      %s1980 = scalar_select %p1979, %s1977, 31
      %p1981 = scmp.lt.s32.totalorder %s1978, 1
      %s1982 = scalar_select %p1981, %s1978, 1
      %s1983 = smul.addr %s1980, 2
      %s1984 = sadd.s32 %s1982, %s1983
      %s1985 = smul.addr %s1984, 4
      %s1986 = scalar_lea.vmem %s2, %s1985
      // Predicated region
      $region29: #{sep_conv2d_forward.6} parent=27 // pred_check
        %p1987 = pneg %p97
      $region30: #{sep_conv2d_forward.6} parent=27 // pred_check_branch
        %1989 = sbr.rel (%p1987) target = $region32
      $region31: #{sep_conv2d_forward.6} parent=27 // pred_region
        %s1990 = smul.u32 16, %s17
        %s1991 = smul.u32 2, %s18
      $region32: #{sep_conv2d_forward.6} parent=27 // pred_fallthru
        _
    $region28: #{sep_conv2d_forward.6} parent=5 // pred_fallthru
      _
    %p1992 = scmp.le.s32.totalorder 2, %s8
    // Predicated region
    $region33: #{sep_conv2d_forward.6} parent=5 // pred_check
      %p1993 = pneg %p1992
    $region34: #{sep_conv2d_forward.6} parent=5 // pred_check_branch
      %1995 = sbr.rel (%p1993) target = $region36
    $region35: #{sep_conv2d_forward.6} parent=5 // pred_region
      %s1996 = ssub.s32 %s8, 2
      // Predicated region
      $region37: #{sep_conv2d_forward.6} parent=35 // pred_check
        %p1997 = pneg %p103
      $region38: #{sep_conv2d_forward.6} parent=35 // pred_check_branch
        %1999 = sbr.rel (%p1997) target = $region40
      $region39: #{sep_conv2d_forward.6} parent=35 // pred_region
        %s2000 = smul.u32 16, %s19
        %s2001 = smul.u32 2, %s20
        %p2002 = scmp.lt.s32.totalorder %s2000, 31
        %s2003 = scalar_select %p2002, %s2000, 31
        %p2004 = scmp.lt.s32.totalorder %s2001, 1
        %s2005 = scalar_select %p2004, %s2001, 1
        %s2006 = smul.addr %s2003, 2
        %s2007 = sadd.s32 %s2005, %s2006
        %s2008 = smul.addr %s2007, 4
        %s2009 = scalar_lea.vmem %s2, %s2008
      $region40: #{sep_conv2d_forward.6} parent=35 // pred_fallthru
        _
    $region36: #{sep_conv2d_forward.6} parent=5 // pred_fallthru
      _
  $region6: #{sep_conv2d_forward.6} parent=0 // loop_footer
    %s12 = sadd.s32 1, %s8
  $region7: #{sep_conv2d_forward.6} parent=0 // loop_footer_branch
    %7 = sbr.rel target = $region3
  $region8: #{sep_conv2d_forward.6} parent=0 // loop_exit
    _

// kernel: sep_conv2d_forward.7
$region0: #{sep_conv2d_forward.7}
  #allocation0 [shape = 'u32[]', space=smem, size = 0x4, offset = 0x4, fixed_abs, tag = 'smem constant byte address 0x4 - core index']
  #allocation1 [shape = 'u32[144,128]{1,0:T(1,128)}', space=vmem, size = 0x12000, scoped, tag = 'internal scratch']
  %s0 = inlined_call_operand.vmem [shape: bf16[2,49,3,3,256], index: 0, kind: input, shape index: {}]
  %s1 = inlined_call_operand.vmem [shape: bf16[2,3,3,256], index: 1, kind: output, shape index: {}]
  %s2 = sld [smem:[#allocation0]]
  $region37: #{sep_conv2d_forward.7} parent=0
    _
  %s4 = ssub.s32 1, %s2
  %s5 = scalar_select 0, %s4, %s2
  loop: start=0, step=1, limit=4
  $region2: #{sep_conv2d_forward.7} parent=0 // loop_pre_header
    _
  $region3: #{sep_conv2d_forward.7} parent=0 // loop_header
    %s7 = sphi 0, %s11
    %p8 = scmp.ge.s32.totalorder %s7, 4
    %s14 = sphi 0, %s26
    %s15 = sphi 0, %s22
    %s16 = sphi 0, %s14
    %s17 = sphi 0, %s15
    %s18 = sphi 0, %s16
    %s19 = sphi 0, %s17
    %s31 = sphi 0, %s33
    %s34 = sphi 0, %s31
    %s35 = sphi 0, %s34
    %s51 = sphi 0, %s35
    %s59 = sphi 0, %s61
    %s62 = sphi 0, %s59
    %s63 = sphi 0, %s62
    %s79 = sphi 0, %s63
  $region4: #{sep_conv2d_forward.7} parent=0 // loop_header_branch
    %10 = sbr.rel (%p8) target = $region8
  $region5: #{sep_conv2d_forward.7} parent=0 // loop_body
    %s12 = ssub.s32 %s7, 1
    %s13 = ssub.s32 %s7, 2
    %s20 = sadd.s32 1, %s15
    %p21 = scmp.ge.s32.totalorder %s20, 1
    %s22 = scalar_select %p21, 0, %s20
    %s23 = sadd.s32 1, %s14
    %s24 = scalar_select %p21, %s23, %s14
    %p25 = scmp.ge.s32.totalorder %s24, 2
    %s26 = scalar_select %p25, 0, %s24
    %s27 = ssub.s32 %s14, %s26
    %s28 = ssub.s32 %s15, %s22
    %s29 = sor.u32 %s27, %s28
    %p30 = scmp.eq.s32.totalorder %s29, 0
    %s32 = sadd.s32 %s31, 1
    %s33 = scalar_select %p30, %s31, %s32
    %p36 = pneg %p30
    %p37 = scmp.eq.s32.totalorder %s7, 1
    %p38 = por %p36, %p37
    %p39 = scmp.ne.s32.totalorder %s31, %s34
    %p40 = scmp.eq.s32.totalorder %s7, 0
    %p41 = por %p39, %p40
    %p42 = scmp.ne.s32.totalorder %s31, %s34
    %p43 = scmp.eq.s32.totalorder %s12, 1
    %p44 = por %p42, %p43
    %p45 = scmp.ne.s32.totalorder %s34, %s35
    %p46 = scmp.eq.s32.totalorder %s12, 0
    %p47 = por %p45, %p46
    %p48 = scmp.ne.s32.totalorder %s34, %s35
    %p49 = scmp.eq.s32.totalorder %s13, 1
    %p50 = por %p48, %p49
    %p52 = scmp.ne.s32.totalorder %s35, %s51
    %p53 = scmp.eq.s32.totalorder %s13, 0
    %p54 = por %p52, %p53
    %s55 = ssub.s32 %s14, %s26
    %s56 = ssub.s32 %s15, %s22
    %s57 = sor.u32 %s55, %s56
    %p58 = scmp.eq.s32.totalorder %s57, 0
    %s60 = sadd.s32 %s59, 1
    %s61 = scalar_select %p58, %s59, %s60
    %p64 = pneg %p58
    %p65 = scmp.eq.s32.totalorder %s7, 1
    %p66 = por %p64, %p65
    %p67 = scmp.ne.s32.totalorder %s59, %s62
    %p68 = scmp.eq.s32.totalorder %s7, 0
    %p69 = por %p67, %p68
    %p70 = scmp.ne.s32.totalorder %s59, %s62
    %p71 = scmp.eq.s32.totalorder %s12, 1
    %p72 = por %p70, %p71
    %p73 = scmp.ne.s32.totalorder %s62, %s63
    %p74 = scmp.eq.s32.totalorder %s12, 0
    %p75 = por %p73, %p74
    %p76 = scmp.ne.s32.totalorder %s62, %s63
    %p77 = scmp.eq.s32.totalorder %s13, 1
    %p78 = por %p76, %p77
    %p80 = scmp.ne.s32.totalorder %s63, %s79
    %p81 = scmp.eq.s32.totalorder %s13, 0
    %p82 = por %p80, %p81
    %p83 = scmp.le.s32.totalorder 1, %s7
    %p84 = scmp.lt.s32.totalorder %s7, 3
    %p85 = pnand %p83, %p84
    %p86 = pneg %p85
    // Predicated region
    $region9: #{sep_conv2d_forward.7} parent=5 // pred_check
      _
    $region10: #{sep_conv2d_forward.7} parent=5 // pred_check_branch
      %88 = sbr.rel (%p85) target = $region12
    $region11: #{sep_conv2d_forward.7} parent=5 // pred_region
      %s89 = ssub.s32 %s7, 1
    $region12: #{sep_conv2d_forward.7} parent=5 // pred_fallthru
      _
    %p90 = scmp.lt.s32.totalorder %s7, 2
    // Predicated region
    $region13: #{sep_conv2d_forward.7} parent=5 // pred_check
      %p91 = pneg %p90
    $region14: #{sep_conv2d_forward.7} parent=5 // pred_check_branch
      %93 = sbr.rel (%p91) target = $region16
    $region15: #{sep_conv2d_forward.7} parent=5 // pred_region
      // Predicated region
      $region17: #{sep_conv2d_forward.7} parent=15 // pred_check
        %p94 = pneg %p41
      $region18: #{sep_conv2d_forward.7} parent=15 // pred_check_branch
        %96 = sbr.rel (%p94) target = $region20
      $region19: #{sep_conv2d_forward.7} parent=15 // pred_region
        %s97 = smul.u32 2, %s15
        %p98 = scmp.lt.s32.totalorder %s14, 1
        %s99 = scalar_select %p98, %s14, 1
        %p100 = scmp.lt.s32.totalorder %s97, 1
        %s101 = scalar_select %p100, %s97, 1
        %s102 = smul.addr %s99, 294
        %s103 = sadd.s32 %s101, %s102
        %s104 = smul.addr %s103, 2
        %s105 = scalar_lea.vmem %s0, %s104
        %s106 = smul.u32 2, %s15
      $region20: #{sep_conv2d_forward.7} parent=15 // pred_fallthru
        _
    $region16: #{sep_conv2d_forward.7} parent=5 // pred_fallthru
      _
    %p107 = scmp.le.s32.totalorder 1, %s7
    %p108 = scmp.lt.s32.totalorder %s7, 3
    %p109 = pnand %p107, %p108
    %p110 = pneg %p109
    // Predicated region
    $region21: #{sep_conv2d_forward.7} parent=5 // pred_check
      _
    $region22: #{sep_conv2d_forward.7} parent=5 // pred_check_branch
      %112 = sbr.rel (%p109) target = $region24
    $region23: #{sep_conv2d_forward.7} parent=5 // pred_region
      %s113 = ssub.s32 %s7, 1
      %s114 = smul.u32 2, %s17
      %p115 = scmp.lt.s32.totalorder %s16, 1
      %s116 = scalar_select %p115, %s16, 1
      %p117 = scmp.lt.s32.totalorder %s114, 1
      %s118 = scalar_select %p117, %s114, 1
      %s119 = smul.addr %s116, 294
      %s120 = sadd.s32 %s118, %s119
      %s121 = smul.addr %s120, 2
      %s122 = scalar_lea.vmem %s0, %s121
      %p123 = pneg %p47
      %p124 = pneg %p44
      %p125 = pneg %p75
      %p126 = pneg %p72
      %s127 = smul.u32 2, %s17
      %p128 = scmp.lt.s32.totalorder %s16, 1
      %s129 = scalar_select %p128, %s16, 1
      %p130 = scmp.lt.s32.totalorder %s127, 1
      %s131 = scalar_select %p130, %s127, 1
      %s132 = smul.addr %s129, 6
      %s133 = sadd.s32 %s131, %s132
      %s134 = smul.addr %s133, 2
      %s135 = scalar_lea.vmem %s1, %s134
      %s136 = smul.u32 2, %s17
      %p137 = scmp.lt.s32.totalorder %s16, 1
      %s138 = scalar_select %p137, %s16, 1
      %p139 = scmp.lt.s32.totalorder %s136, 1
      %s140 = scalar_select %p139, %s136, 1
      %s141 = smul.addr %s138, 294
      %s142 = sadd.s32 %s140, %s141
      %s143 = smul.addr %s142, 2
      %s144 = scalar_lea.vmem %s0, %s143
      %s145 = smul.u32 2, %s17
      %s146 = smul.u32 2, %s17
      %p147 = scmp.lt.s32.totalorder %s16, 1
      %s148 = scalar_select %p147, %s16, 1
      %p149 = scmp.lt.s32.totalorder %s146, 1
      %s150 = scalar_select %p149, %s146, 1
      %s151 = smul.addr %s148, 6
      %s152 = sadd.s32 %s150, %s151
      %s153 = smul.addr %s152, 2
      %s154 = scalar_lea.vmem %s1, %s153
      %s155 = smul.u32 2, %s17
      %v157 = vld [vmem:[%s144] sm:$0xf]
      %v158 = vld [vmem:[%s144 + $0x4] sm:$0xf]
      %v159 = vld [vmem:[%s144 + $0x8] sm:$0xf]
      %v160 = vld [vmem:[%s144 + $0xc] sm:$0xf]
      %v161 = vld [vmem:[%s144 + $0x10] sm:$0xf]
      %v162 = vld [vmem:[%s144 + $0x14] sm:$0xf]
      %v163 = vld [vmem:[%s144 + $0x18] sm:$0xf]
      %v164 = vld [vmem:[%s144 + $0x1c] sm:$0xf]
      %v165 = vld [vmem:[%s144 + $0x20] sm:$0xf]
      %v166 = vld [vmem:[%s144 + $0x24] sm:$0xf]
      %v167 = vld [vmem:[%s144 + $0x28] sm:$0xf]
      %v168 = vld [vmem:[%s144 + $0x2c] sm:$0xf]
      %v169 = vld [vmem:[%s144 + $0x30] sm:$0xf]
      %v170 = vld [vmem:[%s144 + $0x34] sm:$0xf]
      %v171 = vld [vmem:[%s144 + $0x38] sm:$0xf]
      %v172 = vld [vmem:[%s144 + $0x3c] sm:$0xf]
      %v173 = vld [vmem:[%s144 + $0x40] sm:$0xf]
      %v174 = vld [vmem:[%s144 + $0x44] sm:$0xf]
      %v175 = vld [vmem:[%s144 + $0x48] sm:$0xf]
      %v176 = vld [vmem:[%s144 + $0x4c] sm:$0xf]
      %v177 = vld [vmem:[%s144 + $0x50] sm:$0xf]
      %v178 = vld [vmem:[%s144 + $0x54] sm:$0xf]
      %v179 = vld [vmem:[%s144 + $0x58] sm:$0xf]
      %v180 = vld [vmem:[%s144 + $0x5c] sm:$0xf]
      %v181 = vld [vmem:[%s144 + $0x60] sm:$0xf]
      %v182 = vld [vmem:[%s144 + $0x64] sm:$0xf]
      %v183 = vld [vmem:[%s144 + $0x68] sm:$0xf]
      %v184 = vld [vmem:[%s144 + $0x6c] sm:$0xf]
      %v185 = vld [vmem:[%s144 + $0x70] sm:$0xf]
      %v186 = vld [vmem:[%s144 + $0x74] sm:$0xf]
      %v187 = vld [vmem:[%s144 + $0x78] sm:$0xf]
      %v188 = vld [vmem:[%s144 + $0x7c] sm:$0xf]
      %v189 = vld [vmem:[%s144 + $0x80] sm:$0xf]
      %v190 = vld [vmem:[%s144 + $0x84] sm:$0xf]
      %v191 = vld [vmem:[%s144 + $0x88] sm:$0xf]
      %v192 = vld [vmem:[%s144 + $0x8c] sm:$0xf]
      %v193 = vld [vmem:[%s144 + $0x90] sm:$0xf]
      %v194 = vld [vmem:[%s144 + $0x94] sm:$0xf]
      %v195 = vld [vmem:[%s144 + $0x98] sm:$0xf]
      %v196 = vld [vmem:[%s144 + $0x9c] sm:$0xf]
      %v197 = vld [vmem:[%s144 + $0xa0] sm:$0xf]
      %v198 = vld [vmem:[%s144 + $0xa4] sm:$0xf]
      %v199 = vld [vmem:[%s144 + $0xa8] sm:$0xf]
      %v200 = vld [vmem:[%s144 + $0xac] sm:$0xf]
      %v201 = vld [vmem:[%s144 + $0xb0] sm:$0xf]
      %v202 = vld [vmem:[%s144 + $0xb4] sm:$0xf]
      %v203 = vld [vmem:[%s144 + $0xb8] sm:$0xf]
      %v204 = vld [vmem:[%s144 + $0xbc] sm:$0xf]
      %v205 = vld [vmem:[%s144 + $0xc0] sm:$0xf]
      %v206 = vld [vmem:[%s144 + $0xc4] sm:$0xf]
      %v207 = vld [vmem:[%s144 + $0xc8] sm:$0xf]
      %v208 = vld [vmem:[%s144 + $0xcc] sm:$0xf]
      %v209 = vld [vmem:[%s144 + $0xd0] sm:$0xf]
      %v210 = vld [vmem:[%s144 + $0xd4] sm:$0xf]
      %v211 = vld [vmem:[%s144 + $0xd8] sm:$0xf]
      %v212 = vld [vmem:[%s144 + $0xdc] sm:$0xf]
      %v213 = vld [vmem:[%s144 + $0xe0] sm:$0xf]
      %v214 = vld [vmem:[%s144 + $0xe4] sm:$0xf]
      %v215 = vld [vmem:[%s144 + $0xe8] sm:$0xf]
      %v216 = vld [vmem:[%s144 + $0xec] sm:$0xf]
      %v217 = vld [vmem:[%s144 + $0xf0] sm:$0xf]
      %v218 = vld [vmem:[%s144 + $0xf4] sm:$0xf]
      %v219 = vld [vmem:[%s144 + $0xf8] sm:$0xf]
      %v220 = vld [vmem:[%s144 + $0xfc] sm:$0xf]
      %v221 = vld [vmem:[%s144 + $0x100] sm:$0xf]
      %v222 = vld [vmem:[%s144 + $0x104] sm:$0xf]
      %v223 = vld [vmem:[%s144 + $0x108] sm:$0xf]
      %v224 = vld [vmem:[%s144 + $0x10c] sm:$0xf]
      %v225 = vld [vmem:[%s144 + $0x110] sm:$0xf]
      %v226 = vld [vmem:[%s144 + $0x114] sm:$0xf]
      %v227 = vld [vmem:[%s144 + $0x118] sm:$0xf]
      %v228 = vld [vmem:[%s144 + $0x11c] sm:$0xf]
      %v229 = vld [vmem:[%s144 + $0x120] sm:$0xf]
      %v230 = vld [vmem:[%s144 + $0x124] sm:$0xf]
      %v231 = vld [vmem:[%s144 + $0x128] sm:$0xf]
      %v232 = vld [vmem:[%s144 + $0x12c] sm:$0xf]
      %v233 = vld [vmem:[%s144 + $0x130] sm:$0xf]
      %v234 = vld [vmem:[%s144 + $0x134] sm:$0xf]
      %v235 = vld [vmem:[%s144 + $0x138] sm:$0xf]
      %v236 = vld [vmem:[%s144 + $0x13c] sm:$0xf]
      %v237 = vld [vmem:[%s144 + $0x140] sm:$0xf]
      %v238 = vld [vmem:[%s144 + $0x144] sm:$0xf]
      %v239 = vld [vmem:[%s144 + $0x148] sm:$0xf]
      %v240 = vld [vmem:[%s144 + $0x14c] sm:$0xf]
      %v241 = vld [vmem:[%s144 + $0x150] sm:$0xf]
      %v242 = vld [vmem:[%s144 + $0x154] sm:$0xf]
      %v243 = vld [vmem:[%s144 + $0x158] sm:$0xf]
      %v244 = vld [vmem:[%s144 + $0x15c] sm:$0xf]
      %v245 = vld [vmem:[%s144 + $0x160] sm:$0xf]
      %v246 = vld [vmem:[%s144 + $0x164] sm:$0xf]
      %v247 = vld [vmem:[%s144 + $0x168] sm:$0xf]
      %v248 = vld [vmem:[%s144 + $0x16c] sm:$0xf]
      %v249 = vld [vmem:[%s144 + $0x170] sm:$0xf]
      %v250 = vld [vmem:[%s144 + $0x174] sm:$0xf]
      %v251 = vld [vmem:[%s144 + $0x178] sm:$0xf]
      %v252 = vld [vmem:[%s144 + $0x17c] sm:$0xf]
      %v253 = vld [vmem:[%s144 + $0x180] sm:$0xf]
      %v254 = vld [vmem:[%s144 + $0x184] sm:$0xf]
      %v255 = vld [vmem:[%s144 + $0x188] sm:$0xf]
      %v256 = vld [vmem:[%s144 + $0x18c] sm:$0xf]
      %v257 = vld [vmem:[%s144 + $0x190] sm:$0xf]
      %v258 = vld [vmem:[%s144 + $0x194] sm:$0xf]
      %v259 = vld [vmem:[%s144 + $0x198] sm:$0xf]
      %v260 = vld [vmem:[%s144 + $0x19c] sm:$0xf]
      %v261 = vld [vmem:[%s144 + $0x1a0] sm:$0xf]
      %v262 = vld [vmem:[%s144 + $0x1a4] sm:$0xf]
      %v263 = vld [vmem:[%s144 + $0x1a8] sm:$0xf]
      %v264 = vld [vmem:[%s144 + $0x1ac] sm:$0xf]
      %v265 = vld [vmem:[%s144 + $0x1b0] sm:$0xf]
      %v266 = vld [vmem:[%s144 + $0x1b4] sm:$0xf]
      %v267 = vld [vmem:[%s144 + $0x1b8] sm:$0xf]
      %v268 = vld [vmem:[%s144 + $0x1bc] sm:$0xf]
      %v269 = vld [vmem:[%s144 + $0x1c0] sm:$0xf]
      %v270 = vld [vmem:[%s144 + $0x1c4] sm:$0xf]
      %v271 = vld [vmem:[%s144 + $0x1c8] sm:$0xf]
      %v272 = vld [vmem:[%s144 + $0x1cc] sm:$0xf]
      %v273 = vld [vmem:[%s144 + $0x1d0] sm:$0xf]
      %v274 = vld [vmem:[%s144 + $0x1d4] sm:$0xf]
      %v275 = vld [vmem:[%s144 + $0x1d8] sm:$0xf]
      %v276 = vld [vmem:[%s144 + $0x1dc] sm:$0xf]
      %v277 = vld [vmem:[%s144 + $0x1e0] sm:$0xf]
      %v278 = vld [vmem:[%s144 + $0x1e4] sm:$0xf]
      %v279 = vld [vmem:[%s144 + $0x1e8] sm:$0xf]
      %v280 = vld [vmem:[%s144 + $0x1ec] sm:$0xf]
      %v281 = vld [vmem:[%s144 + $0x1f0] sm:$0xf]
      %v282 = vld [vmem:[%s144 + $0x1f4] sm:$0xf]
      %v283 = vld [vmem:[%s144 + $0x1f8] sm:$0xf]
      %v284 = vld [vmem:[%s144 + $0x1fc] sm:$0xf]
      %v285 = vld [vmem:[%s144 + $0x200] sm:$0xf]
      %v286 = vld [vmem:[%s144 + $0x204] sm:$0xf]
      %v287 = vld [vmem:[%s144 + $0x208] sm:$0xf]
      %v288 = vld [vmem:[%s144 + $0x20c] sm:$0xf]
      %v289 = vld [vmem:[%s144 + $0x210] sm:$0xf]
      %v290 = vld [vmem:[%s144 + $0x214] sm:$0xf]
      %v291 = vld [vmem:[%s144 + $0x218] sm:$0xf]
      %v292 = vld [vmem:[%s144 + $0x21c] sm:$0xf]
      %v293 = vld [vmem:[%s144 + $0x220] sm:$0xf]
      %v294 = vld [vmem:[%s144 + $0x224] sm:$0xf]
      %v295 = vld [vmem:[%s144 + $0x228] sm:$0xf]
      %v296 = vld [vmem:[%s144 + $0x22c] sm:$0xf]
      %v297 = vld [vmem:[%s144 + $0x230] sm:$0xf]
      %v298 = vld [vmem:[%s144 + $0x234] sm:$0xf]
      %v299 = vld [vmem:[%s144 + $0x238] sm:$0xf]
      %v300 = vld [vmem:[%s144 + $0x23c] sm:$0xf]
      %v301 = vld [vmem:[%s144 + $0x240] sm:$0xf]
      %v302 = vld [vmem:[%s144 + $0x244] sm:$0xf]
      %v303 = vld [vmem:[%s144 + $0x248] sm:$0xf]
      %vm304 = vcmask 1041408
      %vm305 = vsmask.f32 1280
      %vm306 = vmand %vm304, %vm305
      %vm307 = vcmask 1043458
      %vm308 = vsmask.f32 3328
      %vm309 = vmand %vm307, %vm308
      %vm310 = vmor %vm309, %vm306
      %v311 = vsel %vm310, %v157, 4286644096
      %v312 = vsel %vm310, %v160, 4286644096
      %v313 = vsel %vm310, %v163, 4286644096
      %v314 = vmax.bf16 %v311, %v313
      %v315 = vsel %vm310, %v166, 4286644096
      %v316 = vmax.bf16 %v312, %v315
      %v317 = vsel %vm310, %v169, 4286644096
      %v318 = vmax.bf16 %v314, %v317
      %v319 = vsel %vm310, %v172, 4286644096
      %v320 = vmax.bf16 %v316, %v319
      %v321 = vsel %vm310, %v175, 4286644096
      %v322 = vmax.bf16 %v318, %v321
      %v323 = vsel %vm310, %v178, 4286644096
      %v324 = vmax.bf16 %v320, %v323
      %v325 = vsel %vm310, %v181, 4286644096
      %v326 = vmax.bf16 %v322, %v325
      %v327 = vsel %vm310, %v184, 4286644096
      %v328 = vmax.bf16 %v324, %v327
      %v329 = vsel %vm310, %v187, 4286644096
      %v330 = vmax.bf16 %v326, %v329
      %v331 = vsel %vm310, %v190, 4286644096
      %v332 = vmax.bf16 %v328, %v331
      %v333 = vsel %vm310, %v193, 4286644096
      %v334 = vmax.bf16 %v330, %v333
      %v335 = vsel %vm310, %v196, 4286644096
      %v336 = vmax.bf16 %v332, %v335
      %v337 = vsel %vm310, %v199, 4286644096
      %v338 = vmax.bf16 %v334, %v337
      %v339 = vsel %vm310, %v202, 4286644096
      %v340 = vmax.bf16 %v336, %v339
      %v341 = vsel %vm310, %v205, 4286644096
      %v342 = vmax.bf16 %v338, %v341
      %v343 = vsel %vm310, %v208, 4286644096
      %v344 = vmax.bf16 %v340, %v343
      %v345 = vsel %vm310, %v211, 4286644096
      %v346 = vmax.bf16 %v342, %v345
      %v347 = vsel %vm310, %v214, 4286644096
      %v348 = vmax.bf16 %v344, %v347
      %v349 = vsel %vm310, %v217, 4286644096
      %v350 = vmax.bf16 %v346, %v349
      %v351 = vsel %vm310, %v220, 4286644096
      %v352 = vmax.bf16 %v348, %v351
      %v353 = vsel %vm310, %v223, 4286644096
      %v354 = vmax.bf16 %v350, %v353
      %v355 = vsel %vm310, %v226, 4286644096
      %v356 = vmax.bf16 %v352, %v355
      %v357 = vsel %vm310, %v229, 4286644096
      %v358 = vmax.bf16 %v354, %v357
      %v359 = vsel %vm310, %v232, 4286644096
      %v360 = vmax.bf16 %v356, %v359
      %v361 = vsel %vm310, %v235, 4286644096
      %v362 = vmax.bf16 %v358, %v361
      %v363 = vsel %vm310, %v238, 4286644096
      %v364 = vmax.bf16 %v360, %v363
      %v365 = vsel %vm310, %v241, 4286644096
      %v366 = vmax.bf16 %v362, %v365
      %v367 = vsel %vm310, %v244, 4286644096
      %v368 = vmax.bf16 %v364, %v367
      %v369 = vsel %vm310, %v247, 4286644096
      %v370 = vmax.bf16 %v366, %v369
      %v371 = vsel %vm310, %v250, 4286644096
      %v372 = vmax.bf16 %v368, %v371
      %v373 = vsel %vm310, %v253, 4286644096
      %v374 = vmax.bf16 %v370, %v373
      %v375 = vsel %vm310, %v256, 4286644096
      %v376 = vmax.bf16 %v372, %v375
      %v377 = vsel %vm310, %v259, 4286644096
      %v378 = vmax.bf16 %v374, %v377
      %v379 = vsel %vm310, %v262, 4286644096
      %v380 = vmax.bf16 %v376, %v379
      %v381 = vsel %vm310, %v265, 4286644096
      %v382 = vmax.bf16 %v378, %v381
      %v383 = vsel %vm310, %v268, 4286644096
      %v384 = vmax.bf16 %v380, %v383
      %v385 = vsel %vm310, %v271, 4286644096
      %v386 = vmax.bf16 %v382, %v385
      %v387 = vsel %vm310, %v274, 4286644096
      %v388 = vmax.bf16 %v384, %v387
      %v389 = vsel %vm310, %v277, 4286644096
      %v390 = vmax.bf16 %v386, %v389
      %v391 = vsel %vm310, %v280, 4286644096
      %v392 = vmax.bf16 %v388, %v391
      %v393 = vsel %vm310, %v283, 4286644096
      %v394 = vmax.bf16 %v390, %v393
      %v395 = vsel %vm310, %v286, 4286644096
      %v396 = vmax.bf16 %v392, %v395
      %v397 = vsel %vm310, %v289, 4286644096
      %v398 = vmax.bf16 %v394, %v397
      %v399 = vsel %vm310, %v292, 4286644096
      %v400 = vmax.bf16 %v396, %v399
      %v401 = vsel %vm310, %v295, 4286644096
      %v402 = vmax.bf16 %v398, %v401
      %v403 = vsel %vm310, %v298, 4286644096
      %v404 = vmax.bf16 %v400, %v403
      %v405 = vsel %vm310, %v301, 4286644096
      %v406 = vmax.bf16 %v402, %v405
      %v407 = vmax.bf16 %v406, %v404
      %v408 = vsel %vm310, %v158, 4286644096
      %v409 = vsel %vm310, %v161, 4286644096
      %v410 = vsel %vm310, %v164, 4286644096
      %v411 = vmax.bf16 %v408, %v410
      %v412 = vsel %vm310, %v167, 4286644096
      %v413 = vmax.bf16 %v409, %v412
      %v414 = vsel %vm310, %v170, 4286644096
      %v415 = vmax.bf16 %v411, %v414
      %v416 = vsel %vm310, %v173, 4286644096
      %v417 = vmax.bf16 %v413, %v416
      %v418 = vsel %vm310, %v176, 4286644096
      %v419 = vmax.bf16 %v415, %v418
      %v420 = vsel %vm310, %v179, 4286644096
      %v421 = vmax.bf16 %v417, %v420
      %v422 = vsel %vm310, %v182, 4286644096
      %v423 = vmax.bf16 %v419, %v422
      %v424 = vsel %vm310, %v185, 4286644096
      %v425 = vmax.bf16 %v421, %v424
      %v426 = vsel %vm310, %v188, 4286644096
      %v427 = vmax.bf16 %v423, %v426
      %v428 = vsel %vm310, %v191, 4286644096
      %v429 = vmax.bf16 %v425, %v428
      %v430 = vsel %vm310, %v194, 4286644096
      %v431 = vmax.bf16 %v427, %v430
      %v432 = vsel %vm310, %v197, 4286644096
      %v433 = vmax.bf16 %v429, %v432
      %v434 = vsel %vm310, %v200, 4286644096
      %v435 = vmax.bf16 %v431, %v434
      %v436 = vsel %vm310, %v203, 4286644096
      %v437 = vmax.bf16 %v433, %v436
      %v438 = vsel %vm310, %v206, 4286644096
      %v439 = vmax.bf16 %v435, %v438
      %v440 = vsel %vm310, %v209, 4286644096
      %v441 = vmax.bf16 %v437, %v440
      %v442 = vsel %vm310, %v212, 4286644096
      %v443 = vmax.bf16 %v439, %v442
      %v444 = vsel %vm310, %v215, 4286644096
      %v445 = vmax.bf16 %v441, %v444
      %v446 = vsel %vm310, %v218, 4286644096
      %v447 = vmax.bf16 %v443, %v446
      %v448 = vsel %vm310, %v221, 4286644096
      %v449 = vmax.bf16 %v445, %v448
      %v450 = vsel %vm310, %v224, 4286644096
      %v451 = vmax.bf16 %v447, %v450
      %v452 = vsel %vm310, %v227, 4286644096
      %v453 = vmax.bf16 %v449, %v452
      %v454 = vsel %vm310, %v230, 4286644096
      %v455 = vmax.bf16 %v451, %v454
      %v456 = vsel %vm310, %v233, 4286644096
      %v457 = vmax.bf16 %v453, %v456
      %v458 = vsel %vm310, %v236, 4286644096
      %v459 = vmax.bf16 %v455, %v458
      %v460 = vsel %vm310, %v239, 4286644096
      %v461 = vmax.bf16 %v457, %v460
      %v462 = vsel %vm310, %v242, 4286644096
      %v463 = vmax.bf16 %v459, %v462
      %v464 = vsel %vm310, %v245, 4286644096
      %v465 = vmax.bf16 %v461, %v464
      %v466 = vsel %vm310, %v248, 4286644096
      %v467 = vmax.bf16 %v463, %v466
      %v468 = vsel %vm310, %v251, 4286644096
      %v469 = vmax.bf16 %v465, %v468
      %v470 = vsel %vm310, %v254, 4286644096
      %v471 = vmax.bf16 %v467, %v470
      %v472 = vsel %vm310, %v257, 4286644096
      %v473 = vmax.bf16 %v469, %v472
      %v474 = vsel %vm310, %v260, 4286644096
      %v475 = vmax.bf16 %v471, %v474
      %v476 = vsel %vm310, %v263, 4286644096
      %v477 = vmax.bf16 %v473, %v476
      %v478 = vsel %vm310, %v266, 4286644096
      %v479 = vmax.bf16 %v475, %v478
      %v480 = vsel %vm310, %v269, 4286644096
      %v481 = vmax.bf16 %v477, %v480
      %v482 = vsel %vm310, %v272, 4286644096
      %v483 = vmax.bf16 %v479, %v482
      %v484 = vsel %vm310, %v275, 4286644096
      %v485 = vmax.bf16 %v481, %v484
      %v486 = vsel %vm310, %v278, 4286644096
      %v487 = vmax.bf16 %v483, %v486
      %v488 = vsel %vm310, %v281, 4286644096
      %v489 = vmax.bf16 %v485, %v488
      %v490 = vsel %vm310, %v284, 4286644096
      %v491 = vmax.bf16 %v487, %v490
      %v492 = vsel %vm310, %v287, 4286644096
      %v493 = vmax.bf16 %v489, %v492
      %v494 = vsel %vm310, %v290, 4286644096
      %v495 = vmax.bf16 %v491, %v494
      %v496 = vsel %vm310, %v293, 4286644096
      %v497 = vmax.bf16 %v493, %v496
      %v498 = vsel %vm310, %v296, 4286644096
      %v499 = vmax.bf16 %v495, %v498
      %v500 = vsel %vm310, %v299, 4286644096
      %v501 = vmax.bf16 %v497, %v500
      %v502 = vsel %vm310, %v302, 4286644096
      %v503 = vmax.bf16 %v499, %v502
      %v504 = vmax.bf16 %v503, %v501
      %v505 = vsel %vm310, %v159, 4286644096
      %v506 = vsel %vm310, %v162, 4286644096
      %v507 = vsel %vm310, %v165, 4286644096
      %v508 = vmax.bf16 %v505, %v507
      %v509 = vsel %vm310, %v168, 4286644096
      %v510 = vmax.bf16 %v506, %v509
      %v511 = vsel %vm310, %v171, 4286644096
      %v512 = vmax.bf16 %v508, %v511
      %v513 = vsel %vm310, %v174, 4286644096
      %v514 = vmax.bf16 %v510, %v513
      %v515 = vsel %vm310, %v177, 4286644096
      %v516 = vmax.bf16 %v512, %v515
      %v517 = vsel %vm310, %v180, 4286644096
      %v518 = vmax.bf16 %v514, %v517
      %v519 = vsel %vm310, %v183, 4286644096
      %v520 = vmax.bf16 %v516, %v519
      %v521 = vsel %vm310, %v186, 4286644096
      %v522 = vmax.bf16 %v518, %v521
      %v523 = vsel %vm310, %v189, 4286644096
      %v524 = vmax.bf16 %v520, %v523
      %v525 = vsel %vm310, %v192, 4286644096
      %v526 = vmax.bf16 %v522, %v525
      %v527 = vsel %vm310, %v195, 4286644096
      %v528 = vmax.bf16 %v524, %v527
      %v529 = vsel %vm310, %v198, 4286644096
      %v530 = vmax.bf16 %v526, %v529
      %v531 = vsel %vm310, %v201, 4286644096
      %v532 = vmax.bf16 %v528, %v531
      %v533 = vsel %vm310, %v204, 4286644096
      %v534 = vmax.bf16 %v530, %v533
      %v535 = vsel %vm310, %v207, 4286644096
      %v536 = vmax.bf16 %v532, %v535
      %v537 = vsel %vm310, %v210, 4286644096
      %v538 = vmax.bf16 %v534, %v537
      %v539 = vsel %vm310, %v213, 4286644096
      %v540 = vmax.bf16 %v536, %v539
      %v541 = vsel %vm310, %v216, 4286644096
      %v542 = vmax.bf16 %v538, %v541
      %v543 = vsel %vm310, %v219, 4286644096
      %v544 = vmax.bf16 %v540, %v543
      %v545 = vsel %vm310, %v222, 4286644096
      %v546 = vmax.bf16 %v542, %v545
      %v547 = vsel %vm310, %v225, 4286644096
      %v548 = vmax.bf16 %v544, %v547
      %v549 = vsel %vm310, %v228, 4286644096
      %v550 = vmax.bf16 %v546, %v549
      %v551 = vsel %vm310, %v231, 4286644096
      %v552 = vmax.bf16 %v548, %v551
      %v553 = vsel %vm310, %v234, 4286644096
      %v554 = vmax.bf16 %v550, %v553
      %v555 = vsel %vm310, %v237, 4286644096
      %v556 = vmax.bf16 %v552, %v555
      %v557 = vsel %vm310, %v240, 4286644096
      %v558 = vmax.bf16 %v554, %v557
      %v559 = vsel %vm310, %v243, 4286644096
      %v560 = vmax.bf16 %v556, %v559
      %v561 = vsel %vm310, %v246, 4286644096
      %v562 = vmax.bf16 %v558, %v561
      %v563 = vsel %vm310, %v249, 4286644096
      %v564 = vmax.bf16 %v560, %v563
      %v565 = vsel %vm310, %v252, 4286644096
      %v566 = vmax.bf16 %v562, %v565
      %v567 = vsel %vm310, %v255, 4286644096
      %v568 = vmax.bf16 %v564, %v567
      %v569 = vsel %vm310, %v258, 4286644096
      %v570 = vmax.bf16 %v566, %v569
      %v571 = vsel %vm310, %v261, 4286644096
      %v572 = vmax.bf16 %v568, %v571
      %v573 = vsel %vm310, %v264, 4286644096
      %v574 = vmax.bf16 %v570, %v573
      %v575 = vsel %vm310, %v267, 4286644096
      %v576 = vmax.bf16 %v572, %v575
      %v577 = vsel %vm310, %v270, 4286644096
      %v578 = vmax.bf16 %v574, %v577
      %v579 = vsel %vm310, %v273, 4286644096
      %v580 = vmax.bf16 %v576, %v579
      %v581 = vsel %vm310, %v276, 4286644096
      %v582 = vmax.bf16 %v578, %v581
      %v583 = vsel %vm310, %v279, 4286644096
      %v584 = vmax.bf16 %v580, %v583
      %v585 = vsel %vm310, %v282, 4286644096
      %v586 = vmax.bf16 %v582, %v585
      %v587 = vsel %vm310, %v285, 4286644096
      %v588 = vmax.bf16 %v584, %v587
      %v589 = vsel %vm310, %v288, 4286644096
      %v590 = vmax.bf16 %v586, %v589
      %v591 = vsel %vm310, %v291, 4286644096
      %v592 = vmax.bf16 %v588, %v591
      %v593 = vsel %vm310, %v294, 4286644096
      %v594 = vmax.bf16 %v590, %v593
      %v595 = vsel %vm310, %v297, 4286644096
      %v596 = vmax.bf16 %v592, %v595
      %v597 = vsel %vm310, %v300, 4286644096
      %v598 = vmax.bf16 %v594, %v597
      %v599 = vsel %vm310, %v303, 4286644096
      %v600 = vmax.bf16 %v596, %v599
      %v601 = vmax.bf16 %v600, %v598
      %v602 = vld [vmem:[%s154] sm:$0xf]
      %v603 = vsel %vm310, %v407, %v602
      %604 = vst [vmem:[%s154] sm:$0xf] %v603
      %v605 = vld [vmem:[%s154 + $0x4] sm:$0xf]
      %v606 = vsel %vm310, %v504, %v605
      %607 = vst [vmem:[%s154 + $0x4] sm:$0xf] %v606
      %v608 = vld [vmem:[%s154 + $0x8] sm:$0xf]
      %v609 = vsel %vm310, %v601, %v608
      %610 = vst [vmem:[%s154 + $0x8] sm:$0xf] %v609
      %s611 = smul.u32 2, %s17
      %p612 = scmp.lt.s32.totalorder %s16, 1
      %s613 = scalar_select %p612, %s16, 1
      %p614 = scmp.lt.s32.totalorder %s611, 1
      %s615 = scalar_select %p614, %s611, 1
      %s616 = smul.addr %s613, 6
      %s617 = sadd.s32 %s615, %s616
      %s618 = smul.addr %s617, 2
      %s619 = scalar_lea.vmem %s1, %s618
      // Predicated region
      $region25: #{sep_conv2d_forward.7} parent=23 // pred_check
        %p620 = pneg %p72
      $region26: #{sep_conv2d_forward.7} parent=23 // pred_check_branch
        %622 = sbr.rel (%p620) target = $region28
      $region27: #{sep_conv2d_forward.7} parent=23 // pred_region
        %s623 = smul.u32 2, %s17
      $region28: #{sep_conv2d_forward.7} parent=23 // pred_fallthru
        _
    $region24: #{sep_conv2d_forward.7} parent=5 // pred_fallthru
      _
    %p624 = scmp.le.s32.totalorder 2, %s7
    // Predicated region
    $region29: #{sep_conv2d_forward.7} parent=5 // pred_check
      %p625 = pneg %p624
    $region30: #{sep_conv2d_forward.7} parent=5 // pred_check_branch
      %627 = sbr.rel (%p625) target = $region32
    $region31: #{sep_conv2d_forward.7} parent=5 // pred_region
      %s628 = ssub.s32 %s7, 2
      // Predicated region
      $region33: #{sep_conv2d_forward.7} parent=31 // pred_check
        %p629 = pneg %p78
      $region34: #{sep_conv2d_forward.7} parent=31 // pred_check_branch
        %631 = sbr.rel (%p629) target = $region36
      $region35: #{sep_conv2d_forward.7} parent=31 // pred_region
        %s632 = smul.u32 2, %s19
        %p633 = scmp.lt.s32.totalorder %s18, 1
        %s634 = scalar_select %p633, %s18, 1
        %p635 = scmp.lt.s32.totalorder %s632, 1
        %s636 = scalar_select %p635, %s632, 1
        %s637 = smul.addr %s634, 6
        %s638 = sadd.s32 %s636, %s637
        %s639 = smul.addr %s638, 2
        %s640 = scalar_lea.vmem %s1, %s639
      $region36: #{sep_conv2d_forward.7} parent=31 // pred_fallthru
        _
    $region32: #{sep_conv2d_forward.7} parent=5 // pred_fallthru
      _
  $region6: #{sep_conv2d_forward.7} parent=0 // loop_footer
    %s11 = sadd.s32 1, %s7
  $region7: #{sep_conv2d_forward.7} parent=0 // loop_footer_branch
    %6 = sbr.rel target = $region3
  $region8: #{sep_conv2d_forward.7} parent=0 // loop_exit
    _

</llo_original>
